<compile_context>
chip_gen: v7x
topology: tpu7x:2x2x1
jax: 0.10.0
libtpu: 0.0.40
codegen_flags: <defaults>
</compile_context>

<pallas_src>
import functools

import jax
import jax.numpy as jnp
import numpy as np
from jax.experimental import pallas as pl
from jax.experimental.pallas import tpu as pltpu


def _round_up(x, m):
    return (x + m - 1) // m * m


def _shaped_reward_kernel(discount, hr, hp, off_rb2, off_pb3,
                          s_ref, a_ref, ns_ref, done_ref,
                          w1_ref, w1a_ref, w2_ref, wout_ref, b_ref,
                          out_ref):
    f32 = jnp.float32
    hi = jax.lax.Precision.HIGHEST

    def feat_dot(w, x):
        # (H, D) . (TB, D) -> (H, TB): contract the feature axis of the batch tile so the batch
        # lands on lanes and all downstream activations / outputs are lane-dense.
        return jax.lax.dot_general(w, x, (((1,), (1,)), ((), ())),
                                   precision=hi, preferred_element_type=f32)

    def mm(a, b):
        # plain (M, K) @ (K, TB), K = hidden width, TB on lanes
        return jax.lax.dot_general(a, b, (((1,), (0,)), ((), ())),
                                   precision=hi, preferred_element_type=f32)

    s = s_ref[...]            # (TB, Dobs) full (untruncated) state tile
    a = a_ref[...]            # (TB, Da)   flattened action tile
    ns = ns_ref[...]          # (TB, Dobs) full next-state tile
    done = done_ref[...]      # (1, TB)    lane-major done row

    w1 = w1_ref[...]          # (hr+hp, Dobs): rows [0:hr]=rw1s^T (zero-padded cols), [hr:]=pw1^T
    w1a = w1a_ref[...]        # (hr, Da)      = rw1a^T
    w2 = w2_ref[...]          # (hp, hp)      = pw2^T
    wout = wout_ref[...]      # (2, max(hr,hp)): row0 = rw2^T, row1 = pw3^T
    b = b_ref[...]            # (nbias, 1) packed bias column

    rb1 = b[0:hr]                         # (hr, 1)
    pb1 = b[hr:hr + hp]                   # (hp, 1)
    pb2 = b[hr + hp:hr + 2 * hp]          # (hp, 1)
    rb2 = b[off_rb2:off_rb2 + 1]          # (1, 1)
    pb3 = b[off_pb3:off_pb3 + 1]          # (1, 1)

    # One first-layer push on the state tile feeds both heads.
    f_s = feat_dot(w1, s)                                     # (hr+hp, TB)

    # Base reward MLP: relu(W1s s + W1a a + b1) -> W2 -> (1, TB)
    h_r = jnp.maximum(f_s[:hr] + feat_dot(w1a, a) + rb1, 0.0)
    base = mm(wout[0:1, :hr], h_r) + rb2                      # (1, TB)

    # Potential MLP, applied to state and next_state (no sublane concat / VMEM copy).
    def potential(pre1):                  # pre1: (hp, TB) first-layer pre-activation (no bias)
        h1 = jnp.maximum(pre1 + pb1, 0.0)
        h2 = jnp.maximum(mm(w2, h1) + pb2, 0.0)
        return mm(wout[1:2, :hp], h2) + pb3                   # (1, TB)

    phi_s = potential(f_s[hr:hr + hp])
    phi_ns = potential(feat_dot(w1[hr:hr + hp], ns))

    # Already lane-dense: direct unmasked store.
    out_ref[...] = base + discount * (1.0 - done) * phi_ns - phi_s


def _pack_params(params, target_states, obs_dim):
    """Transpose, gather-fold and pack the 11 parameter tensors into 5 operands."""
    idx = np.asarray(target_states, dtype=np.int32)
    rw1s = jnp.asarray(params["rw1s"], jnp.float32)           # (ds, hr)
    pw1 = jnp.asarray(params["pw1"], jnp.float32)             # (ds, hp)
    hr = rw1s.shape[1]
    hp = pw1.shape[1]

    # Fold the target_states gather into zero columns of the transposed first-layer weights.
    rw1sT_full = jnp.zeros((hr, obs_dim), jnp.float32).at[:, idx].set(rw1s.T)
    pw1T_full = jnp.zeros((hp, obs_dim), jnp.float32).at[:, idx].set(pw1.T)
    w1 = jnp.concatenate([rw1sT_full, pw1T_full], axis=0)     # (hr+hp, obs_dim)

    w1a = jnp.asarray(params["rw1a"], jnp.float32).T           # (hr, Da)
    w2 = jnp.asarray(params["pw2"], jnp.float32).T             # (hp, hp)

    hmax = max(hr, hp)
    wout = jnp.zeros((2, hmax), jnp.float32)
    wout = wout.at[0, :hr].set(jnp.asarray(params["rw2"], jnp.float32).reshape(-1))
    wout = wout.at[1, :hp].set(jnp.asarray(params["pw3"], jnp.float32).reshape(-1))

    # Packed bias column; rb2/pb3 placed at sublane-aligned offsets.
    off_rb2 = _round_up(hr + 2 * hp, 8)
    off_pb3 = off_rb2 + 8
    nbias = off_pb3 + 8
    bias = jnp.zeros((nbias, 1), jnp.float32)
    bias = bias.at[0:hr, 0].set(jnp.asarray(params["rb1"], jnp.float32).reshape(-1))
    bias = bias.at[hr:hr + hp, 0].set(jnp.asarray(params["pb1"], jnp.float32).reshape(-1))
    bias = bias.at[hr + hp:hr + 2 * hp, 0].set(jnp.asarray(params["pb2"], jnp.float32).reshape(-1))
    bias = bias.at[off_rb2, 0].set(jnp.asarray(params["rb2"], jnp.float32).reshape(()))
    bias = bias.at[off_pb3, 0].set(jnp.asarray(params["pb3"], jnp.float32).reshape(()))

    return (w1, w1a, w2, wout, bias), (hr, hp, off_rb2, off_pb3)


def basic_shaped_reward_net_truncated(state, action, next_state, done, params,
                                      target_states, discount=0.99,
                                      block_b=1024, min_tiles=1):
    """Returns reward of shape (batch,), matching the PyTorch module output.

    block_b:  batch tile (rounded to a multiple of 128).
    min_tiles: set to 2 on v7x so the "parallel" batch axis is sharded across both TensorCores;
               on v5e/v6e (single TC) leave at 1 (fewest, largest tiles).
    """
    state = jnp.asarray(state, jnp.float32)
    next_state = jnp.asarray(next_state, jnp.float32)
    action = jnp.asarray(action, jnp.float32).reshape(state.shape[0], -1)
    done = jnp.asarray(done, jnp.float32).reshape(1, -1)       # lane-major (1, B)

    batch, obs_dim = state.shape
    act_dim = action.shape[1]

    packed, (hr, hp, off_rb2, off_pb3) = _pack_params(params, target_states, obs_dim)
    w1, w1a, w2, wout, bias = packed

    # Batch tile: always a multiple of 128 (lane-dense done/output blocks); pad batch to tiles.
    tb = _round_up(min(int(block_b), _round_up(batch, 128)), 128)
    if min_tiles > 1:
        split_tb = (_round_up(batch, 128) // min_tiles) // 128 * 128
        if split_tb >= 128:
            tb = min(tb, split_tb)
    b_pad = _round_up(batch, tb)
    if b_pad != batch:
        pad = b_pad - batch
        state = jnp.pad(state, ((0, pad), (0, 0)))
        action = jnp.pad(action, ((0, pad), (0, 0)))
        next_state = jnp.pad(next_state, ((0, pad), (0, 0)))
        done = jnp.pad(done, ((0, 0), (0, pad)))
    n_tiles = b_pad // tb

    def wspec(shape):
        # Constant index_map -> block never changes -> DMA'd once, VMEM-resident.
        return pl.BlockSpec(shape, lambda i: (0, 0))

    kernel = functools.partial(_shaped_reward_kernel,
                               float(discount), hr, hp, off_rb2, off_pb3)

    out = pl.pallas_call(
        kernel,
        out_shape=jax.ShapeDtypeStruct((1, b_pad), jnp.float32),
        grid=(n_tiles,),
        in_specs=[
            pl.BlockSpec((tb, obs_dim), lambda i: (i, 0)),   # state
            pl.BlockSpec((tb, act_dim), lambda i: (i, 0)),   # action
            pl.BlockSpec((tb, obs_dim), lambda i: (i, 0)),   # next_state
            pl.BlockSpec((1, tb), lambda i: (0, i)),         # done (lane-major)
            wspec(w1.shape), wspec(w1a.shape), wspec(w2.shape),
            wspec(wout.shape), wspec(bias.shape),
        ],
        out_specs=pl.BlockSpec((1, tb), lambda i: (0, i)),
        compiler_params=pltpu.CompilerParams(
            dimension_semantics=("parallel",)),
    )(state, action, next_state, done, w1, w1a, w2, wout, bias)

    return out.reshape(-1)[:batch]


def _init_params(key, ds, da, reward_hid=32, pot_hid=32):
    """Deterministic synthetic parameters (shapes match the torch module)."""
    keys = jax.random.split(key, 10)

    def lin(k, fan_in, fan_out):
        scale = 1.0 / np.sqrt(fan_in)
        return jax.random.uniform(k, (fan_in, fan_out), jnp.float32, -scale, scale)

    return {
        # base reward MLP: Linear(ds+da, 32) -> ReLU -> Linear(32, 1)
        "rw1s": lin(keys[0], ds, reward_hid),
        "rw1a": lin(keys[1], da, reward_hid),
        "rb1":  jax.random.uniform(keys[2], (reward_hid,), jnp.float32, -0.1, 0.1),
        "rw2":  lin(keys[3], reward_hid, 1),
        "rb2":  jax.random.uniform(keys[4], (), jnp.float32, -0.1, 0.1),
        # potential MLP: Linear(ds, 32) -> ReLU -> Linear(32, 32) -> ReLU -> Linear(32, 1)
        "pw1":  lin(keys[5], ds, pot_hid),
        "pb1":  jax.random.uniform(keys[6], (pot_hid,), jnp.float32, -0.1, 0.1),
        "pw2":  lin(keys[7], pot_hid, pot_hid),
        "pb2":  jax.random.uniform(keys[8], (pot_hid,), jnp.float32, -0.1, 0.1),
        "pw3":  lin(keys[9], pot_hid, 1),
        "pb3":  jnp.float32(0.0),
    }


def _reference(state, action, next_state, done, params, target_states, discount=0.99):
    """Pure-JAX reference (direct transcription of the PyTorch module)."""
    hi = jax.lax.Precision.HIGHEST
    idx = jnp.asarray(target_states, dtype=jnp.int32)
    s = jnp.take(state, idx, axis=1).astype(jnp.float32)
    ns = jnp.take(next_state, idx, axis=1).astype(jnp.float32)
    a = action.astype(jnp.float32).reshape(action.shape[0], -1)
    d = done.astype(jnp.float32).reshape(-1)

    def base(xs, xa):
        h = jnp.maximum(jnp.dot(xs, params["rw1s"], precision=hi)
                        + jnp.dot(xa, params["rw1a"], precision=hi) + params["rb1"], 0.0)
        return jnp.dot(h, params["rw2"], precision=hi)[:, 0] + params["rb2"]

    def potential(x):
        h1 = jnp.maximum(jnp.dot(x, params["pw1"], precision=hi) + params["pb1"], 0.0)
        h2 = jnp.maximum(jnp.dot(h1, params["pw2"], precision=hi) + params["pb2"], 0.0)
        return jnp.dot(h2, params["pw3"], precision=hi)[:, 0] + params["pb3"]

    return base(s, a) + discount * (1.0 - d) * potential(ns) - potential(s)


if __name__ == "__main__":
    key = jax.random.PRNGKey(0)
    k_s, k_a, k_ns, k_d, k_p = jax.random.split(key, 5)

    batch = 256
    obs_dim = 12                      # full observation dimension
    act_dim = 3
    target_states = (0, 2, 5, 7, 9)   # truncation indices -> truncated obs dim = 5
    ds = len(target_states)

    state = jax.random.normal(k_s, (batch, obs_dim), jnp.float32)
    action = jax.random.normal(k_a, (batch, act_dim), jnp.float32)
    next_state = jax.random.normal(k_ns, (batch, obs_dim), jnp.float32)
    done = (jax.random.uniform(k_d, (batch,)) > 0.5).astype(jnp.float32)

    params = _init_params(k_p, ds, act_dim)

    # Multi-tile path: batch=256 with block_b=128 -> grid of 2 batch tiles.
    reward = basic_shaped_reward_net_truncated(
        state, action, next_state, done, params, target_states,
        discount=0.99, block_b=128)
    reward = jax.block_until_ready(reward)
    ref = _reference(state, action, next_state, done, params, target_states, discount=0.99)
    assert reward.shape == (batch,)
    np.testing.assert_allclose(np.asarray(reward), np.asarray(ref), rtol=1e-5, atol=1e-5)

    # Ragged-batch path: batch=37 exercises padding + a single 128-row tile.
    nb = 37
    reward2 = basic_shaped_reward_net_truncated(
        state[:nb], action[:nb], next_state[:nb], done[:nb], params, target_states,
        discount=0.99)
    reward2 = jax.block_until_ready(reward2)
    ref2 = _reference(state[:nb], action[:nb], next_state[:nb], done[:nb], params,
                      target_states, discount=0.99)
    assert reward2.shape == (nb,)
    np.testing.assert_allclose(np.asarray(reward2), np.asarray(ref2), rtol=1e-5, atol=1e-5)

    print("KERNEL_OK")
</pallas_src>

<mosaic_0001>
module attributes {stable_mosaic.version = 11 : i64} {
  func.func @_shaped_reward_kernel(%arg0: i32, %arg1: memref<128x12xf32, #tpu.memory_space<vmem>>, %arg2: memref<128x3xf32, #tpu.memory_space<vmem>>, %arg3: memref<128x12xf32, #tpu.memory_space<vmem>>, %arg4: memref<1x128xf32, #tpu.memory_space<vmem>>, %arg5: memref<64x12xf32, #tpu.memory_space<vmem>>, %arg6: memref<32x3xf32, #tpu.memory_space<vmem>>, %arg7: memref<32x32xf32, #tpu.memory_space<vmem>>, %arg8: memref<2x32xf32, #tpu.memory_space<vmem>>, %arg9: memref<112x1xf32, #tpu.memory_space<vmem>>, %arg10: memref<1x128xf32, #tpu.memory_space<vmem>>) attributes {dimension_semantics = [#tpu.dimension_semantics<parallel>], iteration_bounds = array<i64: 2>, scalar_prefetch = 0 : i64, scratch_operands = 0 : i64, tpu.core_type = #tpu.core_type<tc>, window_params = [{transform_indices = @transform_0, window_bounds = array<i64: 128, 12>}, {transform_indices = @transform_1, window_bounds = array<i64: 128, 3>}, {transform_indices = @transform_2, window_bounds = array<i64: 128, 12>}, {transform_indices = @transform_3, window_bounds = array<i64: 1, 128>}, {pipeline_mode = #tpu.pipeline_mode<synchronous>, transform_indices = @transform_4, window_bounds = array<i64: 64, 12>}, {pipeline_mode = #tpu.pipeline_mode<synchronous>, transform_indices = @transform_5, window_bounds = array<i64: 32, 3>}, {pipeline_mode = #tpu.pipeline_mode<synchronous>, transform_indices = @transform_6, window_bounds = array<i64: 32, 32>}, {pipeline_mode = #tpu.pipeline_mode<synchronous>, transform_indices = @transform_7, window_bounds = array<i64: 2, 32>}, {pipeline_mode = #tpu.pipeline_mode<synchronous>, transform_indices = @transform_8, window_bounds = array<i64: 112, 1>}, {transform_indices = @transform_9, window_bounds = array<i64: 1, 128>}]} {
    %c0 = arith.constant 0 : index
    %c0_0 = arith.constant 0 : index
    %0 = vector.load %arg1[%c0, %c0_0] : memref<128x12xf32, #tpu.memory_space<vmem>>, vector<128x12xf32>
    %c0_1 = arith.constant 0 : index
    %c0_2 = arith.constant 0 : index
    %1 = vector.load %arg2[%c0_1, %c0_2] : memref<128x3xf32, #tpu.memory_space<vmem>>, vector<128x3xf32>
    %c0_3 = arith.constant 0 : index
    %c0_4 = arith.constant 0 : index
    %2 = vector.load %arg3[%c0_3, %c0_4] : memref<128x12xf32, #tpu.memory_space<vmem>>, vector<128x12xf32>
    %c0_5 = arith.constant 0 : index
    %c0_6 = arith.constant 0 : index
    %3 = vector.load %arg4[%c0_5, %c0_6] : memref<1x128xf32, #tpu.memory_space<vmem>>, vector<1x128xf32>
    %c0_7 = arith.constant 0 : index
    %c0_8 = arith.constant 0 : index
    %4 = vector.load %arg5[%c0_7, %c0_8] : memref<64x12xf32, #tpu.memory_space<vmem>>, vector<64x12xf32>
    %c0_9 = arith.constant 0 : index
    %c0_10 = arith.constant 0 : index
    %5 = vector.load %arg6[%c0_9, %c0_10] : memref<32x3xf32, #tpu.memory_space<vmem>>, vector<32x3xf32>
    %c0_11 = arith.constant 0 : index
    %c0_12 = arith.constant 0 : index
    %6 = vector.load %arg7[%c0_11, %c0_12] : memref<32x32xf32, #tpu.memory_space<vmem>>, vector<32x32xf32>
    %c0_13 = arith.constant 0 : index
    %c0_14 = arith.constant 0 : index
    %7 = vector.load %arg8[%c0_13, %c0_14] : memref<2x32xf32, #tpu.memory_space<vmem>>, vector<2x32xf32>
    %c0_15 = arith.constant 0 : index
    %c0_16 = arith.constant 0 : index
    %8 = vector.load %arg9[%c0_15, %c0_16] : memref<112x1xf32, #tpu.memory_space<vmem>>, vector<112x1xf32>
    %9 = vector.extract_strided_slice %8 {offsets = [0, 0], sizes = [32, 1], strides = [1, 1]} : vector<112x1xf32> to vector<32x1xf32>
    %10 = vector.extract_strided_slice %8 {offsets = [32, 0], sizes = [32, 1], strides = [1, 1]} : vector<112x1xf32> to vector<32x1xf32>
    %11 = vector.extract_strided_slice %8 {offsets = [64, 0], sizes = [32, 1], strides = [1, 1]} : vector<112x1xf32> to vector<32x1xf32>
    %12 = vector.extract_strided_slice %8 {offsets = [96, 0], sizes = [1, 1], strides = [1, 1]} : vector<112x1xf32> to vector<1x1xf32>
    %13 = vector.extract_strided_slice %8 {offsets = [104, 0], sizes = [1, 1], strides = [1, 1]} : vector<112x1xf32> to vector<1x1xf32>
    %cst = arith.constant dense<0.000000e+00> : vector<64x128xf32>
    %14 = tpu.matmul %4, %0, %cst {dimension_numbers = #tpu.dot_dimension_numbers<[1], [1], [0], [0], [0, 0, 1, 0], [], []>, precision = #tpu.contract_precision<fp32>} : vector<64x12xf32>, vector<128x12xf32>, vector<64x128xf32> -> vector<64x128xf32>
    %15 = vector.extract_strided_slice %14 {offsets = [0, 0], sizes = [32, 128], strides = [1, 1]} : vector<64x128xf32> to vector<32x128xf32>
    %cst_17 = arith.constant dense<0.000000e+00> : vector<32x128xf32>
    %16 = tpu.matmul %5, %1, %cst_17 {dimension_numbers = #tpu.dot_dimension_numbers<[1], [1], [0], [0], [0, 0, 1, 0], [], []>, precision = #tpu.contract_precision<fp32>} : vector<32x3xf32>, vector<128x3xf32>, vector<32x128xf32> -> vector<32x128xf32>
    %17 = arith.addf %15, %16 : vector<32x128xf32>
    %18 = vector.broadcast %9 : vector<32x1xf32> to vector<32x128xf32>
    %19 = arith.addf %17, %18 : vector<32x128xf32>
    %cst_18 = arith.constant 0.000000e+00 : f32
    %20 = vector.broadcast %cst_18 : f32 to vector<32x128xf32>
    %21 = arith.maximumf %19, %20 : vector<32x128xf32>
    %22 = vector.extract_strided_slice %7 {offsets = [0, 0], sizes = [1, 32], strides = [1, 1]} : vector<2x32xf32> to vector<1x32xf32>
    %cst_19 = arith.constant dense<0.000000e+00> : vector<1x128xf32>
    %23 = tpu.matmul %22, %21, %cst_19 {dimension_numbers = #tpu.dot_dimension_numbers<[1], [0], [0], [1], [0, 0, 1, 1], [], []>, precision = #tpu.contract_precision<fp32>} : vector<1x32xf32>, vector<32x128xf32>, vector<1x128xf32> -> vector<1x128xf32>
    %24 = vector.broadcast %12 : vector<1x1xf32> to vector<1x128xf32>
    %25 = arith.addf %23, %24 : vector<1x128xf32>
    %26 = vector.extract_strided_slice %14 {offsets = [32, 0], sizes = [32, 128], strides = [1, 1]} : vector<64x128xf32> to vector<32x128xf32>
    %27 = vector.broadcast %10 : vector<32x1xf32> to vector<32x128xf32>
    %28 = arith.addf %26, %27 : vector<32x128xf32>
    %cst_20 = arith.constant 0.000000e+00 : f32
    %29 = vector.broadcast %cst_20 : f32 to vector<32x128xf32>
    %30 = arith.maximumf %28, %29 : vector<32x128xf32>
    %cst_21 = arith.constant dense<0.000000e+00> : vector<32x128xf32>
    %31 = tpu.matmul %6, %30, %cst_21 {dimension_numbers = #tpu.dot_dimension_numbers<[1], [0], [0], [1], [0, 0, 1, 1], [], []>, precision = #tpu.contract_precision<fp32>} : vector<32x32xf32>, vector<32x128xf32>, vector<32x128xf32> -> vector<32x128xf32>
    %32 = vector.broadcast %11 : vector<32x1xf32> to vector<32x128xf32>
    %33 = arith.addf %31, %32 : vector<32x128xf32>
    %cst_22 = arith.constant 0.000000e+00 : f32
    %34 = vector.broadcast %cst_22 : f32 to vector<32x128xf32>
    %35 = arith.maximumf %33, %34 : vector<32x128xf32>
    %36 = vector.extract_strided_slice %7 {offsets = [1, 0], sizes = [1, 32], strides = [1, 1]} : vector<2x32xf32> to vector<1x32xf32>
    %cst_23 = arith.constant dense<0.000000e+00> : vector<1x128xf32>
    %37 = tpu.matmul %36, %35, %cst_23 {dimension_numbers = #tpu.dot_dimension_numbers<[1], [0], [0], [1], [0, 0, 1, 1], [], []>, precision = #tpu.contract_precision<fp32>} : vector<1x32xf32>, vector<32x128xf32>, vector<1x128xf32> -> vector<1x128xf32>
    %38 = vector.broadcast %13 : vector<1x1xf32> to vector<1x128xf32>
    %39 = arith.addf %37, %38 : vector<1x128xf32>
    %40 = vector.extract_strided_slice %4 {offsets = [32, 0], sizes = [32, 12], strides = [1, 1]} : vector<64x12xf32> to vector<32x12xf32>
    %cst_24 = arith.constant dense<0.000000e+00> : vector<32x128xf32>
    %41 = tpu.matmul %40, %2, %cst_24 {dimension_numbers = #tpu.dot_dimension_numbers<[1], [1], [0], [0], [0, 0, 1, 0], [], []>, precision = #tpu.contract_precision<fp32>} : vector<32x12xf32>, vector<128x12xf32>, vector<32x128xf32> -> vector<32x128xf32>
    %42 = vector.broadcast %10 : vector<32x1xf32> to vector<32x128xf32>
    %43 = arith.addf %41, %42 : vector<32x128xf32>
    %cst_25 = arith.constant 0.000000e+00 : f32
    %44 = vector.broadcast %cst_25 : f32 to vector<32x128xf32>
    %45 = arith.maximumf %43, %44 : vector<32x128xf32>
    %cst_26 = arith.constant dense<0.000000e+00> : vector<32x128xf32>
    %46 = tpu.matmul %6, %45, %cst_26 {dimension_numbers = #tpu.dot_dimension_numbers<[1], [0], [0], [1], [0, 0, 1, 1], [], []>, precision = #tpu.contract_precision<fp32>} : vector<32x32xf32>, vector<32x128xf32>, vector<32x128xf32> -> vector<32x128xf32>
    %47 = vector.broadcast %11 : vector<32x1xf32> to vector<32x128xf32>
    %48 = arith.addf %46, %47 : vector<32x128xf32>
    %cst_27 = arith.constant 0.000000e+00 : f32
    %49 = vector.broadcast %cst_27 : f32 to vector<32x128xf32>
    %50 = arith.maximumf %48, %49 : vector<32x128xf32>
    %51 = vector.extract_strided_slice %7 {offsets = [1, 0], sizes = [1, 32], strides = [1, 1]} : vector<2x32xf32> to vector<1x32xf32>
    %cst_28 = arith.constant dense<0.000000e+00> : vector<1x128xf32>
    %52 = tpu.matmul %51, %50, %cst_28 {dimension_numbers = #tpu.dot_dimension_numbers<[1], [0], [0], [1], [0, 0, 1, 1], [], []>, precision = #tpu.contract_precision<fp32>} : vector<1x32xf32>, vector<32x128xf32>, vector<1x128xf32> -> vector<1x128xf32>
    %53 = vector.broadcast %13 : vector<1x1xf32> to vector<1x128xf32>
    %54 = arith.addf %52, %53 : vector<1x128xf32>
    %cst_29 = arith.constant 1.000000e+00 : f32
    %55 = vector.broadcast %cst_29 : f32 to vector<1x128xf32>
    %56 = arith.subf %55, %3 : vector<1x128xf32>
    %cst_30 = arith.constant 9.900000e-01 : f32
    %57 = vector.broadcast %cst_30 : f32 to vector<1x128xf32>
    %58 = arith.mulf %57, %56 : vector<1x128xf32>
    %59 = arith.mulf %58, %54 : vector<1x128xf32>
    %60 = arith.addf %25, %59 : vector<1x128xf32>
    %61 = arith.subf %60, %39 : vector<1x128xf32>
    %c0_31 = arith.constant 0 : index
    %c0_32 = arith.constant 0 : index
    %62 = vector.load %arg10[%c0_31, %c0_32] : memref<1x128xf32, #tpu.memory_space<vmem>>, vector<1x128xf32>
    tpu.vector_store %arg10[%c0_31, %c0_32], %61 {strides = array<i32>} : memref<1x128xf32, #tpu.memory_space<vmem>>, vector<1x128xf32>,
    return
  }
  func.func @transform_0(%arg0: i32) -> (i32, i32) {
    %c0_i32 = arith.constant 0 : i32
    %c0_i32_0 = arith.constant 0 : i32
    return %arg0, %c0_i32 : i32, i32
  }
  func.func @transform_1(%arg0: i32) -> (i32, i32) {
    %c0_i32 = arith.constant 0 : i32
    %c0_i32_0 = arith.constant 0 : i32
    return %arg0, %c0_i32 : i32, i32
  }
  func.func @transform_2(%arg0: i32) -> (i32, i32) {
    %c0_i32 = arith.constant 0 : i32
    %c0_i32_0 = arith.constant 0 : i32
    return %arg0, %c0_i32 : i32, i32
  }
  func.func @transform_3(%arg0: i32) -> (i32, i32) {
    %c0_i32 = arith.constant 0 : i32
    %c0_i32_0 = arith.constant 0 : i32
    return %c0_i32, %arg0 : i32, i32
  }
  func.func @transform_4(%arg0: i32) -> (i32, i32) {
    %c0_i32 = arith.constant 0 : i32
    %c0_i32_0 = arith.constant 0 : i32
    %c0_i32_1 = arith.constant 0 : i32
    return %c0_i32, %c0_i32_0 : i32, i32
  }
  func.func @transform_5(%arg0: i32) -> (i32, i32) {
    %c0_i32 = arith.constant 0 : i32
    %c0_i32_0 = arith.constant 0 : i32
    %c0_i32_1 = arith.constant 0 : i32
    return %c0_i32, %c0_i32_0 : i32, i32
  }
  func.func @transform_6(%arg0: i32) -> (i32, i32) {
    %c0_i32 = arith.constant 0 : i32
    %c0_i32_0 = arith.constant 0 : i32
    %c0_i32_1 = arith.constant 0 : i32
    return %c0_i32, %c0_i32_0 : i32, i32
  }
  func.func @transform_7(%arg0: i32) -> (i32, i32) {
    %c0_i32 = arith.constant 0 : i32
    %c0_i32_0 = arith.constant 0 : i32
    %c0_i32_1 = arith.constant 0 : i32
    return %c0_i32, %c0_i32_0 : i32, i32
  }
  func.func @transform_8(%arg0: i32) -> (i32, i32) {
    %c0_i32 = arith.constant 0 : i32
    %c0_i32_0 = arith.constant 0 : i32
    %c0_i32_1 = arith.constant 0 : i32
    return %c0_i32, %c0_i32_0 : i32, i32
  }
  func.func @transform_9(%arg0: i32) -> (i32, i32) {
    %c0_i32 = arith.constant 0 : i32
    %c0_i32_0 = arith.constant 0 : i32
    return %c0_i32, %arg0 : i32, i32
  }
}

</mosaic_0001>

<llo_original>
// kernel: tpu_custom_call.1
$region0: #{tpu_custom_call.1}
  #allocation0 [shape = 'u32[]', space=smem, size = 0x4, offset = 0x4, fixed_abs, tag = 'smem constant byte address 0x4 - core index']
  #allocation1 [shape = 'u32[144,128]{1,0:T(1,128)}', space=vmem, size = 0x12000, scoped, tag = 'internal scratch']
  %s0 = inlined_call_operand.vmem [shape: f32[256,12], index: 0, kind: input, shape index: {}]
  %s1 = inlined_call_operand.vmem [shape: f32[256,3], index: 1, kind: input, shape index: {}]
  %s2 = inlined_call_operand.vmem [shape: f32[256,12], index: 2, kind: input, shape index: {}]
  %s3 = inlined_call_operand.vmem [shape: f32[1,256], index: 3, kind: input, shape index: {}]
  %s4 = inlined_call_operand.vmem [shape: f32[64,12], index: 4, kind: input, shape index: {}]
  %s5 = inlined_call_operand.vmem [shape: f32[32,3], index: 5, kind: input, shape index: {}]
  %s6 = inlined_call_operand.vmem [shape: f32[32,32], index: 6, kind: input, shape index: {}]
  %s7 = inlined_call_operand.vmem [shape: f32[2,32], index: 7, kind: input, shape index: {}]
  %s8 = inlined_call_operand.vmem [shape: f32[112,1], index: 8, kind: input, shape index: {}]
  %s9 = inlined_call_operand.hbm [shape: f32[1,256], index: 9, kind: output, shape index: {}]
  %s10 = sld [smem:[#allocation0]]
  $region69: #{tpu_custom_call.1} parent=0
    _
  %s12 = ssub.s32 1, %s10
  %s13 = scalar_select 0, %s12, %s10
  $region1: #{tpu_custom_call.1} parent=0
    #allocation2 [shape = 'u8[1024]{0}', space=vmem, size = 0x400, scoped, tag = 'output window, operand 0']
    #allocation3 [shape = 's32[2]{0}', space=sflag, size = 0x8, scoped, tag = 'scoped memory for tpu_custom_call.1']
    %14 = vsyncpa [#allocation3], 0
    %s15 = scalar_lea.sflag [#allocation3], 1
    %16 = vsyncpa %s15, 0
    loop: start=0, step=1, limit=4
    $region2: #{tpu_custom_call.1} parent=1 // loop_pre_header
      _
    $region3: #{tpu_custom_call.1} parent=1 // loop_header
      %s18 = sphi 0, %s22
      %p19 = scmp.ge.s32.totalorder %s18, 4
      %s28 = sphi 0, %s30
      %s31 = sphi 0, %s28
      %s32 = sphi 0, %s31
      %s48 = sphi 0, %s32
      %s54 = sphi 0, %s56
      %s57 = sphi 0, %s54
      %s58 = sphi 0, %s57
      %s74 = sphi 0, %s58
      %s80 = sphi 0, %s82
      %s83 = sphi 0, %s80
      %s84 = sphi 0, %s83
      %s100 = sphi 0, %s84
      %s106 = sphi 0, %s108
      %s109 = sphi 0, %s106
      %s110 = sphi 0, %s109
      %s126 = sphi 0, %s110
      %s130 = sphi 0, %s130
      %s132 = sphi 0, %s130
      %s133 = sphi 0, %s132
      %s147 = sphi 0, %s133
      %s151 = sphi 0, %s151
      %s153 = sphi 0, %s151
      %s154 = sphi 0, %s153
      %s168 = sphi 0, %s154
      %s172 = sphi 0, %s172
      %s174 = sphi 0, %s172
      %s175 = sphi 0, %s174
      %s189 = sphi 0, %s175
      %s193 = sphi 0, %s193
      %s195 = sphi 0, %s193
      %s196 = sphi 0, %s195
      %s210 = sphi 0, %s196
      %s214 = sphi 0, %s214
      %s216 = sphi 0, %s214
      %s217 = sphi 0, %s216
      %s231 = sphi 0, %s217
      %s237 = sphi 0, %s239
      %s240 = sphi 0, %s237
      %s241 = sphi 0, %s240
      %s257 = sphi 0, %s241
    $region4: #{tpu_custom_call.1} parent=1 // loop_header_branch
      %21 = sbr.rel (%p19) target = $region8
    $region5: #{tpu_custom_call.1} parent=1 // loop_body
      %s23 = ssub.s32 %s18, 1
      %s24 = ssub.s32 %s18, 2
      %s25 = sadd.s32 %s18, 1
      %s26 = ssub.s32 %s18, %s25
      %p27 = scmp.eq.s32.totalorder %s26, 0
      %s29 = sadd.s32 %s28, 1
      %s30 = scalar_select %p27, %s28, %s29
      %p33 = pneg %p27
      %p34 = scmp.eq.s32.totalorder %s18, 1
      %p35 = por %p33, %p34
      %p36 = scmp.ne.s32.totalorder %s28, %s31
      %p37 = scmp.eq.s32.totalorder %s18, 0
      %p38 = por %p36, %p37
      %p39 = scmp.ne.s32.totalorder %s28, %s31
      %p40 = scmp.eq.s32.totalorder %s23, 1
      %p41 = por %p39, %p40
      %p42 = scmp.ne.s32.totalorder %s31, %s32
      %p43 = scmp.eq.s32.totalorder %s23, 0
      %p44 = por %p42, %p43
      %p45 = scmp.ne.s32.totalorder %s31, %s32
      %p46 = scmp.eq.s32.totalorder %s24, 1
      %p47 = por %p45, %p46
      %p49 = scmp.ne.s32.totalorder %s32, %s48
      %p50 = scmp.eq.s32.totalorder %s24, 0
      %p51 = por %p49, %p50
      %s52 = ssub.s32 %s18, %s25
      %p53 = scmp.eq.s32.totalorder %s52, 0
      %s55 = sadd.s32 %s54, 1
      %s56 = scalar_select %p53, %s54, %s55
      %p59 = pneg %p53
      %p60 = scmp.eq.s32.totalorder %s18, 1
      %p61 = por %p59, %p60
      %p62 = scmp.ne.s32.totalorder %s54, %s57
      %p63 = scmp.eq.s32.totalorder %s18, 0
      %p64 = por %p62, %p63
      %p65 = scmp.ne.s32.totalorder %s54, %s57
      %p66 = scmp.eq.s32.totalorder %s23, 1
      %p67 = por %p65, %p66
      %p68 = scmp.ne.s32.totalorder %s57, %s58
      %p69 = scmp.eq.s32.totalorder %s23, 0
      %p70 = por %p68, %p69
      %p71 = scmp.ne.s32.totalorder %s57, %s58
      %p72 = scmp.eq.s32.totalorder %s24, 1
      %p73 = por %p71, %p72
      %p75 = scmp.ne.s32.totalorder %s58, %s74
      %p76 = scmp.eq.s32.totalorder %s24, 0
      %p77 = por %p75, %p76
      %s78 = ssub.s32 %s18, %s25
      %p79 = scmp.eq.s32.totalorder %s78, 0
      %s81 = sadd.s32 %s80, 1
      %s82 = scalar_select %p79, %s80, %s81
      %p85 = pneg %p79
      %p86 = scmp.eq.s32.totalorder %s18, 1
      %p87 = por %p85, %p86
      %p88 = scmp.ne.s32.totalorder %s80, %s83
      %p89 = scmp.eq.s32.totalorder %s18, 0
      %p90 = por %p88, %p89
      %p91 = scmp.ne.s32.totalorder %s80, %s83
      %p92 = scmp.eq.s32.totalorder %s23, 1
      %p93 = por %p91, %p92
      %p94 = scmp.ne.s32.totalorder %s83, %s84
      %p95 = scmp.eq.s32.totalorder %s23, 0
      %p96 = por %p94, %p95
      %p97 = scmp.ne.s32.totalorder %s83, %s84
      %p98 = scmp.eq.s32.totalorder %s24, 1
      %p99 = por %p97, %p98
      %p101 = scmp.ne.s32.totalorder %s84, %s100
      %p102 = scmp.eq.s32.totalorder %s24, 0
      %p103 = por %p101, %p102
      %s104 = ssub.s32 %s18, %s25
      %p105 = scmp.eq.s32.totalorder %s104, 0
      %s107 = sadd.s32 %s106, 1
      %s108 = scalar_select %p105, %s106, %s107
      %p111 = pneg %p105
      %p112 = scmp.eq.s32.totalorder %s18, 1
      %p113 = por %p111, %p112
      %p114 = scmp.ne.s32.totalorder %s106, %s109
      %p115 = scmp.eq.s32.totalorder %s18, 0
      %p116 = por %p114, %p115
      %p117 = scmp.ne.s32.totalorder %s106, %s109
      %p118 = scmp.eq.s32.totalorder %s23, 1
      %p119 = por %p117, %p118
      %p120 = scmp.ne.s32.totalorder %s109, %s110
      %p121 = scmp.eq.s32.totalorder %s23, 0
      %p122 = por %p120, %p121
      %p123 = scmp.ne.s32.totalorder %s109, %s110
      %p124 = scmp.eq.s32.totalorder %s24, 1
      %p125 = por %p123, %p124
      %p127 = scmp.ne.s32.totalorder %s110, %s126
      %p128 = scmp.eq.s32.totalorder %s24, 0
      %p129 = por %p127, %p128
      %s131 = sadd.s32 %s130, 1
      %p134 = scmp.eq.s32.totalorder %s18, 1
      %p135 = scmp.ne.s32.totalorder %s130, %s132
      %p136 = scmp.eq.s32.totalorder %s18, 0
      %p137 = por %p135, %p136
      %p138 = scmp.ne.s32.totalorder %s130, %s132
      %p139 = scmp.eq.s32.totalorder %s23, 1
      %p140 = por %p138, %p139
      %p141 = scmp.ne.s32.totalorder %s132, %s133
      %p142 = scmp.eq.s32.totalorder %s23, 0
      %p143 = por %p141, %p142
      %p144 = scmp.ne.s32.totalorder %s132, %s133
      %p145 = scmp.eq.s32.totalorder %s24, 1
      %p146 = por %p144, %p145
      %p148 = scmp.ne.s32.totalorder %s133, %s147
      %p149 = scmp.eq.s32.totalorder %s24, 0
      %p150 = por %p148, %p149
      %s152 = sadd.s32 %s151, 1
      %p155 = scmp.eq.s32.totalorder %s18, 1
      %p156 = scmp.ne.s32.totalorder %s151, %s153
      %p157 = scmp.eq.s32.totalorder %s18, 0
      %p158 = por %p156, %p157
      %p159 = scmp.ne.s32.totalorder %s151, %s153
      %p160 = scmp.eq.s32.totalorder %s23, 1
      %p161 = por %p159, %p160
      %p162 = scmp.ne.s32.totalorder %s153, %s154
      %p163 = scmp.eq.s32.totalorder %s23, 0
      %p164 = por %p162, %p163
      %p165 = scmp.ne.s32.totalorder %s153, %s154
      %p166 = scmp.eq.s32.totalorder %s24, 1
      %p167 = por %p165, %p166
      %p169 = scmp.ne.s32.totalorder %s154, %s168
      %p170 = scmp.eq.s32.totalorder %s24, 0
      %p171 = por %p169, %p170
      %s173 = sadd.s32 %s172, 1
      %p176 = scmp.eq.s32.totalorder %s18, 1
      %p177 = scmp.ne.s32.totalorder %s172, %s174
      %p178 = scmp.eq.s32.totalorder %s18, 0
      %p179 = por %p177, %p178
      %p180 = scmp.ne.s32.totalorder %s172, %s174
      %p181 = scmp.eq.s32.totalorder %s23, 1
      %p182 = por %p180, %p181
      %p183 = scmp.ne.s32.totalorder %s174, %s175
      %p184 = scmp.eq.s32.totalorder %s23, 0
      %p185 = por %p183, %p184
      %p186 = scmp.ne.s32.totalorder %s174, %s175
      %p187 = scmp.eq.s32.totalorder %s24, 1
      %p188 = por %p186, %p187
      %p190 = scmp.ne.s32.totalorder %s175, %s189
      %p191 = scmp.eq.s32.totalorder %s24, 0
      %p192 = por %p190, %p191
      %s194 = sadd.s32 %s193, 1
      %p197 = scmp.eq.s32.totalorder %s18, 1
      %p198 = scmp.ne.s32.totalorder %s193, %s195
      %p199 = scmp.eq.s32.totalorder %s18, 0
      %p200 = por %p198, %p199
      %p201 = scmp.ne.s32.totalorder %s193, %s195
      %p202 = scmp.eq.s32.totalorder %s23, 1
      %p203 = por %p201, %p202
      %p204 = scmp.ne.s32.totalorder %s195, %s196
      %p205 = scmp.eq.s32.totalorder %s23, 0
      %p206 = por %p204, %p205
      %p207 = scmp.ne.s32.totalorder %s195, %s196
      %p208 = scmp.eq.s32.totalorder %s24, 1
      %p209 = por %p207, %p208
      %p211 = scmp.ne.s32.totalorder %s196, %s210
      %p212 = scmp.eq.s32.totalorder %s24, 0
      %p213 = por %p211, %p212
      %s215 = sadd.s32 %s214, 1
      %p218 = scmp.eq.s32.totalorder %s18, 1
      %p219 = scmp.ne.s32.totalorder %s214, %s216
      %p220 = scmp.eq.s32.totalorder %s18, 0
      %p221 = por %p219, %p220
      %p222 = scmp.ne.s32.totalorder %s214, %s216
      %p223 = scmp.eq.s32.totalorder %s23, 1
      %p224 = por %p222, %p223
      %p225 = scmp.ne.s32.totalorder %s216, %s217
      %p226 = scmp.eq.s32.totalorder %s23, 0
      %p227 = por %p225, %p226
      %p228 = scmp.ne.s32.totalorder %s216, %s217
      %p229 = scmp.eq.s32.totalorder %s24, 1
      %p230 = por %p228, %p229
      %p232 = scmp.ne.s32.totalorder %s217, %s231
      %p233 = scmp.eq.s32.totalorder %s24, 0
      %p234 = por %p232, %p233
      %s235 = ssub.s32 %s18, %s25
      %p236 = scmp.eq.s32.totalorder %s235, 0
      %s238 = sadd.s32 %s237, 1
      %s239 = scalar_select %p236, %s237, %s238
      %p242 = pneg %p236
      %p243 = scmp.eq.s32.totalorder %s18, 1
      %p244 = por %p242, %p243
      %p245 = scmp.ne.s32.totalorder %s237, %s240
      %p246 = scmp.eq.s32.totalorder %s18, 0
      %p247 = por %p245, %p246
      %p248 = scmp.ne.s32.totalorder %s237, %s240
      %p249 = scmp.eq.s32.totalorder %s23, 1
      %p250 = por %p248, %p249
      %p251 = scmp.ne.s32.totalorder %s240, %s241
      %p252 = scmp.eq.s32.totalorder %s23, 0
      %p253 = por %p251, %p252
      %p254 = scmp.ne.s32.totalorder %s240, %s241
      %p255 = scmp.eq.s32.totalorder %s24, 1
      %p256 = por %p254, %p255
      %p258 = scmp.ne.s32.totalorder %s241, %s257
      %p259 = scmp.eq.s32.totalorder %s24, 0
      %p260 = por %p258, %p259
      %p261 = scmp.le.s32.totalorder 1, %s18
      %p262 = scmp.lt.s32.totalorder %s18, 3
      %p263 = pnand %p261, %p262
      %p264 = pneg %p263
      // Predicated region
      $region9: #{tpu_custom_call.1} parent=5 // pred_check
        _
      $region10: #{tpu_custom_call.1} parent=5 // pred_check_branch
        %266 = sbr.rel (%p263) target = $region12
      $region11: #{tpu_custom_call.1} parent=5 // pred_region
        %s267 = ssub.s32 %s18, 1
        // Predicated region
        $region13: #{tpu_custom_call.1} parent=11 // pred_check
          %p268 = pneg %p143
        $region14: #{tpu_custom_call.1} parent=11 // pred_check_branch
          %270 = sbr.rel (%p268) target = $region16
        $region15: #{tpu_custom_call.1} parent=11 // pred_region
          _
        $region16: #{tpu_custom_call.1} parent=11 // pred_fallthru
          _
        // Predicated region
        $region17: #{tpu_custom_call.1} parent=11 // pred_check
          %p271 = pneg %p164
        $region18: #{tpu_custom_call.1} parent=11 // pred_check_branch
          %273 = sbr.rel (%p271) target = $region20
        $region19: #{tpu_custom_call.1} parent=11 // pred_region
          _
        $region20: #{tpu_custom_call.1} parent=11 // pred_fallthru
          _
        // Predicated region
        $region21: #{tpu_custom_call.1} parent=11 // pred_check
          %p274 = pneg %p185
        $region22: #{tpu_custom_call.1} parent=11 // pred_check_branch
          %276 = sbr.rel (%p274) target = $region24
        $region23: #{tpu_custom_call.1} parent=11 // pred_region
          _
        $region24: #{tpu_custom_call.1} parent=11 // pred_fallthru
          _
        // Predicated region
        $region25: #{tpu_custom_call.1} parent=11 // pred_check
          %p277 = pneg %p206
        $region26: #{tpu_custom_call.1} parent=11 // pred_check_branch
          %279 = sbr.rel (%p277) target = $region28
        $region27: #{tpu_custom_call.1} parent=11 // pred_region
          _
        $region28: #{tpu_custom_call.1} parent=11 // pred_fallthru
          _
        // Predicated region
        $region29: #{tpu_custom_call.1} parent=11 // pred_check
          %p280 = pneg %p227
        $region30: #{tpu_custom_call.1} parent=11 // pred_check_branch
          %282 = sbr.rel (%p280) target = $region32
        $region31: #{tpu_custom_call.1} parent=11 // pred_region
          _
        $region32: #{tpu_custom_call.1} parent=11 // pred_fallthru
          _
      $region12: #{tpu_custom_call.1} parent=5 // pred_fallthru
        _
      %p283 = scmp.lt.s32.totalorder %s18, 2
      // Predicated region
      $region33: #{tpu_custom_call.1} parent=5 // pred_check
        %p284 = pneg %p283
      $region34: #{tpu_custom_call.1} parent=5 // pred_check_branch
        %286 = sbr.rel (%p284) target = $region36
      $region35: #{tpu_custom_call.1} parent=5 // pred_region
        // Predicated region
        $region37: #{tpu_custom_call.1} parent=35 // pred_check
          %p287 = pneg %p38
        $region38: #{tpu_custom_call.1} parent=35 // pred_check_branch
          %289 = sbr.rel (%p287) target = $region40
        $region39: #{tpu_custom_call.1} parent=35 // pred_region
          %s290 = smul.u32 16, %s18
          %p291 = scmp.lt.s32.totalorder %s290, 31
          %s292 = scalar_select %p291, %s290, 31
          %s293 = smul.addr %s292, 8
          %s294 = scalar_lea.vmem %s0, %s293
          %s295 = smul.u32 16, %s18
        $region40: #{tpu_custom_call.1} parent=35 // pred_fallthru
          _
        // Predicated region
        $region41: #{tpu_custom_call.1} parent=35 // pred_check
          %p296 = pneg %p64
        $region42: #{tpu_custom_call.1} parent=35 // pred_check_branch
          %298 = sbr.rel (%p296) target = $region44
        $region43: #{tpu_custom_call.1} parent=35 // pred_region
          %s299 = smul.u32 16, %s18
          %p300 = scmp.lt.s32.totalorder %s299, 31
          %s301 = scalar_select %p300, %s299, 31
          %s302 = smul.addr %s301, 8
          %s303 = scalar_lea.vmem %s1, %s302
          %s304 = smul.u32 16, %s18
        $region44: #{tpu_custom_call.1} parent=35 // pred_fallthru
          _
        // Predicated region
        $region45: #{tpu_custom_call.1} parent=35 // pred_check
          %p305 = pneg %p90
        $region46: #{tpu_custom_call.1} parent=35 // pred_check_branch
          %307 = sbr.rel (%p305) target = $region48
        $region47: #{tpu_custom_call.1} parent=35 // pred_region
          %s308 = smul.u32 16, %s18
          %p309 = scmp.lt.s32.totalorder %s308, 31
          %s310 = scalar_select %p309, %s308, 31
          %s311 = smul.addr %s310, 8
          %s312 = scalar_lea.vmem %s2, %s311
          %s313 = smul.u32 16, %s18
        $region48: #{tpu_custom_call.1} parent=35 // pred_fallthru
          _
        // Predicated region
        $region49: #{tpu_custom_call.1} parent=35 // pred_check
          %p314 = pneg %p116
        $region50: #{tpu_custom_call.1} parent=35 // pred_check_branch
          %316 = sbr.rel (%p314) target = $region52
        $region51: #{tpu_custom_call.1} parent=35 // pred_region
          %p317 = scmp.lt.s32.totalorder %s18, 1
          %s318 = scalar_select %p317, %s18, 1
          %s319 = scalar_lea.vmem %s3, %s318
        $region52: #{tpu_custom_call.1} parent=35 // pred_fallthru
          _
      $region36: #{tpu_custom_call.1} parent=5 // pred_fallthru
        _
      %p320 = scmp.le.s32.totalorder 1, %s18
      %p321 = scmp.lt.s32.totalorder %s18, 3
      %p322 = pnand %p320, %p321
      %p323 = pneg %p322
      // Predicated region
      $region53: #{tpu_custom_call.1} parent=5 // pred_check
        _
      $region54: #{tpu_custom_call.1} parent=5 // pred_check_branch
        %325 = sbr.rel (%p322) target = $region56
      $region55: #{tpu_custom_call.1} parent=5 // pred_region
        %s326 = ssub.s32 %s18, 1
        %s327 = smul.u32 16, %s23
        %p328 = scmp.lt.s32.totalorder %s327, 31
        %s329 = scalar_select %p328, %s327, 31
        %s330 = smul.addr %s329, 8
        %s331 = scalar_lea.vmem %s0, %s330
        %p332 = pneg %p44
        %p333 = pneg %p41
        %s334 = smul.u32 16, %s23
        %p335 = scmp.lt.s32.totalorder %s334, 31
        %s336 = scalar_select %p335, %s334, 31
        %s337 = smul.addr %s336, 8
        %s338 = scalar_lea.vmem %s1, %s337
        %p339 = pneg %p70
        %p340 = pneg %p67
        %s341 = smul.u32 16, %s23
        %p342 = scmp.lt.s32.totalorder %s341, 31
        %s343 = scalar_select %p342, %s341, 31
        %s344 = smul.addr %s343, 8
        %s345 = scalar_lea.vmem %s2, %s344
        %p346 = pneg %p96
        %p347 = pneg %p93
        %p348 = scmp.lt.s32.totalorder %s23, 1
        %s349 = scalar_select %p348, %s23, 1
        %s350 = scalar_lea.vmem %s3, %s349
        %p351 = pneg %p122
        %p352 = pneg %p119
        %p353 = pneg %p143
        %p354 = pneg %p140
        %p355 = pneg %p164
        %p356 = pneg %p161
        %p357 = pneg %p185
        %p358 = pneg %p182
        %p359 = pneg %p206
        %p360 = pneg %p203
        %p361 = pneg %p227
        %p362 = pneg %p224
        %p363 = pneg %p253
        %p364 = pneg %p250
        %s365 = sand.u32 %s240, 1
        %s366 = scalar_lea.sflag [#allocation3], %s365
        %s367 = sand.u32 %s240, 1
        %s368 = scalar_lea.vmem [#allocation2], %s367
        %s369 = smul.u32 16, %s23
        %p370 = scmp.lt.s32.totalorder %s369, 31
        %s371 = scalar_select %p370, %s369, 31
        %s372 = smul.addr %s371, 8
        %s373 = scalar_lea.vmem %s0, %s372
        %s374 = smul.u32 16, %s23
        %s375 = smul.u32 16, %s23
        %p376 = scmp.lt.s32.totalorder %s375, 31
        %s377 = scalar_select %p376, %s375, 31
        %s378 = smul.addr %s377, 8
        %s379 = scalar_lea.vmem %s1, %s378
        %s380 = smul.u32 16, %s23
        %s381 = smul.u32 16, %s23
        %p382 = scmp.lt.s32.totalorder %s381, 31
        %s383 = scalar_select %p382, %s381, 31
        %s384 = smul.addr %s383, 8
        %s385 = scalar_lea.vmem %s2, %s384
        %s386 = smul.u32 16, %s23
        %p387 = scmp.lt.s32.totalorder %s23, 1
        %s388 = scalar_select %p387, %s23, 1
        %s389 = scalar_lea.vmem %s3, %s388
        %v390 = vld [vmem:[%s373] sm:$0xff]
        %v391 = vld [vmem:[%s373 + $0x8] sm:$0xff]
        %v392 = vld [vmem:[%s373 + $0x10] sm:$0xff]
        %v393 = vld [vmem:[%s373 + $0x18] sm:$0xff]
        %v394 = vld [vmem:[%s373 + $0x20] sm:$0xff]
        %v395 = vld [vmem:[%s373 + $0x28] sm:$0xff]
        %v396 = vld [vmem:[%s373 + $0x30] sm:$0xff]
        %v397 = vld [vmem:[%s373 + $0x38] sm:$0xff]
        %v398 = vld [vmem:[%s373 + $0x40] sm:$0xff]
        %v399 = vld [vmem:[%s373 + $0x48] sm:$0xff]
        %v400 = vld [vmem:[%s373 + $0x50] sm:$0xff]
        %v401 = vld [vmem:[%s373 + $0x58] sm:$0xff]
        %v402 = vld [vmem:[%s373 + $0x60] sm:$0xff]
        %v403 = vld [vmem:[%s373 + $0x68] sm:$0xff]
        %v404 = vld [vmem:[%s373 + $0x70] sm:$0xff]
        %v405 = vld [vmem:[%s373 + $0x78] sm:$0xff]
        %v406 = vld [vmem:[%s379] sm:$0xff]
        %v407 = vld [vmem:[%s379 + $0x8] sm:$0xff]
        %v408 = vld [vmem:[%s379 + $0x10] sm:$0xff]
        %v409 = vld [vmem:[%s379 + $0x18] sm:$0xff]
        %v410 = vld [vmem:[%s379 + $0x20] sm:$0xff]
        %v411 = vld [vmem:[%s379 + $0x28] sm:$0xff]
        %v412 = vld [vmem:[%s379 + $0x30] sm:$0xff]
        %v413 = vld [vmem:[%s379 + $0x38] sm:$0xff]
        %v414 = vld [vmem:[%s379 + $0x40] sm:$0xff]
        %v415 = vld [vmem:[%s379 + $0x48] sm:$0xff]
        %v416 = vld [vmem:[%s379 + $0x50] sm:$0xff]
        %v417 = vld [vmem:[%s379 + $0x58] sm:$0xff]
        %v418 = vld [vmem:[%s379 + $0x60] sm:$0xff]
        %v419 = vld [vmem:[%s379 + $0x68] sm:$0xff]
        %v420 = vld [vmem:[%s379 + $0x70] sm:$0xff]
        %v421 = vld [vmem:[%s379 + $0x78] sm:$0xff]
        %v422 = vld [vmem:[%s385] sm:$0xff]
        %v423 = vld [vmem:[%s385 + $0x8] sm:$0xff]
        %v424 = vld [vmem:[%s385 + $0x10] sm:$0xff]
        %v425 = vld [vmem:[%s385 + $0x18] sm:$0xff]
        %v426 = vld [vmem:[%s385 + $0x20] sm:$0xff]
        %v427 = vld [vmem:[%s385 + $0x28] sm:$0xff]
        %v428 = vld [vmem:[%s385 + $0x30] sm:$0xff]
        %v429 = vld [vmem:[%s385 + $0x38] sm:$0xff]
        %v430 = vld [vmem:[%s385 + $0x40] sm:$0xff]
        %v431 = vld [vmem:[%s385 + $0x48] sm:$0xff]
        %v432 = vld [vmem:[%s385 + $0x50] sm:$0xff]
        %v433 = vld [vmem:[%s385 + $0x58] sm:$0xff]
        %v434 = vld [vmem:[%s385 + $0x60] sm:$0xff]
        %v435 = vld [vmem:[%s385 + $0x68] sm:$0xff]
        %v436 = vld [vmem:[%s385 + $0x70] sm:$0xff]
        %v437 = vld [vmem:[%s385 + $0x78] sm:$0xff]
        %v438 = vld [vmem:[%s389] sm:$0x1]
        %v439 = vld [vmem:[%s4] sm:$0xff]
        %v440 = vld [vmem:[%s4 + $0x8] sm:$0xff]
        %v441 = vld [vmem:[%s4 + $0x10] sm:$0xff]
        %v442 = vld [vmem:[%s4 + $0x18] sm:$0xff]
        %v443 = vld [vmem:[%s4 + $0x20] sm:$0xff]
        %v444 = vld [vmem:[%s4 + $0x28] sm:$0xff]
        %v445 = vld [vmem:[%s4 + $0x30] sm:$0xff]
        %v446 = vld [vmem:[%s4 + $0x38] sm:$0xff]
        %v447 = vld [vmem:[%s5] sm:$0xff]
        %v448 = vld [vmem:[%s5 + $0x8] sm:$0xff]
        %v449 = vld [vmem:[%s5 + $0x10] sm:$0xff]
        %v450 = vld [vmem:[%s5 + $0x18] sm:$0xff]
        %v451 = vld [vmem:[%s6] sm:$0xff]
        %v452 = vld [vmem:[%s6 + $0x8] sm:$0xff]
        %v453 = vld [vmem:[%s6 + $0x10] sm:$0xff]
        %v454 = vld [vmem:[%s6 + $0x18] sm:$0xff]
        %v455 = vld [vmem:[%s7] sm:$0x3]
        %v456 = vld [vmem:[%s8] sm:$0xff]
        %v457 = vld [vmem:[%s8 + $0x8] sm:$0xff]
        %v458 = vld [vmem:[%s8 + $0x10] sm:$0xff]
        %v459 = vld [vmem:[%s8 + $0x18] sm:$0xff]
        %v460 = vld [vmem:[%s8 + $0x20] sm:$0xff]
        %v461 = vld [vmem:[%s8 + $0x28] sm:$0xff]
        %v462 = vld [vmem:[%s8 + $0x30] sm:$0xff]
        %v463 = vld [vmem:[%s8 + $0x38] sm:$0xff]
        %v464 = vld [vmem:[%s8 + $0x40] sm:$0xff]
        %v465 = vld [vmem:[%s8 + $0x48] sm:$0xff]
        %v466 = vld [vmem:[%s8 + $0x50] sm:$0xff]
        %v467 = vld [vmem:[%s8 + $0x58] sm:$0xff]
        %v468 = vld [vmem:[%s8 + $0x60] sm:$0xff]
        %v469 = vld [vmem:[%s8 + $0x68] sm:$0xff]
        %vm470 = vcmask 97280
        %v472 = vsel %vm470, %v439, 0
        %v475 = vsel %vm470, %v440, 0
        %v478 = vsel %vm470, %v441, 0
        %v481 = vsel %vm470, %v442, 0
        %v484 = vsel %vm470, %v443, 0
        %v487 = vsel %vm470, %v444, 0
        %v490 = vsel %vm470, %v445, 0
        %v493 = vsel %vm470, %v446, 0
        %v496 = vsel %vm470, %v390, 0
        %v499 = vsel %vm470, %v391, 0
        %v502 = vsel %vm470, %v392, 0
        %v505 = vsel %vm470, %v393, 0
        %v508 = vsel %vm470, %v394, 0
        %v511 = vsel %vm470, %v395, 0
        %v514 = vsel %vm470, %v396, 0
        %v517 = vsel %vm470, %v397, 0
        %v520 = vsel %vm470, %v398, 0
        %v523 = vsel %vm470, %v399, 0
        %v526 = vsel %vm470, %v400, 0
        %v529 = vsel %vm470, %v401, 0
        %v532 = vsel %vm470, %v402, 0
        %v535 = vsel %vm470, %v403, 0
        %v538 = vsel %vm470, %v404, 0
        %v541 = vsel %vm470, %v405, 0
        %543 = vmatprep.subr.mxu0 0.0
        %v544 = vand.u32 %v496, 4294901760
        %545 = vmatpush1.xpose.msra.mxu0 %v544
        %546 = vmatprep.subr.mxu0 0.0
        %v547 = vand.u32 %v499, 4294901760
        %548 = vmatpush1.xpose.msra.mxu0 %v547
        %549 = vmatprep.subr.mxu0 0.0
        %v550 = vand.u32 %v502, 4294901760
        %551 = vmatpush1.xpose.msra.mxu0 %v550
        %552 = vmatprep.subr.mxu0 0.0
        %v553 = vand.u32 %v505, 4294901760
        %554 = vmatpush1.xpose.msra.mxu0 %v553
        %555 = vmatprep.subr.mxu0 0.0
        %v556 = vand.u32 %v508, 4294901760
        %557 = vmatpush1.xpose.msra.mxu0 %v556
        %558 = vmatprep.subr.mxu0 0.0
        %v559 = vand.u32 %v511, 4294901760
        %560 = vmatpush1.xpose.msra.mxu0 %v559
        %561 = vmatprep.subr.mxu0 0.0
        %v562 = vand.u32 %v514, 4294901760
        %563 = vmatpush1.xpose.msra.mxu0 %v562
        %564 = vmatprep.subr.mxu0 0.0
        %v565 = vand.u32 %v517, 4294901760
        %566 = vmatpush1.xpose.msra.mxu0 %v565
        %567 = vmatprep.subr.mxu0 0.0
        %v568 = vand.u32 %v520, 4294901760
        %569 = vmatpush1.xpose.msra.mxu0 %v568
        %570 = vmatprep.subr.mxu0 0.0
        %v571 = vand.u32 %v523, 4294901760
        %572 = vmatpush1.xpose.msra.mxu0 %v571
        %573 = vmatprep.subr.mxu0 0.0
        %v574 = vand.u32 %v526, 4294901760
        %575 = vmatpush1.xpose.msra.mxu0 %v574
        %576 = vmatprep.subr.mxu0 0.0
        %v577 = vand.u32 %v529, 4294901760
        %578 = vmatpush1.xpose.msra.mxu0 %v577
        %579 = vmatprep.subr.mxu0 0.0
        %v580 = vand.u32 %v532, 4294901760
        %581 = vmatpush1.xpose.msra.mxu0 %v580
        %582 = vmatprep.subr.mxu0 0.0
        %v583 = vand.u32 %v535, 4294901760
        %584 = vmatpush1.xpose.msra.mxu0 %v583
        %585 = vmatprep.subr.mxu0 0.0
        %v586 = vand.u32 %v538, 4294901760
        %587 = vmatpush1.xpose.msra.mxu0 %v586
        %588 = vmatprep.subr.mxu0 0.0
        %v589 = vand.u32 %v541, 4294901760
        %590 = vmatpush1.xpose.msra.mxu0 %v589
        %591 = vmatprep.subr.mxu0 0.0
        %592 = vmatpush1.xpose.msra.mxu0 0.0
        %593 = vmatprep.subr.mxu0 0.0
        %594 = vmatpush1.xpose.msra.mxu0 0.0
        %595 = vmatprep.subr.mxu0 0.0
        %596 = vmatpush1.xpose.msra.mxu0 0.0
        %597 = vmatprep.subr.mxu0 0.0
        %598 = vmatpush1.xpose.msra.mxu0 0.0
        %599 = vmatprep.subr.mxu0 0.0
        %600 = vmatpush1.xpose.msra.mxu0 0.0
        %601 = vmatprep.subr.mxu0 0.0
        %602 = vmatpush1.xpose.msra.mxu0 0.0
        %603 = vmatprep.subr.mxu0 0.0
        %604 = vmatpush1.xpose.msra.mxu0 0.0
        %605 = vmatprep.subr.mxu0 0.0
        %606 = vmatpush1.xpose.msra.mxu0 0.0
        %607 = vmatprep.subr.mxu0 0.0
        %608 = vmatpush1.xpose.msra.mxu0 0.0
        %609 = vmatprep.subr.mxu0 0.0
        %610 = vmatpush1.xpose.msra.mxu0 0.0
        %611 = vmatprep.subr.mxu0 0.0
        %612 = vmatpush1.xpose.msra.mxu0 0.0
        %613 = vmatprep.subr.mxu0 0.0
        %614 = vmatpush1.xpose.msra.mxu0 0.0
        %615 = vmatprep.subr.mxu0 0.0
        %616 = vmatpush1.xpose.msra.mxu0 0.0
        %617 = vmatprep.subr.mxu0 0.0
        %618 = vmatpush1.xpose.msra.mxu0 0.0
        %619 = vmatprep.subr.mxu0 0.0
        %620 = vmatpush1.xpose.msra.mxu0 0.0
        %621 = vmatprep.subr.mxu0 0.0
        %622 = vmatpush1.xpose.msra.mxu0 0.0
        %623 = vmatprep.mubr.f32.mxu0 0.0
        %v624 = vand.u32 %v472, 4294901760
        %v625 = vsub.f32 %v472, %v624
        %v626 = vand.u32 %v625, 4294901760
        %v627 = vsub.f32 %v625, %v626
        %v628 = vand.u32 %v627, 4294901760
        %629 = vmatmul.mubr.f32.gmra.mrb[0].mxu0 %v628
        %v630 = vpop.f32.mrb[0].mxu0
        %v631 = vadd.f32 0.0, %v630
        %v632 = vpop.f32.mrb[0].mxu0
        %633 = vmatprep.mubr.f32.mxu0 0.0
        %v634 = vand.u32 %v475, 4294901760
        %v635 = vsub.f32 %v475, %v634
        %v636 = vand.u32 %v635, 4294901760
        %v637 = vsub.f32 %v635, %v636
        %v638 = vand.u32 %v637, 4294901760
        %639 = vmatmul.mubr.f32.gmra.mrb[0].mxu0 %v638
        %v640 = vpop.f32.mrb[0].mxu0
        %v641 = vadd.f32 0.0, %v640
        %v642 = vpop.f32.mrb[0].mxu0
        %643 = vmatprep.mubr.f32.mxu0 0.0
        %v644 = vand.u32 %v478, 4294901760
        %v645 = vsub.f32 %v478, %v644
        %v646 = vand.u32 %v645, 4294901760
        %v647 = vsub.f32 %v645, %v646
        %v648 = vand.u32 %v647, 4294901760
        %649 = vmatmul.mubr.f32.gmra.mrb[0].mxu0 %v648
        %v650 = vpop.f32.mrb[0].mxu0
        %v651 = vadd.f32 0.0, %v650
        %v652 = vpop.f32.mrb[0].mxu0
        %653 = vmatprep.mubr.f32.mxu0 0.0
        %v654 = vand.u32 %v481, 4294901760
        %v655 = vsub.f32 %v481, %v654
        %v656 = vand.u32 %v655, 4294901760
        %v657 = vsub.f32 %v655, %v656
        %v658 = vand.u32 %v657, 4294901760
        %659 = vmatmul.mubr.f32.gmra.mrb[0].mxu0 %v658
        %v660 = vpop.f32.mrb[0].mxu0
        %v661 = vadd.f32 0.0, %v660
        %v662 = vpop.f32.mrb[0].mxu0
        %663 = vmatprep.mubr.f32.mxu0 0.0
        %v664 = vand.u32 %v484, 4294901760
        %v665 = vsub.f32 %v484, %v664
        %v666 = vand.u32 %v665, 4294901760
        %v667 = vsub.f32 %v665, %v666
        %v668 = vand.u32 %v667, 4294901760
        %669 = vmatmul.mubr.f32.gmra.mrb[0].mxu0 %v668
        %v670 = vpop.f32.mrb[0].mxu0
        %v671 = vadd.f32 0.0, %v670
        %v672 = vpop.f32.mrb[0].mxu0
        %673 = vmatprep.mubr.f32.mxu0 0.0
        %v674 = vand.u32 %v487, 4294901760
        %v675 = vsub.f32 %v487, %v674
        %v676 = vand.u32 %v675, 4294901760
        %v677 = vsub.f32 %v675, %v676
        %v678 = vand.u32 %v677, 4294901760
        %679 = vmatmul.mubr.f32.gmra.mrb[0].mxu0 %v678
        %v680 = vpop.f32.mrb[0].mxu0
        %v681 = vadd.f32 0.0, %v680
        %v682 = vpop.f32.mrb[0].mxu0
        %683 = vmatprep.mubr.f32.mxu0 0.0
        %v684 = vand.u32 %v490, 4294901760
        %v685 = vsub.f32 %v490, %v684
        %v686 = vand.u32 %v685, 4294901760
        %v687 = vsub.f32 %v685, %v686
        %v688 = vand.u32 %v687, 4294901760
        %689 = vmatmul.mubr.f32.gmra.mrb[0].mxu0 %v688
        %v690 = vpop.f32.mrb[0].mxu0
        %v691 = vadd.f32 0.0, %v690
        %v692 = vpop.f32.mrb[0].mxu0
        %693 = vmatprep.mubr.f32.mxu0 0.0
        %v694 = vand.u32 %v493, 4294901760
        %v695 = vsub.f32 %v493, %v694
        %v696 = vand.u32 %v695, 4294901760
        %v697 = vsub.f32 %v695, %v696
        %v698 = vand.u32 %v697, 4294901760
        %699 = vmatmul.mubr.f32.gmra.mrb[0].mxu0 %v698
        %v700 = vpop.f32.mrb[0].mxu0
        %v701 = vadd.f32 0.0, %v700
        %v702 = vpop.f32.mrb[0].mxu0
        %703 = vdwg.mxu0
        %704 = vmatprep.subr.mxu0 0.0
        %v705 = vand.u32 %v496, 4294901760
        %v706 = vsub.f32 %v496, %v705
        %v707 = vand.u32 %v706, 4294901760
        %v708 = vsub.f32 %v706, %v707
        %v709 = vand.u32 %v708, 4294901760
        %710 = vmatpush1.xpose.msra.mxu0 %v709
        %711 = vmatprep.subr.mxu0 0.0
        %v712 = vand.u32 %v499, 4294901760
        %v713 = vsub.f32 %v499, %v712
        %v714 = vand.u32 %v713, 4294901760
        %v715 = vsub.f32 %v713, %v714
        %v716 = vand.u32 %v715, 4294901760
        %717 = vmatpush1.xpose.msra.mxu0 %v716
        %718 = vmatprep.subr.mxu0 0.0
        %v719 = vand.u32 %v502, 4294901760
        %v720 = vsub.f32 %v502, %v719
        %v721 = vand.u32 %v720, 4294901760
        %v722 = vsub.f32 %v720, %v721
        %v723 = vand.u32 %v722, 4294901760
        %724 = vmatpush1.xpose.msra.mxu0 %v723
        %725 = vmatprep.subr.mxu0 0.0
        %v726 = vand.u32 %v505, 4294901760
        %v727 = vsub.f32 %v505, %v726
        %v728 = vand.u32 %v727, 4294901760
        %v729 = vsub.f32 %v727, %v728
        %v730 = vand.u32 %v729, 4294901760
        %731 = vmatpush1.xpose.msra.mxu0 %v730
        %732 = vmatprep.subr.mxu0 0.0
        %v733 = vand.u32 %v508, 4294901760
        %v734 = vsub.f32 %v508, %v733
        %v735 = vand.u32 %v734, 4294901760
        %v736 = vsub.f32 %v734, %v735
        %v737 = vand.u32 %v736, 4294901760
        %738 = vmatpush1.xpose.msra.mxu0 %v737
        %739 = vmatprep.subr.mxu0 0.0
        %v740 = vand.u32 %v511, 4294901760
        %v741 = vsub.f32 %v511, %v740
        %v742 = vand.u32 %v741, 4294901760
        %v743 = vsub.f32 %v741, %v742
        %v744 = vand.u32 %v743, 4294901760
        %745 = vmatpush1.xpose.msra.mxu0 %v744
        %746 = vmatprep.subr.mxu0 0.0
        %v747 = vand.u32 %v514, 4294901760
        %v748 = vsub.f32 %v514, %v747
        %v749 = vand.u32 %v748, 4294901760
        %v750 = vsub.f32 %v748, %v749
        %v751 = vand.u32 %v750, 4294901760
        %752 = vmatpush1.xpose.msra.mxu0 %v751
        %753 = vmatprep.subr.mxu0 0.0
        %v754 = vand.u32 %v517, 4294901760
        %v755 = vsub.f32 %v517, %v754
        %v756 = vand.u32 %v755, 4294901760
        %v757 = vsub.f32 %v755, %v756
        %v758 = vand.u32 %v757, 4294901760
        %759 = vmatpush1.xpose.msra.mxu0 %v758
        %760 = vmatprep.subr.mxu0 0.0
        %v761 = vand.u32 %v520, 4294901760
        %v762 = vsub.f32 %v520, %v761
        %v763 = vand.u32 %v762, 4294901760
        %v764 = vsub.f32 %v762, %v763
        %v765 = vand.u32 %v764, 4294901760
        %766 = vmatpush1.xpose.msra.mxu0 %v765
        %767 = vmatprep.subr.mxu0 0.0
        %v768 = vand.u32 %v523, 4294901760
        %v769 = vsub.f32 %v523, %v768
        %v770 = vand.u32 %v769, 4294901760
        %v771 = vsub.f32 %v769, %v770
        %v772 = vand.u32 %v771, 4294901760
        %773 = vmatpush1.xpose.msra.mxu0 %v772
        %774 = vmatprep.subr.mxu0 0.0
        %v775 = vand.u32 %v526, 4294901760
        %v776 = vsub.f32 %v526, %v775
        %v777 = vand.u32 %v776, 4294901760
        %v778 = vsub.f32 %v776, %v777
        %v779 = vand.u32 %v778, 4294901760
        %780 = vmatpush1.xpose.msra.mxu0 %v779
        %781 = vmatprep.subr.mxu0 0.0
        %v782 = vand.u32 %v529, 4294901760
        %v783 = vsub.f32 %v529, %v782
        %v784 = vand.u32 %v783, 4294901760
        %v785 = vsub.f32 %v783, %v784
        %v786 = vand.u32 %v785, 4294901760
        %787 = vmatpush1.xpose.msra.mxu0 %v786
        %788 = vmatprep.subr.mxu0 0.0
        %v789 = vand.u32 %v532, 4294901760
        %v790 = vsub.f32 %v532, %v789
        %v791 = vand.u32 %v790, 4294901760
        %v792 = vsub.f32 %v790, %v791
        %v793 = vand.u32 %v792, 4294901760
        %794 = vmatpush1.xpose.msra.mxu0 %v793
        %795 = vmatprep.subr.mxu0 0.0
        %v796 = vand.u32 %v535, 4294901760
        %v797 = vsub.f32 %v535, %v796
        %v798 = vand.u32 %v797, 4294901760
        %v799 = vsub.f32 %v797, %v798
        %v800 = vand.u32 %v799, 4294901760
        %801 = vmatpush1.xpose.msra.mxu0 %v800
        %802 = vmatprep.subr.mxu0 0.0
        %v803 = vand.u32 %v538, 4294901760
        %v804 = vsub.f32 %v538, %v803
        %v805 = vand.u32 %v804, 4294901760
        %v806 = vsub.f32 %v804, %v805
        %v807 = vand.u32 %v806, 4294901760
        %808 = vmatpush1.xpose.msra.mxu0 %v807
        %809 = vmatprep.subr.mxu0 0.0
        %v810 = vand.u32 %v541, 4294901760
        %v811 = vsub.f32 %v541, %v810
        %v812 = vand.u32 %v811, 4294901760
        %v813 = vsub.f32 %v811, %v812
        %v814 = vand.u32 %v813, 4294901760
        %815 = vmatpush1.xpose.msra.mxu0 %v814
        %816 = vmatprep.subr.mxu0 0.0
        %817 = vmatpush1.xpose.msra.mxu0 0.0
        %818 = vmatprep.subr.mxu0 0.0
        %819 = vmatpush1.xpose.msra.mxu0 0.0
        %820 = vmatprep.subr.mxu0 0.0
        %821 = vmatpush1.xpose.msra.mxu0 0.0
        %822 = vmatprep.subr.mxu0 0.0
        %823 = vmatpush1.xpose.msra.mxu0 0.0
        %824 = vmatprep.subr.mxu0 0.0
        %825 = vmatpush1.xpose.msra.mxu0 0.0
        %826 = vmatprep.subr.mxu0 0.0
        %827 = vmatpush1.xpose.msra.mxu0 0.0
        %828 = vmatprep.subr.mxu0 0.0
        %829 = vmatpush1.xpose.msra.mxu0 0.0
        %830 = vmatprep.subr.mxu0 0.0
        %831 = vmatpush1.xpose.msra.mxu0 0.0
        %832 = vmatprep.subr.mxu0 0.0
        %833 = vmatpush1.xpose.msra.mxu0 0.0
        %834 = vmatprep.subr.mxu0 0.0
        %835 = vmatpush1.xpose.msra.mxu0 0.0
        %836 = vmatprep.subr.mxu0 0.0
        %837 = vmatpush1.xpose.msra.mxu0 0.0
        %838 = vmatprep.subr.mxu0 0.0
        %839 = vmatpush1.xpose.msra.mxu0 0.0
        %840 = vmatprep.subr.mxu0 0.0
        %841 = vmatpush1.xpose.msra.mxu0 0.0
        %842 = vmatprep.subr.mxu0 0.0
        %843 = vmatpush1.xpose.msra.mxu0 0.0
        %844 = vmatprep.subr.mxu0 0.0
        %845 = vmatpush1.xpose.msra.mxu0 0.0
        %846 = vmatprep.subr.mxu0 0.0
        %847 = vmatpush1.xpose.msra.mxu0 0.0
        %848 = vmatprep.mubr.f32.mxu0 0.0
        %v849 = vand.u32 %v472, 4294901760
        %850 = vmatmul.mubr.f32.gmra.mrb[0].mxu0 %v849
        %v851 = vpop.f32.mrb[0].mxu0
        %v852 = vadd.f32 %v631, %v851
        %v853 = vpop.f32.mrb[0].mxu0
        %854 = vmatprep.mubr.f32.mxu0 0.0
        %v855 = vand.u32 %v475, 4294901760
        %856 = vmatmul.mubr.f32.gmra.mrb[0].mxu0 %v855
        %v857 = vpop.f32.mrb[0].mxu0
        %v858 = vadd.f32 %v641, %v857
        %v859 = vpop.f32.mrb[0].mxu0
        %860 = vmatprep.mubr.f32.mxu0 0.0
        %v861 = vand.u32 %v478, 4294901760
        %862 = vmatmul.mubr.f32.gmra.mrb[0].mxu0 %v861
        %v863 = vpop.f32.mrb[0].mxu0
        %v864 = vadd.f32 %v651, %v863
        %v865 = vpop.f32.mrb[0].mxu0
        %866 = vmatprep.mubr.f32.mxu0 0.0
        %v867 = vand.u32 %v481, 4294901760
        %868 = vmatmul.mubr.f32.gmra.mrb[0].mxu0 %v867
        %v869 = vpop.f32.mrb[0].mxu0
        %v870 = vadd.f32 %v661, %v869
        %v871 = vpop.f32.mrb[0].mxu0
        %872 = vmatprep.mubr.f32.mxu0 0.0
        %v873 = vand.u32 %v484, 4294901760
        %874 = vmatmul.mubr.f32.gmra.mrb[0].mxu0 %v873
        %v875 = vpop.f32.mrb[0].mxu0
        %v876 = vadd.f32 %v671, %v875
        %v877 = vpop.f32.mrb[0].mxu0
        %878 = vmatprep.mubr.f32.mxu0 0.0
        %v879 = vand.u32 %v487, 4294901760
        %880 = vmatmul.mubr.f32.gmra.mrb[0].mxu0 %v879
        %v881 = vpop.f32.mrb[0].mxu0
        %v882 = vadd.f32 %v681, %v881
        %v883 = vpop.f32.mrb[0].mxu0
        %884 = vmatprep.mubr.f32.mxu0 0.0
        %v885 = vand.u32 %v490, 4294901760
        %886 = vmatmul.mubr.f32.gmra.mrb[0].mxu0 %v885
        %v887 = vpop.f32.mrb[0].mxu0
        %v888 = vadd.f32 %v691, %v887
        %v889 = vpop.f32.mrb[0].mxu0
        %890 = vmatprep.mubr.f32.mxu0 0.0
        %v891 = vand.u32 %v493, 4294901760
        %892 = vmatmul.mubr.f32.gmra.mrb[0].mxu0 %v891
        %v893 = vpop.f32.mrb[0].mxu0
        %v894 = vadd.f32 %v701, %v893
        %v895 = vpop.f32.mrb[0].mxu0
        %896 = vdwg.mxu0
        %897 = vmatprep.subr.mxu0 0.0
        %v898 = vand.u32 %v496, 4294901760
        %v899 = vsub.f32 %v496, %v898
        %900 = vmatpush1.xpose.msra.mxu0 %v899
        %901 = vmatprep.subr.mxu0 0.0
        %v902 = vand.u32 %v499, 4294901760
        %v903 = vsub.f32 %v499, %v902
        %904 = vmatpush1.xpose.msra.mxu0 %v903
        %905 = vmatprep.subr.mxu0 0.0
        %v906 = vand.u32 %v502, 4294901760
        %v907 = vsub.f32 %v502, %v906
        %908 = vmatpush1.xpose.msra.mxu0 %v907
        %909 = vmatprep.subr.mxu0 0.0
        %v910 = vand.u32 %v505, 4294901760
        %v911 = vsub.f32 %v505, %v910
        %912 = vmatpush1.xpose.msra.mxu0 %v911
        %913 = vmatprep.subr.mxu0 0.0
        %v914 = vand.u32 %v508, 4294901760
        %v915 = vsub.f32 %v508, %v914
        %916 = vmatpush1.xpose.msra.mxu0 %v915
        %917 = vmatprep.subr.mxu0 0.0
        %v918 = vand.u32 %v511, 4294901760
        %v919 = vsub.f32 %v511, %v918
        %920 = vmatpush1.xpose.msra.mxu0 %v919
        %921 = vmatprep.subr.mxu0 0.0
        %v922 = vand.u32 %v514, 4294901760
        %v923 = vsub.f32 %v514, %v922
        %924 = vmatpush1.xpose.msra.mxu0 %v923
        %925 = vmatprep.subr.mxu0 0.0
        %v926 = vand.u32 %v517, 4294901760
        %v927 = vsub.f32 %v517, %v926
        %928 = vmatpush1.xpose.msra.mxu0 %v927
        %929 = vmatprep.subr.mxu0 0.0
        %v930 = vand.u32 %v520, 4294901760
        %v931 = vsub.f32 %v520, %v930
        %932 = vmatpush1.xpose.msra.mxu0 %v931
        %933 = vmatprep.subr.mxu0 0.0
        %v934 = vand.u32 %v523, 4294901760
        %v935 = vsub.f32 %v523, %v934
        %936 = vmatpush1.xpose.msra.mxu0 %v935
        %937 = vmatprep.subr.mxu0 0.0
        %v938 = vand.u32 %v526, 4294901760
        %v939 = vsub.f32 %v526, %v938
        %940 = vmatpush1.xpose.msra.mxu0 %v939
        %941 = vmatprep.subr.mxu0 0.0
        %v942 = vand.u32 %v529, 4294901760
        %v943 = vsub.f32 %v529, %v942
        %944 = vmatpush1.xpose.msra.mxu0 %v943
        %945 = vmatprep.subr.mxu0 0.0
        %v946 = vand.u32 %v532, 4294901760
        %v947 = vsub.f32 %v532, %v946
        %948 = vmatpush1.xpose.msra.mxu0 %v947
        %949 = vmatprep.subr.mxu0 0.0
        %v950 = vand.u32 %v535, 4294901760
        %v951 = vsub.f32 %v535, %v950
        %952 = vmatpush1.xpose.msra.mxu0 %v951
        %953 = vmatprep.subr.mxu0 0.0
        %v954 = vand.u32 %v538, 4294901760
        %v955 = vsub.f32 %v538, %v954
        %956 = vmatpush1.xpose.msra.mxu0 %v955
        %957 = vmatprep.subr.mxu0 0.0
        %v958 = vand.u32 %v541, 4294901760
        %v959 = vsub.f32 %v541, %v958
        %960 = vmatpush1.xpose.msra.mxu0 %v959
        %961 = vmatprep.subr.mxu0 0.0
        %962 = vmatpush1.xpose.msra.mxu0 0.0
        %963 = vmatprep.subr.mxu0 0.0
        %964 = vmatpush1.xpose.msra.mxu0 0.0
        %965 = vmatprep.subr.mxu0 0.0
        %966 = vmatpush1.xpose.msra.mxu0 0.0
        %967 = vmatprep.subr.mxu0 0.0
        %968 = vmatpush1.xpose.msra.mxu0 0.0
        %969 = vmatprep.subr.mxu0 0.0
        %970 = vmatpush1.xpose.msra.mxu0 0.0
        %971 = vmatprep.subr.mxu0 0.0
        %972 = vmatpush1.xpose.msra.mxu0 0.0
        %973 = vmatprep.subr.mxu0 0.0
        %974 = vmatpush1.xpose.msra.mxu0 0.0
        %975 = vmatprep.subr.mxu0 0.0
        %976 = vmatpush1.xpose.msra.mxu0 0.0
        %977 = vmatprep.subr.mxu0 0.0
        %978 = vmatpush1.xpose.msra.mxu0 0.0
        %979 = vmatprep.subr.mxu0 0.0
        %980 = vmatpush1.xpose.msra.mxu0 0.0
        %981 = vmatprep.subr.mxu0 0.0
        %982 = vmatpush1.xpose.msra.mxu0 0.0
        %983 = vmatprep.subr.mxu0 0.0
        %984 = vmatpush1.xpose.msra.mxu0 0.0
        %985 = vmatprep.subr.mxu0 0.0
        %986 = vmatpush1.xpose.msra.mxu0 0.0
        %987 = vmatprep.subr.mxu0 0.0
        %988 = vmatpush1.xpose.msra.mxu0 0.0
        %989 = vmatprep.subr.mxu0 0.0
        %990 = vmatpush1.xpose.msra.mxu0 0.0
        %991 = vmatprep.subr.mxu0 0.0
        %992 = vmatpush1.xpose.msra.mxu0 0.0
        %993 = vmatprep.mubr.f32.mxu0 0.0
        %v994 = vand.u32 %v472, 4294901760
        %v995 = vsub.f32 %v472, %v994
        %996 = vmatmul.mubr.f32.gmra.mrb[0].mxu0 %v995
        %v997 = vpop.f32.mrb[0].mxu0
        %v998 = vadd.f32 %v852, %v997
        %v999 = vpop.f32.mrb[0].mxu0
        %1000 = vmatprep.mubr.f32.mxu0 0.0
        %v1001 = vand.u32 %v475, 4294901760
        %v1002 = vsub.f32 %v475, %v1001
        %1003 = vmatmul.mubr.f32.gmra.mrb[0].mxu0 %v1002
        %v1004 = vpop.f32.mrb[0].mxu0
        %v1005 = vadd.f32 %v858, %v1004
        %v1006 = vpop.f32.mrb[0].mxu0
        %1007 = vmatprep.mubr.f32.mxu0 0.0
        %v1008 = vand.u32 %v478, 4294901760
        %v1009 = vsub.f32 %v478, %v1008
        %1010 = vmatmul.mubr.f32.gmra.mrb[0].mxu0 %v1009
        %v1011 = vpop.f32.mrb[0].mxu0
        %v1012 = vadd.f32 %v864, %v1011
        %v1013 = vpop.f32.mrb[0].mxu0
        %1014 = vmatprep.mubr.f32.mxu0 0.0
        %v1015 = vand.u32 %v481, 4294901760
        %v1016 = vsub.f32 %v481, %v1015
        %1017 = vmatmul.mubr.f32.gmra.mrb[0].mxu0 %v1016
        %v1018 = vpop.f32.mrb[0].mxu0
        %v1019 = vadd.f32 %v870, %v1018
        %v1020 = vpop.f32.mrb[0].mxu0
        %1021 = vmatprep.mubr.f32.mxu0 0.0
        %v1022 = vand.u32 %v484, 4294901760
        %v1023 = vsub.f32 %v484, %v1022
        %1024 = vmatmul.mubr.f32.gmra.mrb[0].mxu0 %v1023
        %v1025 = vpop.f32.mrb[0].mxu0
        %v1026 = vadd.f32 %v876, %v1025
        %v1027 = vpop.f32.mrb[0].mxu0
        %1028 = vmatprep.mubr.f32.mxu0 0.0
        %v1029 = vand.u32 %v487, 4294901760
        %v1030 = vsub.f32 %v487, %v1029
        %1031 = vmatmul.mubr.f32.gmra.mrb[0].mxu0 %v1030
        %v1032 = vpop.f32.mrb[0].mxu0
        %v1033 = vadd.f32 %v882, %v1032
        %v1034 = vpop.f32.mrb[0].mxu0
        %1035 = vmatprep.mubr.f32.mxu0 0.0
        %v1036 = vand.u32 %v490, 4294901760
        %v1037 = vsub.f32 %v490, %v1036
        %1038 = vmatmul.mubr.f32.gmra.mrb[0].mxu0 %v1037
        %v1039 = vpop.f32.mrb[0].mxu0
        %v1040 = vadd.f32 %v888, %v1039
        %v1041 = vpop.f32.mrb[0].mxu0
        %1042 = vmatprep.mubr.f32.mxu0 0.0
        %v1043 = vand.u32 %v493, 4294901760
        %v1044 = vsub.f32 %v493, %v1043
        %1045 = vmatmul.mubr.f32.gmra.mrb[0].mxu0 %v1044
        %v1046 = vpop.f32.mrb[0].mxu0
        %v1047 = vadd.f32 %v894, %v1046
        %v1048 = vpop.f32.mrb[0].mxu0
        %1049 = vdwg.mxu0
        %1050 = vmatprep.subr.mxu0 0.0
        %v1051 = vand.u32 %v496, 4294901760
        %1052 = vmatpush1.xpose.msra.mxu0 %v1051
        %1053 = vmatprep.subr.mxu0 0.0
        %v1054 = vand.u32 %v499, 4294901760
        %1055 = vmatpush1.xpose.msra.mxu0 %v1054
        %1056 = vmatprep.subr.mxu0 0.0
        %v1057 = vand.u32 %v502, 4294901760
        %1058 = vmatpush1.xpose.msra.mxu0 %v1057
        %1059 = vmatprep.subr.mxu0 0.0
        %v1060 = vand.u32 %v505, 4294901760
        %1061 = vmatpush1.xpose.msra.mxu0 %v1060
        %1062 = vmatprep.subr.mxu0 0.0
        %v1063 = vand.u32 %v508, 4294901760
        %1064 = vmatpush1.xpose.msra.mxu0 %v1063
        %1065 = vmatprep.subr.mxu0 0.0
        %v1066 = vand.u32 %v511, 4294901760
        %1067 = vmatpush1.xpose.msra.mxu0 %v1066
        %1068 = vmatprep.subr.mxu0 0.0
        %v1069 = vand.u32 %v514, 4294901760
        %1070 = vmatpush1.xpose.msra.mxu0 %v1069
        %1071 = vmatprep.subr.mxu0 0.0
        %v1072 = vand.u32 %v517, 4294901760
        %1073 = vmatpush1.xpose.msra.mxu0 %v1072
        %1074 = vmatprep.subr.mxu0 0.0
        %v1075 = vand.u32 %v520, 4294901760
        %1076 = vmatpush1.xpose.msra.mxu0 %v1075
        %1077 = vmatprep.subr.mxu0 0.0
        %v1078 = vand.u32 %v523, 4294901760
        %1079 = vmatpush1.xpose.msra.mxu0 %v1078
        %1080 = vmatprep.subr.mxu0 0.0
        %v1081 = vand.u32 %v526, 4294901760
        %1082 = vmatpush1.xpose.msra.mxu0 %v1081
        %1083 = vmatprep.subr.mxu0 0.0
        %v1084 = vand.u32 %v529, 4294901760
        %1085 = vmatpush1.xpose.msra.mxu0 %v1084
        %1086 = vmatprep.subr.mxu0 0.0
        %v1087 = vand.u32 %v532, 4294901760
        %1088 = vmatpush1.xpose.msra.mxu0 %v1087
        %1089 = vmatprep.subr.mxu0 0.0
        %v1090 = vand.u32 %v535, 4294901760
        %1091 = vmatpush1.xpose.msra.mxu0 %v1090
        %1092 = vmatprep.subr.mxu0 0.0
        %v1093 = vand.u32 %v538, 4294901760
        %1094 = vmatpush1.xpose.msra.mxu0 %v1093
        %1095 = vmatprep.subr.mxu0 0.0
        %v1096 = vand.u32 %v541, 4294901760
        %1097 = vmatpush1.xpose.msra.mxu0 %v1096
        %1098 = vmatprep.subr.mxu0 0.0
        %1099 = vmatpush1.xpose.msra.mxu0 0.0
        %1100 = vmatprep.subr.mxu0 0.0
        %1101 = vmatpush1.xpose.msra.mxu0 0.0
        %1102 = vmatprep.subr.mxu0 0.0
        %1103 = vmatpush1.xpose.msra.mxu0 0.0
        %1104 = vmatprep.subr.mxu0 0.0
        %1105 = vmatpush1.xpose.msra.mxu0 0.0
        %1106 = vmatprep.subr.mxu0 0.0
        %1107 = vmatpush1.xpose.msra.mxu0 0.0
        %1108 = vmatprep.subr.mxu0 0.0
        %1109 = vmatpush1.xpose.msra.mxu0 0.0
        %1110 = vmatprep.subr.mxu0 0.0
        %1111 = vmatpush1.xpose.msra.mxu0 0.0
        %1112 = vmatprep.subr.mxu0 0.0
        %1113 = vmatpush1.xpose.msra.mxu0 0.0
        %1114 = vmatprep.subr.mxu0 0.0
        %1115 = vmatpush1.xpose.msra.mxu0 0.0
        %1116 = vmatprep.subr.mxu0 0.0
        %1117 = vmatpush1.xpose.msra.mxu0 0.0
        %1118 = vmatprep.subr.mxu0 0.0
        %1119 = vmatpush1.xpose.msra.mxu0 0.0
        %1120 = vmatprep.subr.mxu0 0.0
        %1121 = vmatpush1.xpose.msra.mxu0 0.0
        %1122 = vmatprep.subr.mxu0 0.0
        %1123 = vmatpush1.xpose.msra.mxu0 0.0
        %1124 = vmatprep.subr.mxu0 0.0
        %1125 = vmatpush1.xpose.msra.mxu0 0.0
        %1126 = vmatprep.subr.mxu0 0.0
        %1127 = vmatpush1.xpose.msra.mxu0 0.0
        %1128 = vmatprep.subr.mxu0 0.0
        %1129 = vmatpush1.xpose.msra.mxu0 0.0
        %1130 = vmatprep.mubr.f32.mxu0 0.0
        %v1131 = vand.u32 %v472, 4294901760
        %v1132 = vsub.f32 %v472, %v1131
        %v1133 = vand.u32 %v1132, 4294901760
        %1134 = vmatmul.mubr.f32.gmra.mrb[0].mxu0 %v1133
        %v1135 = vpop.f32.mrb[0].mxu0
        %v1136 = vadd.f32 %v998, %v1135
        %v1137 = vpop.f32.mrb[0].mxu0
        %1138 = vmatprep.mubr.f32.mxu0 0.0
        %v1139 = vand.u32 %v475, 4294901760
        %v1140 = vsub.f32 %v475, %v1139
        %v1141 = vand.u32 %v1140, 4294901760
        %1142 = vmatmul.mubr.f32.gmra.mrb[0].mxu0 %v1141
        %v1143 = vpop.f32.mrb[0].mxu0
        %v1144 = vadd.f32 %v1005, %v1143
        %v1145 = vpop.f32.mrb[0].mxu0
        %1146 = vmatprep.mubr.f32.mxu0 0.0
        %v1147 = vand.u32 %v478, 4294901760
        %v1148 = vsub.f32 %v478, %v1147
        %v1149 = vand.u32 %v1148, 4294901760
        %1150 = vmatmul.mubr.f32.gmra.mrb[0].mxu0 %v1149
        %v1151 = vpop.f32.mrb[0].mxu0
        %v1152 = vadd.f32 %v1012, %v1151
        %v1153 = vpop.f32.mrb[0].mxu0
        %1154 = vmatprep.mubr.f32.mxu0 0.0
        %v1155 = vand.u32 %v481, 4294901760
        %v1156 = vsub.f32 %v481, %v1155
        %v1157 = vand.u32 %v1156, 4294901760
        %1158 = vmatmul.mubr.f32.gmra.mrb[0].mxu0 %v1157
        %v1159 = vpop.f32.mrb[0].mxu0
        %v1160 = vadd.f32 %v1019, %v1159
        %v1161 = vpop.f32.mrb[0].mxu0
        %1162 = vmatprep.mubr.f32.mxu0 0.0
        %v1163 = vand.u32 %v484, 4294901760
        %v1164 = vsub.f32 %v484, %v1163
        %v1165 = vand.u32 %v1164, 4294901760
        %1166 = vmatmul.mubr.f32.gmra.mrb[0].mxu0 %v1165
        %v1167 = vpop.f32.mrb[0].mxu0
        %v1168 = vadd.f32 %v1026, %v1167
        %v1169 = vpop.f32.mrb[0].mxu0
        %1170 = vmatprep.mubr.f32.mxu0 0.0
        %v1171 = vand.u32 %v487, 4294901760
        %v1172 = vsub.f32 %v487, %v1171
        %v1173 = vand.u32 %v1172, 4294901760
        %1174 = vmatmul.mubr.f32.gmra.mrb[0].mxu0 %v1173
        %v1175 = vpop.f32.mrb[0].mxu0
        %v1176 = vadd.f32 %v1033, %v1175
        %v1177 = vpop.f32.mrb[0].mxu0
        %1178 = vmatprep.mubr.f32.mxu0 0.0
        %v1179 = vand.u32 %v490, 4294901760
        %v1180 = vsub.f32 %v490, %v1179
        %v1181 = vand.u32 %v1180, 4294901760
        %1182 = vmatmul.mubr.f32.gmra.mrb[0].mxu0 %v1181
        %v1183 = vpop.f32.mrb[0].mxu0
        %v1184 = vadd.f32 %v1040, %v1183
        %v1185 = vpop.f32.mrb[0].mxu0
        %1186 = vmatprep.mubr.f32.mxu0 0.0
        %v1187 = vand.u32 %v493, 4294901760
        %v1188 = vsub.f32 %v493, %v1187
        %v1189 = vand.u32 %v1188, 4294901760
        %1190 = vmatmul.mubr.f32.gmra.mrb[0].mxu0 %v1189
        %v1191 = vpop.f32.mrb[0].mxu0
        %v1192 = vadd.f32 %v1047, %v1191
        %v1193 = vpop.f32.mrb[0].mxu0
        %1194 = vdwg.mxu0
        %1195 = vmatprep.subr.mxu0 0.0
        %v1196 = vand.u32 %v496, 4294901760
        %v1197 = vsub.f32 %v496, %v1196
        %v1198 = vand.u32 %v1197, 4294901760
        %1199 = vmatpush1.xpose.msra.mxu0 %v1198
        %1200 = vmatprep.subr.mxu0 0.0
        %v1201 = vand.u32 %v499, 4294901760
        %v1202 = vsub.f32 %v499, %v1201
        %v1203 = vand.u32 %v1202, 4294901760
        %1204 = vmatpush1.xpose.msra.mxu0 %v1203
        %1205 = vmatprep.subr.mxu0 0.0
        %v1206 = vand.u32 %v502, 4294901760
        %v1207 = vsub.f32 %v502, %v1206
        %v1208 = vand.u32 %v1207, 4294901760
        %1209 = vmatpush1.xpose.msra.mxu0 %v1208
        %1210 = vmatprep.subr.mxu0 0.0
        %v1211 = vand.u32 %v505, 4294901760
        %v1212 = vsub.f32 %v505, %v1211
        %v1213 = vand.u32 %v1212, 4294901760
        %1214 = vmatpush1.xpose.msra.mxu0 %v1213
        %1215 = vmatprep.subr.mxu0 0.0
        %v1216 = vand.u32 %v508, 4294901760
        %v1217 = vsub.f32 %v508, %v1216
        %v1218 = vand.u32 %v1217, 4294901760
        %1219 = vmatpush1.xpose.msra.mxu0 %v1218
        %1220 = vmatprep.subr.mxu0 0.0
        %v1221 = vand.u32 %v511, 4294901760
        %v1222 = vsub.f32 %v511, %v1221
        %v1223 = vand.u32 %v1222, 4294901760
        %1224 = vmatpush1.xpose.msra.mxu0 %v1223
        %1225 = vmatprep.subr.mxu0 0.0
        %v1226 = vand.u32 %v514, 4294901760
        %v1227 = vsub.f32 %v514, %v1226
        %v1228 = vand.u32 %v1227, 4294901760
        %1229 = vmatpush1.xpose.msra.mxu0 %v1228
        %1230 = vmatprep.subr.mxu0 0.0
        %v1231 = vand.u32 %v517, 4294901760
        %v1232 = vsub.f32 %v517, %v1231
        %v1233 = vand.u32 %v1232, 4294901760
        %1234 = vmatpush1.xpose.msra.mxu0 %v1233
        %1235 = vmatprep.subr.mxu0 0.0
        %v1236 = vand.u32 %v520, 4294901760
        %v1237 = vsub.f32 %v520, %v1236
        %v1238 = vand.u32 %v1237, 4294901760
        %1239 = vmatpush1.xpose.msra.mxu0 %v1238
        %1240 = vmatprep.subr.mxu0 0.0
        %v1241 = vand.u32 %v523, 4294901760
        %v1242 = vsub.f32 %v523, %v1241
        %v1243 = vand.u32 %v1242, 4294901760
        %1244 = vmatpush1.xpose.msra.mxu0 %v1243
        %1245 = vmatprep.subr.mxu0 0.0
        %v1246 = vand.u32 %v526, 4294901760
        %v1247 = vsub.f32 %v526, %v1246
        %v1248 = vand.u32 %v1247, 4294901760
        %1249 = vmatpush1.xpose.msra.mxu0 %v1248
        %1250 = vmatprep.subr.mxu0 0.0
        %v1251 = vand.u32 %v529, 4294901760
        %v1252 = vsub.f32 %v529, %v1251
        %v1253 = vand.u32 %v1252, 4294901760
        %1254 = vmatpush1.xpose.msra.mxu0 %v1253
        %1255 = vmatprep.subr.mxu0 0.0
        %v1256 = vand.u32 %v532, 4294901760
        %v1257 = vsub.f32 %v532, %v1256
        %v1258 = vand.u32 %v1257, 4294901760
        %1259 = vmatpush1.xpose.msra.mxu0 %v1258
        %1260 = vmatprep.subr.mxu0 0.0
        %v1261 = vand.u32 %v535, 4294901760
        %v1262 = vsub.f32 %v535, %v1261
        %v1263 = vand.u32 %v1262, 4294901760
        %1264 = vmatpush1.xpose.msra.mxu0 %v1263
        %1265 = vmatprep.subr.mxu0 0.0
        %v1266 = vand.u32 %v538, 4294901760
        %v1267 = vsub.f32 %v538, %v1266
        %v1268 = vand.u32 %v1267, 4294901760
        %1269 = vmatpush1.xpose.msra.mxu0 %v1268
        %1270 = vmatprep.subr.mxu0 0.0
        %v1271 = vand.u32 %v541, 4294901760
        %v1272 = vsub.f32 %v541, %v1271
        %v1273 = vand.u32 %v1272, 4294901760
        %1274 = vmatpush1.xpose.msra.mxu0 %v1273
        %1275 = vmatprep.subr.mxu0 0.0
        %1276 = vmatpush1.xpose.msra.mxu0 0.0
        %1277 = vmatprep.subr.mxu0 0.0
        %1278 = vmatpush1.xpose.msra.mxu0 0.0
        %1279 = vmatprep.subr.mxu0 0.0
        %1280 = vmatpush1.xpose.msra.mxu0 0.0
        %1281 = vmatprep.subr.mxu0 0.0
        %1282 = vmatpush1.xpose.msra.mxu0 0.0
        %1283 = vmatprep.subr.mxu0 0.0
        %1284 = vmatpush1.xpose.msra.mxu0 0.0
        %1285 = vmatprep.subr.mxu0 0.0
        %1286 = vmatpush1.xpose.msra.mxu0 0.0
        %1287 = vmatprep.subr.mxu0 0.0
        %1288 = vmatpush1.xpose.msra.mxu0 0.0
        %1289 = vmatprep.subr.mxu0 0.0
        %1290 = vmatpush1.xpose.msra.mxu0 0.0
        %1291 = vmatprep.subr.mxu0 0.0
        %1292 = vmatpush1.xpose.msra.mxu0 0.0
        %1293 = vmatprep.subr.mxu0 0.0
        %1294 = vmatpush1.xpose.msra.mxu0 0.0
        %1295 = vmatprep.subr.mxu0 0.0
        %1296 = vmatpush1.xpose.msra.mxu0 0.0
        %1297 = vmatprep.subr.mxu0 0.0
        %1298 = vmatpush1.xpose.msra.mxu0 0.0
        %1299 = vmatprep.subr.mxu0 0.0
        %1300 = vmatpush1.xpose.msra.mxu0 0.0
        %1301 = vmatprep.subr.mxu0 0.0
        %1302 = vmatpush1.xpose.msra.mxu0 0.0
        %1303 = vmatprep.subr.mxu0 0.0
        %1304 = vmatpush1.xpose.msra.mxu0 0.0
        %1305 = vmatprep.subr.mxu0 0.0
        %1306 = vmatpush1.xpose.msra.mxu0 0.0
        %1307 = vmatprep.mubr.f32.mxu0 0.0
        %v1308 = vand.u32 %v472, 4294901760
        %1309 = vmatmul.mubr.f32.gmra.mrb[0].mxu0 %v1308
        %v1310 = vpop.f32.mrb[0].mxu0
        %v1311 = vadd.f32 %v1136, %v1310
        %v1312 = vpop.f32.mrb[0].mxu0
        %1313 = vmatprep.mubr.f32.mxu0 0.0
        %v1314 = vand.u32 %v475, 4294901760
        %1315 = vmatmul.mubr.f32.gmra.mrb[0].mxu0 %v1314
        %v1316 = vpop.f32.mrb[0].mxu0
        %v1317 = vadd.f32 %v1144, %v1316
        %v1318 = vpop.f32.mrb[0].mxu0
        %1319 = vmatprep.mubr.f32.mxu0 0.0
        %v1320 = vand.u32 %v478, 4294901760
        %1321 = vmatmul.mubr.f32.gmra.mrb[0].mxu0 %v1320
        %v1322 = vpop.f32.mrb[0].mxu0
        %v1323 = vadd.f32 %v1152, %v1322
        %v1324 = vpop.f32.mrb[0].mxu0
        %1325 = vmatprep.mubr.f32.mxu0 0.0
        %v1326 = vand.u32 %v481, 4294901760
        %1327 = vmatmul.mubr.f32.gmra.mrb[0].mxu0 %v1326
        %v1328 = vpop.f32.mrb[0].mxu0
        %v1329 = vadd.f32 %v1160, %v1328
        %v1330 = vpop.f32.mrb[0].mxu0
        %1331 = vmatprep.mubr.f32.mxu0 0.0
        %v1332 = vand.u32 %v484, 4294901760
        %1333 = vmatmul.mubr.f32.gmra.mrb[0].mxu0 %v1332
        %v1334 = vpop.f32.mrb[0].mxu0
        %v1335 = vadd.f32 %v1168, %v1334
        %v1336 = vpop.f32.mrb[0].mxu0
        %1337 = vmatprep.mubr.f32.mxu0 0.0
        %v1338 = vand.u32 %v487, 4294901760
        %1339 = vmatmul.mubr.f32.gmra.mrb[0].mxu0 %v1338
        %v1340 = vpop.f32.mrb[0].mxu0
        %v1341 = vadd.f32 %v1176, %v1340
        %v1342 = vpop.f32.mrb[0].mxu0
        %1343 = vmatprep.mubr.f32.mxu0 0.0
        %v1344 = vand.u32 %v490, 4294901760
        %1345 = vmatmul.mubr.f32.gmra.mrb[0].mxu0 %v1344
        %v1346 = vpop.f32.mrb[0].mxu0
        %v1347 = vadd.f32 %v1184, %v1346
        %v1348 = vpop.f32.mrb[0].mxu0
        %1349 = vmatprep.mubr.f32.mxu0 0.0
        %v1350 = vand.u32 %v493, 4294901760
        %1351 = vmatmul.mubr.f32.gmra.mrb[0].mxu0 %v1350
        %v1352 = vpop.f32.mrb[0].mxu0
        %v1353 = vadd.f32 %v1192, %v1352
        %v1354 = vpop.f32.mrb[0].mxu0
        %1355 = vdwg.mxu0
        %1356 = vmatprep.subr.mxu0 0.0
        %v1357 = vand.u32 %v496, 4294901760
        %1358 = vmatpush1.xpose.msra.mxu0 %v1357
        %1359 = vmatprep.subr.mxu0 0.0
        %v1360 = vand.u32 %v499, 4294901760
        %1361 = vmatpush1.xpose.msra.mxu0 %v1360
        %1362 = vmatprep.subr.mxu0 0.0
        %v1363 = vand.u32 %v502, 4294901760
        %1364 = vmatpush1.xpose.msra.mxu0 %v1363
        %1365 = vmatprep.subr.mxu0 0.0
        %v1366 = vand.u32 %v505, 4294901760
        %1367 = vmatpush1.xpose.msra.mxu0 %v1366
        %1368 = vmatprep.subr.mxu0 0.0
        %v1369 = vand.u32 %v508, 4294901760
        %1370 = vmatpush1.xpose.msra.mxu0 %v1369
        %1371 = vmatprep.subr.mxu0 0.0
        %v1372 = vand.u32 %v511, 4294901760
        %1373 = vmatpush1.xpose.msra.mxu0 %v1372
        %1374 = vmatprep.subr.mxu0 0.0
        %v1375 = vand.u32 %v514, 4294901760
        %1376 = vmatpush1.xpose.msra.mxu0 %v1375
        %1377 = vmatprep.subr.mxu0 0.0
        %v1378 = vand.u32 %v517, 4294901760
        %1379 = vmatpush1.xpose.msra.mxu0 %v1378
        %1380 = vmatprep.subr.mxu0 0.0
        %v1381 = vand.u32 %v520, 4294901760
        %1382 = vmatpush1.xpose.msra.mxu0 %v1381
        %1383 = vmatprep.subr.mxu0 0.0
        %v1384 = vand.u32 %v523, 4294901760
        %1385 = vmatpush1.xpose.msra.mxu0 %v1384
        %1386 = vmatprep.subr.mxu0 0.0
        %v1387 = vand.u32 %v526, 4294901760
        %1388 = vmatpush1.xpose.msra.mxu0 %v1387
        %1389 = vmatprep.subr.mxu0 0.0
        %v1390 = vand.u32 %v529, 4294901760
        %1391 = vmatpush1.xpose.msra.mxu0 %v1390
        %1392 = vmatprep.subr.mxu0 0.0
        %v1393 = vand.u32 %v532, 4294901760
        %1394 = vmatpush1.xpose.msra.mxu0 %v1393
        %1395 = vmatprep.subr.mxu0 0.0
        %v1396 = vand.u32 %v535, 4294901760
        %1397 = vmatpush1.xpose.msra.mxu0 %v1396
        %1398 = vmatprep.subr.mxu0 0.0
        %v1399 = vand.u32 %v538, 4294901760
        %1400 = vmatpush1.xpose.msra.mxu0 %v1399
        %1401 = vmatprep.subr.mxu0 0.0
        %v1402 = vand.u32 %v541, 4294901760
        %1403 = vmatpush1.xpose.msra.mxu0 %v1402
        %1404 = vmatprep.subr.mxu0 0.0
        %1405 = vmatpush1.xpose.msra.mxu0 0.0
        %1406 = vmatprep.subr.mxu0 0.0
        %1407 = vmatpush1.xpose.msra.mxu0 0.0
        %1408 = vmatprep.subr.mxu0 0.0
        %1409 = vmatpush1.xpose.msra.mxu0 0.0
        %1410 = vmatprep.subr.mxu0 0.0
        %1411 = vmatpush1.xpose.msra.mxu0 0.0
        %1412 = vmatprep.subr.mxu0 0.0
        %1413 = vmatpush1.xpose.msra.mxu0 0.0
        %1414 = vmatprep.subr.mxu0 0.0
        %1415 = vmatpush1.xpose.msra.mxu0 0.0
        %1416 = vmatprep.subr.mxu0 0.0
        %1417 = vmatpush1.xpose.msra.mxu0 0.0
        %1418 = vmatprep.subr.mxu0 0.0
        %1419 = vmatpush1.xpose.msra.mxu0 0.0
        %1420 = vmatprep.subr.mxu0 0.0
        %1421 = vmatpush1.xpose.msra.mxu0 0.0
        %1422 = vmatprep.subr.mxu0 0.0
        %1423 = vmatpush1.xpose.msra.mxu0 0.0
        %1424 = vmatprep.subr.mxu0 0.0
        %1425 = vmatpush1.xpose.msra.mxu0 0.0
        %1426 = vmatprep.subr.mxu0 0.0
        %1427 = vmatpush1.xpose.msra.mxu0 0.0
        %1428 = vmatprep.subr.mxu0 0.0
        %1429 = vmatpush1.xpose.msra.mxu0 0.0
        %1430 = vmatprep.subr.mxu0 0.0
        %1431 = vmatpush1.xpose.msra.mxu0 0.0
        %1432 = vmatprep.subr.mxu0 0.0
        %1433 = vmatpush1.xpose.msra.mxu0 0.0
        %1434 = vmatprep.subr.mxu0 0.0
        %1435 = vmatpush1.xpose.msra.mxu0 0.0
        %1436 = vmatprep.mubr.f32.mxu0 0.0
        %v1437 = vand.u32 %v472, 4294901760
        %1438 = vmatmul.mubr.f32.gmra.mrb[0].mxu0 %v1437
        %v1439 = vpop.f32.mrb[0].mxu0
        %v1440 = vadd.f32 %v1311, %v1439
        %v1441 = vpop.f32.mrb[0].mxu0
        %1442 = vmatprep.mubr.f32.mxu0 0.0
        %v1443 = vand.u32 %v475, 4294901760
        %1444 = vmatmul.mubr.f32.gmra.mrb[0].mxu0 %v1443
        %v1445 = vpop.f32.mrb[0].mxu0
        %v1446 = vadd.f32 %v1317, %v1445
        %v1447 = vpop.f32.mrb[0].mxu0
        %1448 = vmatprep.mubr.f32.mxu0 0.0
        %v1449 = vand.u32 %v478, 4294901760
        %1450 = vmatmul.mubr.f32.gmra.mrb[0].mxu0 %v1449
        %v1451 = vpop.f32.mrb[0].mxu0
        %v1452 = vadd.f32 %v1323, %v1451
        %v1453 = vpop.f32.mrb[0].mxu0
        %1454 = vmatprep.mubr.f32.mxu0 0.0
        %v1455 = vand.u32 %v481, 4294901760
        %1456 = vmatmul.mubr.f32.gmra.mrb[0].mxu0 %v1455
        %v1457 = vpop.f32.mrb[0].mxu0
        %v1458 = vadd.f32 %v1329, %v1457
        %v1459 = vpop.f32.mrb[0].mxu0
        %1460 = vmatprep.mubr.f32.mxu0 0.0
        %v1461 = vand.u32 %v484, 4294901760
        %1462 = vmatmul.mubr.f32.gmra.mrb[0].mxu0 %v1461
        %v1463 = vpop.f32.mrb[0].mxu0
        %v1464 = vadd.f32 %v1335, %v1463
        %v1465 = vpop.f32.mrb[0].mxu0
        %1466 = vmatprep.mubr.f32.mxu0 0.0
        %v1467 = vand.u32 %v487, 4294901760
        %1468 = vmatmul.mubr.f32.gmra.mrb[0].mxu0 %v1467
        %v1469 = vpop.f32.mrb[0].mxu0
        %v1470 = vadd.f32 %v1341, %v1469
        %v1471 = vpop.f32.mrb[0].mxu0
        %1472 = vmatprep.mubr.f32.mxu0 0.0
        %v1473 = vand.u32 %v490, 4294901760
        %1474 = vmatmul.mubr.f32.gmra.mrb[0].mxu0 %v1473
        %v1475 = vpop.f32.mrb[0].mxu0
        %v1476 = vadd.f32 %v1347, %v1475
        %v1477 = vpop.f32.mrb[0].mxu0
        %1478 = vmatprep.mubr.f32.mxu0 0.0
        %v1479 = vand.u32 %v493, 4294901760
        %1480 = vmatmul.mubr.f32.gmra.mrb[0].mxu0 %v1479
        %v1481 = vpop.f32.mrb[0].mxu0
        %v1482 = vadd.f32 %v1353, %v1481
        %v1483 = vpop.f32.mrb[0].mxu0
        %1484 = vdwg.mxu0
        %vm1485 = vcmask 23552
        %v1487 = vsel %vm1485, %v447, 0
        %v1490 = vsel %vm1485, %v448, 0
        %v1493 = vsel %vm1485, %v449, 0
        %v1496 = vsel %vm1485, %v450, 0
        %v1499 = vsel %vm1485, %v406, 0
        %v1502 = vsel %vm1485, %v407, 0
        %v1505 = vsel %vm1485, %v408, 0
        %v1508 = vsel %vm1485, %v409, 0
        %v1511 = vsel %vm1485, %v410, 0
        %v1514 = vsel %vm1485, %v411, 0
        %v1517 = vsel %vm1485, %v412, 0
        %v1520 = vsel %vm1485, %v413, 0
        %v1523 = vsel %vm1485, %v414, 0
        %v1526 = vsel %vm1485, %v415, 0
        %v1529 = vsel %vm1485, %v416, 0
        %v1532 = vsel %vm1485, %v417, 0
        %v1535 = vsel %vm1485, %v418, 0
        %v1538 = vsel %vm1485, %v419, 0
        %v1541 = vsel %vm1485, %v420, 0
        %v1544 = vsel %vm1485, %v421, 0
        %1546 = vmatprep.subr.mxu0 0.0
        %v1547 = vand.u32 %v1499, 4294901760
        %1548 = vmatpush1.xpose.msra.mxu0 %v1547
        %1549 = vmatprep.subr.mxu0 0.0
        %v1550 = vand.u32 %v1502, 4294901760
        %1551 = vmatpush1.xpose.msra.mxu0 %v1550
        %1552 = vmatprep.subr.mxu0 0.0
        %v1553 = vand.u32 %v1505, 4294901760
        %1554 = vmatpush1.xpose.msra.mxu0 %v1553
        %1555 = vmatprep.subr.mxu0 0.0
        %v1556 = vand.u32 %v1508, 4294901760
        %1557 = vmatpush1.xpose.msra.mxu0 %v1556
        %1558 = vmatprep.subr.mxu0 0.0
        %v1559 = vand.u32 %v1511, 4294901760
        %1560 = vmatpush1.xpose.msra.mxu0 %v1559
        %1561 = vmatprep.subr.mxu0 0.0
        %v1562 = vand.u32 %v1514, 4294901760
        %1563 = vmatpush1.xpose.msra.mxu0 %v1562
        %1564 = vmatprep.subr.mxu0 0.0
        %v1565 = vand.u32 %v1517, 4294901760
        %1566 = vmatpush1.xpose.msra.mxu0 %v1565
        %1567 = vmatprep.subr.mxu0 0.0
        %v1568 = vand.u32 %v1520, 4294901760
        %1569 = vmatpush1.xpose.msra.mxu0 %v1568
        %1570 = vmatprep.subr.mxu0 0.0
        %v1571 = vand.u32 %v1523, 4294901760
        %1572 = vmatpush1.xpose.msra.mxu0 %v1571
        %1573 = vmatprep.subr.mxu0 0.0
        %v1574 = vand.u32 %v1526, 4294901760
        %1575 = vmatpush1.xpose.msra.mxu0 %v1574
        %1576 = vmatprep.subr.mxu0 0.0
        %v1577 = vand.u32 %v1529, 4294901760
        %1578 = vmatpush1.xpose.msra.mxu0 %v1577
        %1579 = vmatprep.subr.mxu0 0.0
        %v1580 = vand.u32 %v1532, 4294901760
        %1581 = vmatpush1.xpose.msra.mxu0 %v1580
        %1582 = vmatprep.subr.mxu0 0.0
        %v1583 = vand.u32 %v1535, 4294901760
        %1584 = vmatpush1.xpose.msra.mxu0 %v1583
        %1585 = vmatprep.subr.mxu0 0.0
        %v1586 = vand.u32 %v1538, 4294901760
        %1587 = vmatpush1.xpose.msra.mxu0 %v1586
        %1588 = vmatprep.subr.mxu0 0.0
        %v1589 = vand.u32 %v1541, 4294901760
        %1590 = vmatpush1.xpose.msra.mxu0 %v1589
        %1591 = vmatprep.subr.mxu0 0.0
        %v1592 = vand.u32 %v1544, 4294901760
        %1593 = vmatpush1.xpose.msra.mxu0 %v1592
        %1594 = vmatprep.subr.mxu0 0.0
        %1595 = vmatpush1.xpose.msra.mxu0 0.0
        %1596 = vmatprep.subr.mxu0 0.0
        %1597 = vmatpush1.xpose.msra.mxu0 0.0
        %1598 = vmatprep.subr.mxu0 0.0
        %1599 = vmatpush1.xpose.msra.mxu0 0.0
        %1600 = vmatprep.subr.mxu0 0.0
        %1601 = vmatpush1.xpose.msra.mxu0 0.0
        %1602 = vmatprep.subr.mxu0 0.0
        %1603 = vmatpush1.xpose.msra.mxu0 0.0
        %1604 = vmatprep.subr.mxu0 0.0
        %1605 = vmatpush1.xpose.msra.mxu0 0.0
        %1606 = vmatprep.subr.mxu0 0.0
        %1607 = vmatpush1.xpose.msra.mxu0 0.0
        %1608 = vmatprep.subr.mxu0 0.0
        %1609 = vmatpush1.xpose.msra.mxu0 0.0
        %1610 = vmatprep.subr.mxu0 0.0
        %1611 = vmatpush1.xpose.msra.mxu0 0.0
        %1612 = vmatprep.subr.mxu0 0.0
        %1613 = vmatpush1.xpose.msra.mxu0 0.0
        %1614 = vmatprep.subr.mxu0 0.0
        %1615 = vmatpush1.xpose.msra.mxu0 0.0
        %1616 = vmatprep.subr.mxu0 0.0
        %1617 = vmatpush1.xpose.msra.mxu0 0.0
        %1618 = vmatprep.subr.mxu0 0.0
        %1619 = vmatpush1.xpose.msra.mxu0 0.0
        %1620 = vmatprep.subr.mxu0 0.0
        %1621 = vmatpush1.xpose.msra.mxu0 0.0
        %1622 = vmatprep.subr.mxu0 0.0
        %1623 = vmatpush1.xpose.msra.mxu0 0.0
        %1624 = vmatprep.subr.mxu0 0.0
        %1625 = vmatpush1.xpose.msra.mxu0 0.0
        %1626 = vmatprep.mubr.f32.mxu0 0.0
        %v1627 = vand.u32 %v1487, 4294901760
        %v1628 = vsub.f32 %v1487, %v1627
        %v1629 = vand.u32 %v1628, 4294901760
        %v1630 = vsub.f32 %v1628, %v1629
        %v1631 = vand.u32 %v1630, 4294901760
        %1632 = vmatmul.mubr.f32.gmra.mrb[0].mxu0 %v1631
        %v1633 = vpop.f32.mrb[0].mxu0
        %v1634 = vadd.f32 0.0, %v1633
        %v1635 = vpop.f32.mrb[0].mxu0
        %1636 = vmatprep.mubr.f32.mxu0 0.0
        %v1637 = vand.u32 %v1490, 4294901760
        %v1638 = vsub.f32 %v1490, %v1637
        %v1639 = vand.u32 %v1638, 4294901760
        %v1640 = vsub.f32 %v1638, %v1639
        %v1641 = vand.u32 %v1640, 4294901760
        %1642 = vmatmul.mubr.f32.gmra.mrb[0].mxu0 %v1641
        %v1643 = vpop.f32.mrb[0].mxu0
        %v1644 = vadd.f32 0.0, %v1643
        %v1645 = vpop.f32.mrb[0].mxu0
        %1646 = vmatprep.mubr.f32.mxu0 0.0
        %v1647 = vand.u32 %v1493, 4294901760
        %v1648 = vsub.f32 %v1493, %v1647
        %v1649 = vand.u32 %v1648, 4294901760
        %v1650 = vsub.f32 %v1648, %v1649
        %v1651 = vand.u32 %v1650, 4294901760
        %1652 = vmatmul.mubr.f32.gmra.mrb[0].mxu0 %v1651
        %v1653 = vpop.f32.mrb[0].mxu0
        %v1654 = vadd.f32 0.0, %v1653
        %v1655 = vpop.f32.mrb[0].mxu0
        %1656 = vmatprep.mubr.f32.mxu0 0.0
        %v1657 = vand.u32 %v1496, 4294901760
        %v1658 = vsub.f32 %v1496, %v1657
        %v1659 = vand.u32 %v1658, 4294901760
        %v1660 = vsub.f32 %v1658, %v1659
        %v1661 = vand.u32 %v1660, 4294901760
        %1662 = vmatmul.mubr.f32.gmra.mrb[0].mxu0 %v1661
        %v1663 = vpop.f32.mrb[0].mxu0
        %v1664 = vadd.f32 0.0, %v1663
        %v1665 = vpop.f32.mrb[0].mxu0
        %1666 = vdwg.mxu0
        %1667 = vmatprep.subr.mxu0 0.0
        %v1668 = vand.u32 %v1499, 4294901760
        %v1669 = vsub.f32 %v1499, %v1668
        %v1670 = vand.u32 %v1669, 4294901760
        %v1671 = vsub.f32 %v1669, %v1670
        %v1672 = vand.u32 %v1671, 4294901760
        %1673 = vmatpush1.xpose.msra.mxu0 %v1672
        %1674 = vmatprep.subr.mxu0 0.0
        %v1675 = vand.u32 %v1502, 4294901760
        %v1676 = vsub.f32 %v1502, %v1675
        %v1677 = vand.u32 %v1676, 4294901760
        %v1678 = vsub.f32 %v1676, %v1677
        %v1679 = vand.u32 %v1678, 4294901760
        %1680 = vmatpush1.xpose.msra.mxu0 %v1679
        %1681 = vmatprep.subr.mxu0 0.0
        %v1682 = vand.u32 %v1505, 4294901760
        %v1683 = vsub.f32 %v1505, %v1682
        %v1684 = vand.u32 %v1683, 4294901760
        %v1685 = vsub.f32 %v1683, %v1684
        %v1686 = vand.u32 %v1685, 4294901760
        %1687 = vmatpush1.xpose.msra.mxu0 %v1686
        %1688 = vmatprep.subr.mxu0 0.0
        %v1689 = vand.u32 %v1508, 4294901760
        %v1690 = vsub.f32 %v1508, %v1689
        %v1691 = vand.u32 %v1690, 4294901760
        %v1692 = vsub.f32 %v1690, %v1691
        %v1693 = vand.u32 %v1692, 4294901760
        %1694 = vmatpush1.xpose.msra.mxu0 %v1693
        %1695 = vmatprep.subr.mxu0 0.0
        %v1696 = vand.u32 %v1511, 4294901760
        %v1697 = vsub.f32 %v1511, %v1696
        %v1698 = vand.u32 %v1697, 4294901760
        %v1699 = vsub.f32 %v1697, %v1698
        %v1700 = vand.u32 %v1699, 4294901760
        %1701 = vmatpush1.xpose.msra.mxu0 %v1700
        %1702 = vmatprep.subr.mxu0 0.0
        %v1703 = vand.u32 %v1514, 4294901760
        %v1704 = vsub.f32 %v1514, %v1703
        %v1705 = vand.u32 %v1704, 4294901760
        %v1706 = vsub.f32 %v1704, %v1705
        %v1707 = vand.u32 %v1706, 4294901760
        %1708 = vmatpush1.xpose.msra.mxu0 %v1707
        %1709 = vmatprep.subr.mxu0 0.0
        %v1710 = vand.u32 %v1517, 4294901760
        %v1711 = vsub.f32 %v1517, %v1710
        %v1712 = vand.u32 %v1711, 4294901760
        %v1713 = vsub.f32 %v1711, %v1712
        %v1714 = vand.u32 %v1713, 4294901760
        %1715 = vmatpush1.xpose.msra.mxu0 %v1714
        %1716 = vmatprep.subr.mxu0 0.0
        %v1717 = vand.u32 %v1520, 4294901760
        %v1718 = vsub.f32 %v1520, %v1717
        %v1719 = vand.u32 %v1718, 4294901760
        %v1720 = vsub.f32 %v1718, %v1719
        %v1721 = vand.u32 %v1720, 4294901760
        %1722 = vmatpush1.xpose.msra.mxu0 %v1721
        %1723 = vmatprep.subr.mxu0 0.0
        %v1724 = vand.u32 %v1523, 4294901760
        %v1725 = vsub.f32 %v1523, %v1724
        %v1726 = vand.u32 %v1725, 4294901760
        %v1727 = vsub.f32 %v1725, %v1726
        %v1728 = vand.u32 %v1727, 4294901760
        %1729 = vmatpush1.xpose.msra.mxu0 %v1728
        %1730 = vmatprep.subr.mxu0 0.0
        %v1731 = vand.u32 %v1526, 4294901760
        %v1732 = vsub.f32 %v1526, %v1731
        %v1733 = vand.u32 %v1732, 4294901760
        %v1734 = vsub.f32 %v1732, %v1733
        %v1735 = vand.u32 %v1734, 4294901760
        %1736 = vmatpush1.xpose.msra.mxu0 %v1735
        %1737 = vmatprep.subr.mxu0 0.0
        %v1738 = vand.u32 %v1529, 4294901760
        %v1739 = vsub.f32 %v1529, %v1738
        %v1740 = vand.u32 %v1739, 4294901760
        %v1741 = vsub.f32 %v1739, %v1740
        %v1742 = vand.u32 %v1741, 4294901760
        %1743 = vmatpush1.xpose.msra.mxu0 %v1742
        %1744 = vmatprep.subr.mxu0 0.0
        %v1745 = vand.u32 %v1532, 4294901760
        %v1746 = vsub.f32 %v1532, %v1745
        %v1747 = vand.u32 %v1746, 4294901760
        %v1748 = vsub.f32 %v1746, %v1747
        %v1749 = vand.u32 %v1748, 4294901760
        %1750 = vmatpush1.xpose.msra.mxu0 %v1749
        %1751 = vmatprep.subr.mxu0 0.0
        %v1752 = vand.u32 %v1535, 4294901760
        %v1753 = vsub.f32 %v1535, %v1752
        %v1754 = vand.u32 %v1753, 4294901760
        %v1755 = vsub.f32 %v1753, %v1754
        %v1756 = vand.u32 %v1755, 4294901760
        %1757 = vmatpush1.xpose.msra.mxu0 %v1756
        %1758 = vmatprep.subr.mxu0 0.0
        %v1759 = vand.u32 %v1538, 4294901760
        %v1760 = vsub.f32 %v1538, %v1759
        %v1761 = vand.u32 %v1760, 4294901760
        %v1762 = vsub.f32 %v1760, %v1761
        %v1763 = vand.u32 %v1762, 4294901760
        %1764 = vmatpush1.xpose.msra.mxu0 %v1763
        %1765 = vmatprep.subr.mxu0 0.0
        %v1766 = vand.u32 %v1541, 4294901760
        %v1767 = vsub.f32 %v1541, %v1766
        %v1768 = vand.u32 %v1767, 4294901760
        %v1769 = vsub.f32 %v1767, %v1768
        %v1770 = vand.u32 %v1769, 4294901760
        %1771 = vmatpush1.xpose.msra.mxu0 %v1770
        %1772 = vmatprep.subr.mxu0 0.0
        %v1773 = vand.u32 %v1544, 4294901760
        %v1774 = vsub.f32 %v1544, %v1773
        %v1775 = vand.u32 %v1774, 4294901760
        %v1776 = vsub.f32 %v1774, %v1775
        %v1777 = vand.u32 %v1776, 4294901760
        %1778 = vmatpush1.xpose.msra.mxu0 %v1777
        %1779 = vmatprep.subr.mxu0 0.0
        %1780 = vmatpush1.xpose.msra.mxu0 0.0
        %1781 = vmatprep.subr.mxu0 0.0
        %1782 = vmatpush1.xpose.msra.mxu0 0.0
        %1783 = vmatprep.subr.mxu0 0.0
        %1784 = vmatpush1.xpose.msra.mxu0 0.0
        %1785 = vmatprep.subr.mxu0 0.0
        %1786 = vmatpush1.xpose.msra.mxu0 0.0
        %1787 = vmatprep.subr.mxu0 0.0
        %1788 = vmatpush1.xpose.msra.mxu0 0.0
        %1789 = vmatprep.subr.mxu0 0.0
        %1790 = vmatpush1.xpose.msra.mxu0 0.0
        %1791 = vmatprep.subr.mxu0 0.0
        %1792 = vmatpush1.xpose.msra.mxu0 0.0
        %1793 = vmatprep.subr.mxu0 0.0
        %1794 = vmatpush1.xpose.msra.mxu0 0.0
        %1795 = vmatprep.subr.mxu0 0.0
        %1796 = vmatpush1.xpose.msra.mxu0 0.0
        %1797 = vmatprep.subr.mxu0 0.0
        %1798 = vmatpush1.xpose.msra.mxu0 0.0
        %1799 = vmatprep.subr.mxu0 0.0
        %1800 = vmatpush1.xpose.msra.mxu0 0.0
        %1801 = vmatprep.subr.mxu0 0.0
        %1802 = vmatpush1.xpose.msra.mxu0 0.0
        %1803 = vmatprep.subr.mxu0 0.0
        %1804 = vmatpush1.xpose.msra.mxu0 0.0
        %1805 = vmatprep.subr.mxu0 0.0
        %1806 = vmatpush1.xpose.msra.mxu0 0.0
        %1807 = vmatprep.subr.mxu0 0.0
        %1808 = vmatpush1.xpose.msra.mxu0 0.0
        %1809 = vmatprep.subr.mxu0 0.0
        %1810 = vmatpush1.xpose.msra.mxu0 0.0
        %1811 = vmatprep.mubr.f32.mxu0 0.0
        %v1812 = vand.u32 %v1487, 4294901760
        %1813 = vmatmul.mubr.f32.gmra.mrb[0].mxu0 %v1812
        %v1814 = vpop.f32.mrb[0].mxu0
        %v1815 = vadd.f32 %v1634, %v1814
        %v1816 = vpop.f32.mrb[0].mxu0
        %1817 = vmatprep.mubr.f32.mxu0 0.0
        %v1818 = vand.u32 %v1490, 4294901760
        %1819 = vmatmul.mubr.f32.gmra.mrb[0].mxu0 %v1818
        %v1820 = vpop.f32.mrb[0].mxu0
        %v1821 = vadd.f32 %v1644, %v1820
        %v1822 = vpop.f32.mrb[0].mxu0
        %1823 = vmatprep.mubr.f32.mxu0 0.0
        %v1824 = vand.u32 %v1493, 4294901760
        %1825 = vmatmul.mubr.f32.gmra.mrb[0].mxu0 %v1824
        %v1826 = vpop.f32.mrb[0].mxu0
        %v1827 = vadd.f32 %v1654, %v1826
        %v1828 = vpop.f32.mrb[0].mxu0
        %1829 = vmatprep.mubr.f32.mxu0 0.0
        %v1830 = vand.u32 %v1496, 4294901760
        %1831 = vmatmul.mubr.f32.gmra.mrb[0].mxu0 %v1830
        %v1832 = vpop.f32.mrb[0].mxu0
        %v1833 = vadd.f32 %v1664, %v1832
        %v1834 = vpop.f32.mrb[0].mxu0
        %1835 = vdwg.mxu0
        %1836 = vmatprep.subr.mxu0 0.0
        %v1837 = vand.u32 %v1499, 4294901760
        %v1838 = vsub.f32 %v1499, %v1837
        %1839 = vmatpush1.xpose.msra.mxu0 %v1838
        %1840 = vmatprep.subr.mxu0 0.0
        %v1841 = vand.u32 %v1502, 4294901760
        %v1842 = vsub.f32 %v1502, %v1841
        %1843 = vmatpush1.xpose.msra.mxu0 %v1842
        %1844 = vmatprep.subr.mxu0 0.0
        %v1845 = vand.u32 %v1505, 4294901760
        %v1846 = vsub.f32 %v1505, %v1845
        %1847 = vmatpush1.xpose.msra.mxu0 %v1846
        %1848 = vmatprep.subr.mxu0 0.0
        %v1849 = vand.u32 %v1508, 4294901760
        %v1850 = vsub.f32 %v1508, %v1849
        %1851 = vmatpush1.xpose.msra.mxu0 %v1850
        %1852 = vmatprep.subr.mxu0 0.0
        %v1853 = vand.u32 %v1511, 4294901760
        %v1854 = vsub.f32 %v1511, %v1853
        %1855 = vmatpush1.xpose.msra.mxu0 %v1854
        %1856 = vmatprep.subr.mxu0 0.0
        %v1857 = vand.u32 %v1514, 4294901760
        %v1858 = vsub.f32 %v1514, %v1857
        %1859 = vmatpush1.xpose.msra.mxu0 %v1858
        %1860 = vmatprep.subr.mxu0 0.0
        %v1861 = vand.u32 %v1517, 4294901760
        %v1862 = vsub.f32 %v1517, %v1861
        %1863 = vmatpush1.xpose.msra.mxu0 %v1862
        %1864 = vmatprep.subr.mxu0 0.0
        %v1865 = vand.u32 %v1520, 4294901760
        %v1866 = vsub.f32 %v1520, %v1865
        %1867 = vmatpush1.xpose.msra.mxu0 %v1866
        %1868 = vmatprep.subr.mxu0 0.0
        %v1869 = vand.u32 %v1523, 4294901760
        %v1870 = vsub.f32 %v1523, %v1869
        %1871 = vmatpush1.xpose.msra.mxu0 %v1870
        %1872 = vmatprep.subr.mxu0 0.0
        %v1873 = vand.u32 %v1526, 4294901760
        %v1874 = vsub.f32 %v1526, %v1873
        %1875 = vmatpush1.xpose.msra.mxu0 %v1874
        %1876 = vmatprep.subr.mxu0 0.0
        %v1877 = vand.u32 %v1529, 4294901760
        %v1878 = vsub.f32 %v1529, %v1877
        %1879 = vmatpush1.xpose.msra.mxu0 %v1878
        %1880 = vmatprep.subr.mxu0 0.0
        %v1881 = vand.u32 %v1532, 4294901760
        %v1882 = vsub.f32 %v1532, %v1881
        %1883 = vmatpush1.xpose.msra.mxu0 %v1882
        %1884 = vmatprep.subr.mxu0 0.0
        %v1885 = vand.u32 %v1535, 4294901760
        %v1886 = vsub.f32 %v1535, %v1885
        %1887 = vmatpush1.xpose.msra.mxu0 %v1886
        %1888 = vmatprep.subr.mxu0 0.0
        %v1889 = vand.u32 %v1538, 4294901760
        %v1890 = vsub.f32 %v1538, %v1889
        %1891 = vmatpush1.xpose.msra.mxu0 %v1890
        %1892 = vmatprep.subr.mxu0 0.0
        %v1893 = vand.u32 %v1541, 4294901760
        %v1894 = vsub.f32 %v1541, %v1893
        %1895 = vmatpush1.xpose.msra.mxu0 %v1894
        %1896 = vmatprep.subr.mxu0 0.0
        %v1897 = vand.u32 %v1544, 4294901760
        %v1898 = vsub.f32 %v1544, %v1897
        %1899 = vmatpush1.xpose.msra.mxu0 %v1898
        %1900 = vmatprep.subr.mxu0 0.0
        %1901 = vmatpush1.xpose.msra.mxu0 0.0
        %1902 = vmatprep.subr.mxu0 0.0
        %1903 = vmatpush1.xpose.msra.mxu0 0.0
        %1904 = vmatprep.subr.mxu0 0.0
        %1905 = vmatpush1.xpose.msra.mxu0 0.0
        %1906 = vmatprep.subr.mxu0 0.0
        %1907 = vmatpush1.xpose.msra.mxu0 0.0
        %1908 = vmatprep.subr.mxu0 0.0
        %1909 = vmatpush1.xpose.msra.mxu0 0.0
        %1910 = vmatprep.subr.mxu0 0.0
        %1911 = vmatpush1.xpose.msra.mxu0 0.0
        %1912 = vmatprep.subr.mxu0 0.0
        %1913 = vmatpush1.xpose.msra.mxu0 0.0
        %1914 = vmatprep.subr.mxu0 0.0
        %1915 = vmatpush1.xpose.msra.mxu0 0.0
        %1916 = vmatprep.subr.mxu0 0.0
        %1917 = vmatpush1.xpose.msra.mxu0 0.0
        %1918 = vmatprep.subr.mxu0 0.0
        %1919 = vmatpush1.xpose.msra.mxu0 0.0
        %1920 = vmatprep.subr.mxu0 0.0
        %1921 = vmatpush1.xpose.msra.mxu0 0.0
        %1922 = vmatprep.subr.mxu0 0.0
        %1923 = vmatpush1.xpose.msra.mxu0 0.0
        %1924 = vmatprep.subr.mxu0 0.0
        %1925 = vmatpush1.xpose.msra.mxu0 0.0
        %1926 = vmatprep.subr.mxu0 0.0
        %1927 = vmatpush1.xpose.msra.mxu0 0.0
        %1928 = vmatprep.subr.mxu0 0.0
        %1929 = vmatpush1.xpose.msra.mxu0 0.0
        %1930 = vmatprep.subr.mxu0 0.0
        %1931 = vmatpush1.xpose.msra.mxu0 0.0
        %1932 = vmatprep.mubr.f32.mxu0 0.0
        %v1933 = vand.u32 %v1487, 4294901760
        %v1934 = vsub.f32 %v1487, %v1933
        %1935 = vmatmul.mubr.f32.gmra.mrb[0].mxu0 %v1934
        %v1936 = vpop.f32.mrb[0].mxu0
        %v1937 = vadd.f32 %v1815, %v1936
        %v1938 = vpop.f32.mrb[0].mxu0
        %1939 = vmatprep.mubr.f32.mxu0 0.0
        %v1940 = vand.u32 %v1490, 4294901760
        %v1941 = vsub.f32 %v1490, %v1940
        %1942 = vmatmul.mubr.f32.gmra.mrb[0].mxu0 %v1941
        %v1943 = vpop.f32.mrb[0].mxu0
        %v1944 = vadd.f32 %v1821, %v1943
        %v1945 = vpop.f32.mrb[0].mxu0
        %1946 = vmatprep.mubr.f32.mxu0 0.0
        %v1947 = vand.u32 %v1493, 4294901760
        %v1948 = vsub.f32 %v1493, %v1947
        %1949 = vmatmul.mubr.f32.gmra.mrb[0].mxu0 %v1948
        %v1950 = vpop.f32.mrb[0].mxu0
        %v1951 = vadd.f32 %v1827, %v1950
        %v1952 = vpop.f32.mrb[0].mxu0
        %1953 = vmatprep.mubr.f32.mxu0 0.0
        %v1954 = vand.u32 %v1496, 4294901760
        %v1955 = vsub.f32 %v1496, %v1954
        %1956 = vmatmul.mubr.f32.gmra.mrb[0].mxu0 %v1955
        %v1957 = vpop.f32.mrb[0].mxu0
        %v1958 = vadd.f32 %v1833, %v1957
        %v1959 = vpop.f32.mrb[0].mxu0
        %1960 = vdwg.mxu0
        %1961 = vmatprep.subr.mxu0 0.0
        %v1962 = vand.u32 %v1499, 4294901760
        %1963 = vmatpush1.xpose.msra.mxu0 %v1962
        %1964 = vmatprep.subr.mxu0 0.0
        %v1965 = vand.u32 %v1502, 4294901760
        %1966 = vmatpush1.xpose.msra.mxu0 %v1965
        %1967 = vmatprep.subr.mxu0 0.0
        %v1968 = vand.u32 %v1505, 4294901760
        %1969 = vmatpush1.xpose.msra.mxu0 %v1968
        %1970 = vmatprep.subr.mxu0 0.0
        %v1971 = vand.u32 %v1508, 4294901760
        %1972 = vmatpush1.xpose.msra.mxu0 %v1971
        %1973 = vmatprep.subr.mxu0 0.0
        %v1974 = vand.u32 %v1511, 4294901760
        %1975 = vmatpush1.xpose.msra.mxu0 %v1974
        %1976 = vmatprep.subr.mxu0 0.0
        %v1977 = vand.u32 %v1514, 4294901760
        %1978 = vmatpush1.xpose.msra.mxu0 %v1977
        %1979 = vmatprep.subr.mxu0 0.0
        %v1980 = vand.u32 %v1517, 4294901760
        %1981 = vmatpush1.xpose.msra.mxu0 %v1980
        %1982 = vmatprep.subr.mxu0 0.0
        %v1983 = vand.u32 %v1520, 4294901760
        %1984 = vmatpush1.xpose.msra.mxu0 %v1983
        %1985 = vmatprep.subr.mxu0 0.0
        %v1986 = vand.u32 %v1523, 4294901760
        %1987 = vmatpush1.xpose.msra.mxu0 %v1986
        %1988 = vmatprep.subr.mxu0 0.0
        %v1989 = vand.u32 %v1526, 4294901760
        %1990 = vmatpush1.xpose.msra.mxu0 %v1989
        %1991 = vmatprep.subr.mxu0 0.0
        %v1992 = vand.u32 %v1529, 4294901760
        %1993 = vmatpush1.xpose.msra.mxu0 %v1992
        %1994 = vmatprep.subr.mxu0 0.0
        %v1995 = vand.u32 %v1532, 4294901760
        %1996 = vmatpush1.xpose.msra.mxu0 %v1995
        %1997 = vmatprep.subr.mxu0 0.0
        %v1998 = vand.u32 %v1535, 4294901760
        %1999 = vmatpush1.xpose.msra.mxu0 %v1998
        %2000 = vmatprep.subr.mxu0 0.0
        %v2001 = vand.u32 %v1538, 4294901760
        %2002 = vmatpush1.xpose.msra.mxu0 %v2001
        %2003 = vmatprep.subr.mxu0 0.0
        %v2004 = vand.u32 %v1541, 4294901760
        %2005 = vmatpush1.xpose.msra.mxu0 %v2004
        %2006 = vmatprep.subr.mxu0 0.0
        %v2007 = vand.u32 %v1544, 4294901760
        %2008 = vmatpush1.xpose.msra.mxu0 %v2007
        %2009 = vmatprep.subr.mxu0 0.0
        %2010 = vmatpush1.xpose.msra.mxu0 0.0
        %2011 = vmatprep.subr.mxu0 0.0
        %2012 = vmatpush1.xpose.msra.mxu0 0.0
        %2013 = vmatprep.subr.mxu0 0.0
        %2014 = vmatpush1.xpose.msra.mxu0 0.0
        %2015 = vmatprep.subr.mxu0 0.0
        %2016 = vmatpush1.xpose.msra.mxu0 0.0
        %2017 = vmatprep.subr.mxu0 0.0
        %2018 = vmatpush1.xpose.msra.mxu0 0.0
        %2019 = vmatprep.subr.mxu0 0.0
        %2020 = vmatpush1.xpose.msra.mxu0 0.0
        %2021 = vmatprep.subr.mxu0 0.0
        %2022 = vmatpush1.xpose.msra.mxu0 0.0
        %2023 = vmatprep.subr.mxu0 0.0
        %2024 = vmatpush1.xpose.msra.mxu0 0.0
        %2025 = vmatprep.subr.mxu0 0.0
        %2026 = vmatpush1.xpose.msra.mxu0 0.0
        %2027 = vmatprep.subr.mxu0 0.0
        %2028 = vmatpush1.xpose.msra.mxu0 0.0
        %2029 = vmatprep.subr.mxu0 0.0
        %2030 = vmatpush1.xpose.msra.mxu0 0.0
        %2031 = vmatprep.subr.mxu0 0.0
        %2032 = vmatpush1.xpose.msra.mxu0 0.0
        %2033 = vmatprep.subr.mxu0 0.0
        %2034 = vmatpush1.xpose.msra.mxu0 0.0
        %2035 = vmatprep.subr.mxu0 0.0
        %2036 = vmatpush1.xpose.msra.mxu0 0.0
        %2037 = vmatprep.subr.mxu0 0.0
        %2038 = vmatpush1.xpose.msra.mxu0 0.0
        %2039 = vmatprep.subr.mxu0 0.0
        %2040 = vmatpush1.xpose.msra.mxu0 0.0
        %2041 = vmatprep.mubr.f32.mxu0 0.0
        %v2042 = vand.u32 %v1487, 4294901760
        %v2043 = vsub.f32 %v1487, %v2042
        %v2044 = vand.u32 %v2043, 4294901760
        %2045 = vmatmul.mubr.f32.gmra.mrb[0].mxu0 %v2044
        %v2046 = vpop.f32.mrb[0].mxu0
        %v2047 = vadd.f32 %v1937, %v2046
        %v2048 = vpop.f32.mrb[0].mxu0
        %2049 = vmatprep.mubr.f32.mxu0 0.0
        %v2050 = vand.u32 %v1490, 4294901760
        %v2051 = vsub.f32 %v1490, %v2050
        %v2052 = vand.u32 %v2051, 4294901760
        %2053 = vmatmul.mubr.f32.gmra.mrb[0].mxu0 %v2052
        %v2054 = vpop.f32.mrb[0].mxu0
        %v2055 = vadd.f32 %v1944, %v2054
        %v2056 = vpop.f32.mrb[0].mxu0
        %2057 = vmatprep.mubr.f32.mxu0 0.0
        %v2058 = vand.u32 %v1493, 4294901760
        %v2059 = vsub.f32 %v1493, %v2058
        %v2060 = vand.u32 %v2059, 4294901760
        %2061 = vmatmul.mubr.f32.gmra.mrb[0].mxu0 %v2060
        %v2062 = vpop.f32.mrb[0].mxu0
        %v2063 = vadd.f32 %v1951, %v2062
        %v2064 = vpop.f32.mrb[0].mxu0
        %2065 = vmatprep.mubr.f32.mxu0 0.0
        %v2066 = vand.u32 %v1496, 4294901760
        %v2067 = vsub.f32 %v1496, %v2066
        %v2068 = vand.u32 %v2067, 4294901760
        %2069 = vmatmul.mubr.f32.gmra.mrb[0].mxu0 %v2068
        %v2070 = vpop.f32.mrb[0].mxu0
        %v2071 = vadd.f32 %v1958, %v2070
        %v2072 = vpop.f32.mrb[0].mxu0
        %2073 = vdwg.mxu0
        %2074 = vmatprep.subr.mxu0 0.0
        %v2075 = vand.u32 %v1499, 4294901760
        %v2076 = vsub.f32 %v1499, %v2075
        %v2077 = vand.u32 %v2076, 4294901760
        %2078 = vmatpush1.xpose.msra.mxu0 %v2077
        %2079 = vmatprep.subr.mxu0 0.0
        %v2080 = vand.u32 %v1502, 4294901760
        %v2081 = vsub.f32 %v1502, %v2080
        %v2082 = vand.u32 %v2081, 4294901760
        %2083 = vmatpush1.xpose.msra.mxu0 %v2082
        %2084 = vmatprep.subr.mxu0 0.0
        %v2085 = vand.u32 %v1505, 4294901760
        %v2086 = vsub.f32 %v1505, %v2085
        %v2087 = vand.u32 %v2086, 4294901760
        %2088 = vmatpush1.xpose.msra.mxu0 %v2087
        %2089 = vmatprep.subr.mxu0 0.0
        %v2090 = vand.u32 %v1508, 4294901760
        %v2091 = vsub.f32 %v1508, %v2090
        %v2092 = vand.u32 %v2091, 4294901760
        %2093 = vmatpush1.xpose.msra.mxu0 %v2092
        %2094 = vmatprep.subr.mxu0 0.0
        %v2095 = vand.u32 %v1511, 4294901760
        %v2096 = vsub.f32 %v1511, %v2095
        %v2097 = vand.u32 %v2096, 4294901760
        %2098 = vmatpush1.xpose.msra.mxu0 %v2097
        %2099 = vmatprep.subr.mxu0 0.0
        %v2100 = vand.u32 %v1514, 4294901760
        %v2101 = vsub.f32 %v1514, %v2100
        %v2102 = vand.u32 %v2101, 4294901760
        %2103 = vmatpush1.xpose.msra.mxu0 %v2102
        %2104 = vmatprep.subr.mxu0 0.0
        %v2105 = vand.u32 %v1517, 4294901760
        %v2106 = vsub.f32 %v1517, %v2105
        %v2107 = vand.u32 %v2106, 4294901760
        %2108 = vmatpush1.xpose.msra.mxu0 %v2107
        %2109 = vmatprep.subr.mxu0 0.0
        %v2110 = vand.u32 %v1520, 4294901760
        %v2111 = vsub.f32 %v1520, %v2110
        %v2112 = vand.u32 %v2111, 4294901760
        %2113 = vmatpush1.xpose.msra.mxu0 %v2112
        %2114 = vmatprep.subr.mxu0 0.0
        %v2115 = vand.u32 %v1523, 4294901760
        %v2116 = vsub.f32 %v1523, %v2115
        %v2117 = vand.u32 %v2116, 4294901760
        %2118 = vmatpush1.xpose.msra.mxu0 %v2117
        %2119 = vmatprep.subr.mxu0 0.0
        %v2120 = vand.u32 %v1526, 4294901760
        %v2121 = vsub.f32 %v1526, %v2120
        %v2122 = vand.u32 %v2121, 4294901760
        %2123 = vmatpush1.xpose.msra.mxu0 %v2122
        %2124 = vmatprep.subr.mxu0 0.0
        %v2125 = vand.u32 %v1529, 4294901760
        %v2126 = vsub.f32 %v1529, %v2125
        %v2127 = vand.u32 %v2126, 4294901760
        %2128 = vmatpush1.xpose.msra.mxu0 %v2127
        %2129 = vmatprep.subr.mxu0 0.0
        %v2130 = vand.u32 %v1532, 4294901760
        %v2131 = vsub.f32 %v1532, %v2130
        %v2132 = vand.u32 %v2131, 4294901760
        %2133 = vmatpush1.xpose.msra.mxu0 %v2132
        %2134 = vmatprep.subr.mxu0 0.0
        %v2135 = vand.u32 %v1535, 4294901760
        %v2136 = vsub.f32 %v1535, %v2135
        %v2137 = vand.u32 %v2136, 4294901760
        %2138 = vmatpush1.xpose.msra.mxu0 %v2137
        %2139 = vmatprep.subr.mxu0 0.0
        %v2140 = vand.u32 %v1538, 4294901760
        %v2141 = vsub.f32 %v1538, %v2140
        %v2142 = vand.u32 %v2141, 4294901760
        %2143 = vmatpush1.xpose.msra.mxu0 %v2142
        %2144 = vmatprep.subr.mxu0 0.0
        %v2145 = vand.u32 %v1541, 4294901760
        %v2146 = vsub.f32 %v1541, %v2145
        %v2147 = vand.u32 %v2146, 4294901760
        %2148 = vmatpush1.xpose.msra.mxu0 %v2147
        %2149 = vmatprep.subr.mxu0 0.0
        %v2150 = vand.u32 %v1544, 4294901760
        %v2151 = vsub.f32 %v1544, %v2150
        %v2152 = vand.u32 %v2151, 4294901760
        %2153 = vmatpush1.xpose.msra.mxu0 %v2152
        %2154 = vmatprep.subr.mxu0 0.0
        %2155 = vmatpush1.xpose.msra.mxu0 0.0
        %2156 = vmatprep.subr.mxu0 0.0
        %2157 = vmatpush1.xpose.msra.mxu0 0.0
        %2158 = vmatprep.subr.mxu0 0.0
        %2159 = vmatpush1.xpose.msra.mxu0 0.0
        %2160 = vmatprep.subr.mxu0 0.0
        %2161 = vmatpush1.xpose.msra.mxu0 0.0
        %2162 = vmatprep.subr.mxu0 0.0
        %2163 = vmatpush1.xpose.msra.mxu0 0.0
        %2164 = vmatprep.subr.mxu0 0.0
        %2165 = vmatpush1.xpose.msra.mxu0 0.0
        %2166 = vmatprep.subr.mxu0 0.0
        %2167 = vmatpush1.xpose.msra.mxu0 0.0
        %2168 = vmatprep.subr.mxu0 0.0
        %2169 = vmatpush1.xpose.msra.mxu0 0.0
        %2170 = vmatprep.subr.mxu0 0.0
        %2171 = vmatpush1.xpose.msra.mxu0 0.0
        %2172 = vmatprep.subr.mxu0 0.0
        %2173 = vmatpush1.xpose.msra.mxu0 0.0
        %2174 = vmatprep.subr.mxu0 0.0
        %2175 = vmatpush1.xpose.msra.mxu0 0.0
        %2176 = vmatprep.subr.mxu0 0.0
        %2177 = vmatpush1.xpose.msra.mxu0 0.0
        %2178 = vmatprep.subr.mxu0 0.0
        %2179 = vmatpush1.xpose.msra.mxu0 0.0
        %2180 = vmatprep.subr.mxu0 0.0
        %2181 = vmatpush1.xpose.msra.mxu0 0.0
        %2182 = vmatprep.subr.mxu0 0.0
        %2183 = vmatpush1.xpose.msra.mxu0 0.0
        %2184 = vmatprep.subr.mxu0 0.0
        %2185 = vmatpush1.xpose.msra.mxu0 0.0
        %2186 = vmatprep.mubr.f32.mxu0 0.0
        %v2187 = vand.u32 %v1487, 4294901760
        %2188 = vmatmul.mubr.f32.gmra.mrb[0].mxu0 %v2187
        %v2189 = vpop.f32.mrb[0].mxu0
        %v2190 = vadd.f32 %v2047, %v2189
        %v2191 = vpop.f32.mrb[0].mxu0
        %2192 = vmatprep.mubr.f32.mxu0 0.0
        %v2193 = vand.u32 %v1490, 4294901760
        %2194 = vmatmul.mubr.f32.gmra.mrb[0].mxu0 %v2193
        %v2195 = vpop.f32.mrb[0].mxu0
        %v2196 = vadd.f32 %v2055, %v2195
        %v2197 = vpop.f32.mrb[0].mxu0
        %2198 = vmatprep.mubr.f32.mxu0 0.0
        %v2199 = vand.u32 %v1493, 4294901760
        %2200 = vmatmul.mubr.f32.gmra.mrb[0].mxu0 %v2199
        %v2201 = vpop.f32.mrb[0].mxu0
        %v2202 = vadd.f32 %v2063, %v2201
        %v2203 = vpop.f32.mrb[0].mxu0
        %2204 = vmatprep.mubr.f32.mxu0 0.0
        %v2205 = vand.u32 %v1496, 4294901760
        %2206 = vmatmul.mubr.f32.gmra.mrb[0].mxu0 %v2205
        %v2207 = vpop.f32.mrb[0].mxu0
        %v2208 = vadd.f32 %v2071, %v2207
        %v2209 = vpop.f32.mrb[0].mxu0
        %2210 = vdwg.mxu0
        %2211 = vmatprep.subr.mxu0 0.0
        %v2212 = vand.u32 %v1499, 4294901760
        %2213 = vmatpush1.xpose.msra.mxu0 %v2212
        %2214 = vmatprep.subr.mxu0 0.0
        %v2215 = vand.u32 %v1502, 4294901760
        %2216 = vmatpush1.xpose.msra.mxu0 %v2215
        %2217 = vmatprep.subr.mxu0 0.0
        %v2218 = vand.u32 %v1505, 4294901760
        %2219 = vmatpush1.xpose.msra.mxu0 %v2218
        %2220 = vmatprep.subr.mxu0 0.0
        %v2221 = vand.u32 %v1508, 4294901760
        %2222 = vmatpush1.xpose.msra.mxu0 %v2221
        %2223 = vmatprep.subr.mxu0 0.0
        %v2224 = vand.u32 %v1511, 4294901760
        %2225 = vmatpush1.xpose.msra.mxu0 %v2224
        %2226 = vmatprep.subr.mxu0 0.0
        %v2227 = vand.u32 %v1514, 4294901760
        %2228 = vmatpush1.xpose.msra.mxu0 %v2227
        %2229 = vmatprep.subr.mxu0 0.0
        %v2230 = vand.u32 %v1517, 4294901760
        %2231 = vmatpush1.xpose.msra.mxu0 %v2230
        %2232 = vmatprep.subr.mxu0 0.0
        %v2233 = vand.u32 %v1520, 4294901760
        %2234 = vmatpush1.xpose.msra.mxu0 %v2233
        %2235 = vmatprep.subr.mxu0 0.0
        %v2236 = vand.u32 %v1523, 4294901760
        %2237 = vmatpush1.xpose.msra.mxu0 %v2236
        %2238 = vmatprep.subr.mxu0 0.0
        %v2239 = vand.u32 %v1526, 4294901760
        %2240 = vmatpush1.xpose.msra.mxu0 %v2239
        %2241 = vmatprep.subr.mxu0 0.0
        %v2242 = vand.u32 %v1529, 4294901760
        %2243 = vmatpush1.xpose.msra.mxu0 %v2242
        %2244 = vmatprep.subr.mxu0 0.0
        %v2245 = vand.u32 %v1532, 4294901760
        %2246 = vmatpush1.xpose.msra.mxu0 %v2245
        %2247 = vmatprep.subr.mxu0 0.0
        %v2248 = vand.u32 %v1535, 4294901760
        %2249 = vmatpush1.xpose.msra.mxu0 %v2248
        %2250 = vmatprep.subr.mxu0 0.0
        %v2251 = vand.u32 %v1538, 4294901760
        %2252 = vmatpush1.xpose.msra.mxu0 %v2251
        %2253 = vmatprep.subr.mxu0 0.0
        %v2254 = vand.u32 %v1541, 4294901760
        %2255 = vmatpush1.xpose.msra.mxu0 %v2254
        %2256 = vmatprep.subr.mxu0 0.0
        %v2257 = vand.u32 %v1544, 4294901760
        %2258 = vmatpush1.xpose.msra.mxu0 %v2257
        %2259 = vmatprep.subr.mxu0 0.0
        %2260 = vmatpush1.xpose.msra.mxu0 0.0
        %2261 = vmatprep.subr.mxu0 0.0
        %2262 = vmatpush1.xpose.msra.mxu0 0.0
        %2263 = vmatprep.subr.mxu0 0.0
        %2264 = vmatpush1.xpose.msra.mxu0 0.0
        %2265 = vmatprep.subr.mxu0 0.0
        %2266 = vmatpush1.xpose.msra.mxu0 0.0
        %2267 = vmatprep.subr.mxu0 0.0
        %2268 = vmatpush1.xpose.msra.mxu0 0.0
        %2269 = vmatprep.subr.mxu0 0.0
        %2270 = vmatpush1.xpose.msra.mxu0 0.0
        %2271 = vmatprep.subr.mxu0 0.0
        %2272 = vmatpush1.xpose.msra.mxu0 0.0
        %2273 = vmatprep.subr.mxu0 0.0
        %2274 = vmatpush1.xpose.msra.mxu0 0.0
        %2275 = vmatprep.subr.mxu0 0.0
        %2276 = vmatpush1.xpose.msra.mxu0 0.0
        %2277 = vmatprep.subr.mxu0 0.0
        %2278 = vmatpush1.xpose.msra.mxu0 0.0
        %2279 = vmatprep.subr.mxu0 0.0
        %2280 = vmatpush1.xpose.msra.mxu0 0.0
        %2281 = vmatprep.subr.mxu0 0.0
        %2282 = vmatpush1.xpose.msra.mxu0 0.0
        %2283 = vmatprep.subr.mxu0 0.0
        %2284 = vmatpush1.xpose.msra.mxu0 0.0
        %2285 = vmatprep.subr.mxu0 0.0
        %2286 = vmatpush1.xpose.msra.mxu0 0.0
        %2287 = vmatprep.subr.mxu0 0.0
        %2288 = vmatpush1.xpose.msra.mxu0 0.0
        %2289 = vmatprep.subr.mxu0 0.0
        %2290 = vmatpush1.xpose.msra.mxu0 0.0
        %2291 = vmatprep.mubr.f32.mxu0 0.0
        %v2292 = vand.u32 %v1487, 4294901760
        %2293 = vmatmul.mubr.f32.gmra.mrb[0].mxu0 %v2292
        %v2294 = vpop.f32.mrb[0].mxu0
        %v2295 = vadd.f32 %v2190, %v2294
        %v2296 = vpop.f32.mrb[0].mxu0
        %2297 = vmatprep.mubr.f32.mxu0 0.0
        %v2298 = vand.u32 %v1490, 4294901760
        %2299 = vmatmul.mubr.f32.gmra.mrb[0].mxu0 %v2298
        %v2300 = vpop.f32.mrb[0].mxu0
        %v2301 = vadd.f32 %v2196, %v2300
        %v2302 = vpop.f32.mrb[0].mxu0
        %2303 = vmatprep.mubr.f32.mxu0 0.0
        %v2304 = vand.u32 %v1493, 4294901760
        %2305 = vmatmul.mubr.f32.gmra.mrb[0].mxu0 %v2304
        %v2306 = vpop.f32.mrb[0].mxu0
        %v2307 = vadd.f32 %v2202, %v2306
        %v2308 = vpop.f32.mrb[0].mxu0
        %2309 = vmatprep.mubr.f32.mxu0 0.0
        %v2310 = vand.u32 %v1496, 4294901760
        %2311 = vmatmul.mubr.f32.gmra.mrb[0].mxu0 %v2310
        %v2312 = vpop.f32.mrb[0].mxu0
        %v2313 = vadd.f32 %v2208, %v2312
        %v2314 = vpop.f32.mrb[0].mxu0
        %2315 = vdwg.mxu0
        %v2316 = vadd.f32 %v1440, %v2295
        %v2317 = vadd.f32 %v1446, %v2301
        %v2318 = vadd.f32 %v1452, %v2307
        %v2319 = vadd.f32 %v1458, %v2313
        %2321 = vset.pattern.permute.xlu0 0
        %2322 = vperm.xlu0 %2321, %v456
        %v2323 = vpop.permute.xlu0 %2322
        %2326 = vset.pattern.permute.xlu0 0
        %2327 = vperm.xlu0 %2326, %v457
        %v2328 = vpop.permute.xlu0 %2327
        %2331 = vset.pattern.permute.xlu0 0
        %2332 = vperm.xlu0 %2331, %v458
        %v2333 = vpop.permute.xlu0 %2332
        %2336 = vset.pattern.permute.xlu0 0
        %2337 = vperm.xlu0 %2336, %v459
        %v2338 = vpop.permute.xlu0 %2337
        %v2340 = vadd.f32 %v2316, %v2323
        %v2341 = vadd.f32 %v2317, %v2328
        %v2342 = vadd.f32 %v2318, %v2333
        %v2343 = vadd.f32 %v2319, %v2338
        %v2344 = vmax.f32 %v2340, 0.0
        %v2345 = vmax.f32 %v2341, 0.0
        %v2346 = vmax.f32 %v2342, 0.0
        %v2347 = vmax.f32 %v2343, 0.0
        %2349 = vset.pattern.permute.xlu0 0
        %2350 = vperm.xlu0 %2349, %v468
        %v2351 = vpop.permute.xlu0 %2350
        %vm2353 = vcmask 261120
        %v2355 = vsel %vm2353, %v455, 0
        %2357 = vmatprep.subr.mxu0 0.0
        %v2358 = vand.u32 %v2344, 4294901760
        %2359 = vmatpush1.msra.mxu0 %v2358
        %2360 = vmatprep.subr.mxu0 0.0
        %v2361 = vand.u32 %v2345, 4294901760
        %2362 = vmatpush1.msra.mxu0 %v2361
        %2363 = vmatprep.subr.mxu0 0.0
        %v2364 = vand.u32 %v2346, 4294901760
        %2365 = vmatpush1.msra.mxu0 %v2364
        %2366 = vmatprep.subr.mxu0 0.0
        %v2367 = vand.u32 %v2347, 4294901760
        %2368 = vmatpush1.msra.mxu0 %v2367
        %2369 = vmatprep.subr.mxu0 0.0
        %2370 = vmatpush1.msra.mxu0 0.0
        %2371 = vmatprep.subr.mxu0 0.0
        %2372 = vmatpush1.msra.mxu0 0.0
        %2373 = vmatprep.subr.mxu0 0.0
        %2374 = vmatpush1.msra.mxu0 0.0
        %2375 = vmatprep.subr.mxu0 0.0
        %2376 = vmatpush1.msra.mxu0 0.0
        %2377 = vmatprep.subr.mxu0 0.0
        %2378 = vmatpush1.msra.mxu0 0.0
        %2379 = vmatprep.subr.mxu0 0.0
        %2380 = vmatpush1.msra.mxu0 0.0
        %2381 = vmatprep.subr.mxu0 0.0
        %2382 = vmatpush1.msra.mxu0 0.0
        %2383 = vmatprep.subr.mxu0 0.0
        %2384 = vmatpush1.msra.mxu0 0.0
        %2385 = vmatprep.subr.mxu0 0.0
        %2386 = vmatpush1.msra.mxu0 0.0
        %2387 = vmatprep.subr.mxu0 0.0
        %2388 = vmatpush1.msra.mxu0 0.0
        %2389 = vmatprep.subr.mxu0 0.0
        %2390 = vmatpush1.msra.mxu0 0.0
        %2391 = vmatprep.subr.mxu0 0.0
        %2392 = vmatpush1.msra.mxu0 0.0
        %2393 = vmatprep.subr.mxu0 0.0
        %2394 = vmatpush1.msra.mxu0 0.0
        %2395 = vmatprep.subr.mxu0 0.0
        %2396 = vmatpush1.msra.mxu0 0.0
        %2397 = vmatprep.subr.mxu0 0.0
        %2398 = vmatpush1.msra.mxu0 0.0
        %2399 = vmatprep.subr.mxu0 0.0
        %2400 = vmatpush1.msra.mxu0 0.0
        %2401 = vmatprep.subr.mxu0 0.0
        %2402 = vmatpush1.msra.mxu0 0.0
        %2403 = vmatprep.subr.mxu0 0.0
        %2404 = vmatpush1.msra.mxu0 0.0
        %2405 = vmatprep.subr.mxu0 0.0
        %2406 = vmatpush1.msra.mxu0 0.0
        %2407 = vmatprep.subr.mxu0 0.0
        %2408 = vmatpush1.msra.mxu0 0.0
        %2409 = vmatprep.subr.mxu0 0.0
        %2410 = vmatpush1.msra.mxu0 0.0
        %2411 = vmatprep.subr.mxu0 0.0
        %2412 = vmatpush1.msra.mxu0 0.0
        %2413 = vmatprep.subr.mxu0 0.0
        %2414 = vmatpush1.msra.mxu0 0.0
        %2415 = vmatprep.subr.mxu0 0.0
        %2416 = vmatpush1.msra.mxu0 0.0
        %2417 = vmatprep.subr.mxu0 0.0
        %2418 = vmatpush1.msra.mxu0 0.0
        %2419 = vmatprep.subr.mxu0 0.0
        %2420 = vmatpush1.msra.mxu0 0.0
        %2421 = vmatprep.subr.mxu0 0.0
        %2422 = vmatpush1.msra.mxu0 0.0
        %2423 = vmatprep.subr.mxu0 0.0
        %2424 = vmatpush1.msra.mxu0 0.0
        %2425 = vmatprep.mubr.f32.mxu0 0.0
        %v2426 = vand.u32 %v2355, 4294901760
        %v2427 = vsub.f32 %v2355, %v2426
        %v2428 = vand.u32 %v2427, 4294901760
        %v2429 = vsub.f32 %v2427, %v2428
        %v2430 = vand.u32 %v2429, 4294901760
        %2431 = vmatmul.mubr.f32.gmra.mrb[0].mxu0 %v2430
        %v2432 = vpop.f32.mrb[0].mxu0
        %v2433 = vadd.f32 %v2351, %v2432
        %v2434 = vpop.f32.mrb[0].mxu0
        %2435 = vdwg.mxu0
        %2436 = vmatprep.subr.mxu0 0.0
        %v2437 = vand.u32 %v2344, 4294901760
        %v2438 = vsub.f32 %v2344, %v2437
        %v2439 = vand.u32 %v2438, 4294901760
        %v2440 = vsub.f32 %v2438, %v2439
        %v2441 = vand.u32 %v2440, 4294901760
        %2442 = vmatpush1.msra.mxu0 %v2441
        %2443 = vmatprep.subr.mxu0 0.0
        %v2444 = vand.u32 %v2345, 4294901760
        %v2445 = vsub.f32 %v2345, %v2444
        %v2446 = vand.u32 %v2445, 4294901760
        %v2447 = vsub.f32 %v2445, %v2446
        %v2448 = vand.u32 %v2447, 4294901760
        %2449 = vmatpush1.msra.mxu0 %v2448
        %2450 = vmatprep.subr.mxu0 0.0
        %v2451 = vand.u32 %v2346, 4294901760
        %v2452 = vsub.f32 %v2346, %v2451
        %v2453 = vand.u32 %v2452, 4294901760
        %v2454 = vsub.f32 %v2452, %v2453
        %v2455 = vand.u32 %v2454, 4294901760
        %2456 = vmatpush1.msra.mxu0 %v2455
        %2457 = vmatprep.subr.mxu0 0.0
        %v2458 = vand.u32 %v2347, 4294901760
        %v2459 = vsub.f32 %v2347, %v2458
        %v2460 = vand.u32 %v2459, 4294901760
        %v2461 = vsub.f32 %v2459, %v2460
        %v2462 = vand.u32 %v2461, 4294901760
        %2463 = vmatpush1.msra.mxu0 %v2462
        %2464 = vmatprep.subr.mxu0 0.0
        %2465 = vmatpush1.msra.mxu0 0.0
        %2466 = vmatprep.subr.mxu0 0.0
        %2467 = vmatpush1.msra.mxu0 0.0
        %2468 = vmatprep.subr.mxu0 0.0
        %2469 = vmatpush1.msra.mxu0 0.0
        %2470 = vmatprep.subr.mxu0 0.0
        %2471 = vmatpush1.msra.mxu0 0.0
        %2472 = vmatprep.subr.mxu0 0.0
        %2473 = vmatpush1.msra.mxu0 0.0
        %2474 = vmatprep.subr.mxu0 0.0
        %2475 = vmatpush1.msra.mxu0 0.0
        %2476 = vmatprep.subr.mxu0 0.0
        %2477 = vmatpush1.msra.mxu0 0.0
        %2478 = vmatprep.subr.mxu0 0.0
        %2479 = vmatpush1.msra.mxu0 0.0
        %2480 = vmatprep.subr.mxu0 0.0
        %2481 = vmatpush1.msra.mxu0 0.0
        %2482 = vmatprep.subr.mxu0 0.0
        %2483 = vmatpush1.msra.mxu0 0.0
        %2484 = vmatprep.subr.mxu0 0.0
        %2485 = vmatpush1.msra.mxu0 0.0
        %2486 = vmatprep.subr.mxu0 0.0
        %2487 = vmatpush1.msra.mxu0 0.0
        %2488 = vmatprep.subr.mxu0 0.0
        %2489 = vmatpush1.msra.mxu0 0.0
        %2490 = vmatprep.subr.mxu0 0.0
        %2491 = vmatpush1.msra.mxu0 0.0
        %2492 = vmatprep.subr.mxu0 0.0
        %2493 = vmatpush1.msra.mxu0 0.0
        %2494 = vmatprep.subr.mxu0 0.0
        %2495 = vmatpush1.msra.mxu0 0.0
        %2496 = vmatprep.subr.mxu0 0.0
        %2497 = vmatpush1.msra.mxu0 0.0
        %2498 = vmatprep.subr.mxu0 0.0
        %2499 = vmatpush1.msra.mxu0 0.0
        %2500 = vmatprep.subr.mxu0 0.0
        %2501 = vmatpush1.msra.mxu0 0.0
        %2502 = vmatprep.subr.mxu0 0.0
        %2503 = vmatpush1.msra.mxu0 0.0
        %2504 = vmatprep.subr.mxu0 0.0
        %2505 = vmatpush1.msra.mxu0 0.0
        %2506 = vmatprep.subr.mxu0 0.0
        %2507 = vmatpush1.msra.mxu0 0.0
        %2508 = vmatprep.subr.mxu0 0.0
        %2509 = vmatpush1.msra.mxu0 0.0
        %2510 = vmatprep.subr.mxu0 0.0
        %2511 = vmatpush1.msra.mxu0 0.0
        %2512 = vmatprep.subr.mxu0 0.0
        %2513 = vmatpush1.msra.mxu0 0.0
        %2514 = vmatprep.subr.mxu0 0.0
        %2515 = vmatpush1.msra.mxu0 0.0
        %2516 = vmatprep.subr.mxu0 0.0
        %2517 = vmatpush1.msra.mxu0 0.0
        %2518 = vmatprep.subr.mxu0 0.0
        %2519 = vmatpush1.msra.mxu0 0.0
        %2520 = vmatprep.mubr.f32.mxu0 0.0
        %v2521 = vand.u32 %v2355, 4294901760
        %2522 = vmatmul.mubr.f32.gmra.mrb[0].mxu0 %v2521
        %v2523 = vpop.f32.mrb[0].mxu0
        %v2524 = vadd.f32 %v2433, %v2523
        %v2525 = vpop.f32.mrb[0].mxu0
        %2526 = vdwg.mxu0
        %2527 = vmatprep.subr.mxu0 0.0
        %v2528 = vand.u32 %v2344, 4294901760
        %v2529 = vsub.f32 %v2344, %v2528
        %2530 = vmatpush1.msra.mxu0 %v2529
        %2531 = vmatprep.subr.mxu0 0.0
        %v2532 = vand.u32 %v2345, 4294901760
        %v2533 = vsub.f32 %v2345, %v2532
        %2534 = vmatpush1.msra.mxu0 %v2533
        %2535 = vmatprep.subr.mxu0 0.0
        %v2536 = vand.u32 %v2346, 4294901760
        %v2537 = vsub.f32 %v2346, %v2536
        %2538 = vmatpush1.msra.mxu0 %v2537
        %2539 = vmatprep.subr.mxu0 0.0
        %v2540 = vand.u32 %v2347, 4294901760
        %v2541 = vsub.f32 %v2347, %v2540
        %2542 = vmatpush1.msra.mxu0 %v2541
        %2543 = vmatprep.subr.mxu0 0.0
        %2544 = vmatpush1.msra.mxu0 0.0
        %2545 = vmatprep.subr.mxu0 0.0
        %2546 = vmatpush1.msra.mxu0 0.0
        %2547 = vmatprep.subr.mxu0 0.0
        %2548 = vmatpush1.msra.mxu0 0.0
        %2549 = vmatprep.subr.mxu0 0.0
        %2550 = vmatpush1.msra.mxu0 0.0
        %2551 = vmatprep.subr.mxu0 0.0
        %2552 = vmatpush1.msra.mxu0 0.0
        %2553 = vmatprep.subr.mxu0 0.0
        %2554 = vmatpush1.msra.mxu0 0.0
        %2555 = vmatprep.subr.mxu0 0.0
        %2556 = vmatpush1.msra.mxu0 0.0
        %2557 = vmatprep.subr.mxu0 0.0
        %2558 = vmatpush1.msra.mxu0 0.0
        %2559 = vmatprep.subr.mxu0 0.0
        %2560 = vmatpush1.msra.mxu0 0.0
        %2561 = vmatprep.subr.mxu0 0.0
        %2562 = vmatpush1.msra.mxu0 0.0
        %2563 = vmatprep.subr.mxu0 0.0
        %2564 = vmatpush1.msra.mxu0 0.0
        %2565 = vmatprep.subr.mxu0 0.0
        %2566 = vmatpush1.msra.mxu0 0.0
        %2567 = vmatprep.subr.mxu0 0.0
        %2568 = vmatpush1.msra.mxu0 0.0
        %2569 = vmatprep.subr.mxu0 0.0
        %2570 = vmatpush1.msra.mxu0 0.0
        %2571 = vmatprep.subr.mxu0 0.0
        %2572 = vmatpush1.msra.mxu0 0.0
        %2573 = vmatprep.subr.mxu0 0.0
        %2574 = vmatpush1.msra.mxu0 0.0
        %2575 = vmatprep.subr.mxu0 0.0
        %2576 = vmatpush1.msra.mxu0 0.0
        %2577 = vmatprep.subr.mxu0 0.0
        %2578 = vmatpush1.msra.mxu0 0.0
        %2579 = vmatprep.subr.mxu0 0.0
        %2580 = vmatpush1.msra.mxu0 0.0
        %2581 = vmatprep.subr.mxu0 0.0
        %2582 = vmatpush1.msra.mxu0 0.0
        %2583 = vmatprep.subr.mxu0 0.0
        %2584 = vmatpush1.msra.mxu0 0.0
        %2585 = vmatprep.subr.mxu0 0.0
        %2586 = vmatpush1.msra.mxu0 0.0
        %2587 = vmatprep.subr.mxu0 0.0
        %2588 = vmatpush1.msra.mxu0 0.0
        %2589 = vmatprep.subr.mxu0 0.0
        %2590 = vmatpush1.msra.mxu0 0.0
        %2591 = vmatprep.subr.mxu0 0.0
        %2592 = vmatpush1.msra.mxu0 0.0
        %2593 = vmatprep.subr.mxu0 0.0
        %2594 = vmatpush1.msra.mxu0 0.0
        %2595 = vmatprep.subr.mxu0 0.0
        %2596 = vmatpush1.msra.mxu0 0.0
        %2597 = vmatprep.subr.mxu0 0.0
        %2598 = vmatpush1.msra.mxu0 0.0
        %2599 = vmatprep.mubr.f32.mxu0 0.0
        %v2600 = vand.u32 %v2355, 4294901760
        %v2601 = vsub.f32 %v2355, %v2600
        %2602 = vmatmul.mubr.f32.gmra.mrb[0].mxu0 %v2601
        %v2603 = vpop.f32.mrb[0].mxu0
        %v2604 = vadd.f32 %v2524, %v2603
        %v2605 = vpop.f32.mrb[0].mxu0
        %2606 = vdwg.mxu0
        %2607 = vmatprep.subr.mxu0 0.0
        %v2608 = vand.u32 %v2344, 4294901760
        %2609 = vmatpush1.msra.mxu0 %v2608
        %2610 = vmatprep.subr.mxu0 0.0
        %v2611 = vand.u32 %v2345, 4294901760
        %2612 = vmatpush1.msra.mxu0 %v2611
        %2613 = vmatprep.subr.mxu0 0.0
        %v2614 = vand.u32 %v2346, 4294901760
        %2615 = vmatpush1.msra.mxu0 %v2614
        %2616 = vmatprep.subr.mxu0 0.0
        %v2617 = vand.u32 %v2347, 4294901760
        %2618 = vmatpush1.msra.mxu0 %v2617
        %2619 = vmatprep.subr.mxu0 0.0
        %2620 = vmatpush1.msra.mxu0 0.0
        %2621 = vmatprep.subr.mxu0 0.0
        %2622 = vmatpush1.msra.mxu0 0.0
        %2623 = vmatprep.subr.mxu0 0.0
        %2624 = vmatpush1.msra.mxu0 0.0
        %2625 = vmatprep.subr.mxu0 0.0
        %2626 = vmatpush1.msra.mxu0 0.0
        %2627 = vmatprep.subr.mxu0 0.0
        %2628 = vmatpush1.msra.mxu0 0.0
        %2629 = vmatprep.subr.mxu0 0.0
        %2630 = vmatpush1.msra.mxu0 0.0
        %2631 = vmatprep.subr.mxu0 0.0
        %2632 = vmatpush1.msra.mxu0 0.0
        %2633 = vmatprep.subr.mxu0 0.0
        %2634 = vmatpush1.msra.mxu0 0.0
        %2635 = vmatprep.subr.mxu0 0.0
        %2636 = vmatpush1.msra.mxu0 0.0
        %2637 = vmatprep.subr.mxu0 0.0
        %2638 = vmatpush1.msra.mxu0 0.0
        %2639 = vmatprep.subr.mxu0 0.0
        %2640 = vmatpush1.msra.mxu0 0.0
        %2641 = vmatprep.subr.mxu0 0.0
        %2642 = vmatpush1.msra.mxu0 0.0
        %2643 = vmatprep.subr.mxu0 0.0
        %2644 = vmatpush1.msra.mxu0 0.0
        %2645 = vmatprep.subr.mxu0 0.0
        %2646 = vmatpush1.msra.mxu0 0.0
        %2647 = vmatprep.subr.mxu0 0.0
        %2648 = vmatpush1.msra.mxu0 0.0
        %2649 = vmatprep.subr.mxu0 0.0
        %2650 = vmatpush1.msra.mxu0 0.0
        %2651 = vmatprep.subr.mxu0 0.0
        %2652 = vmatpush1.msra.mxu0 0.0
        %2653 = vmatprep.subr.mxu0 0.0
        %2654 = vmatpush1.msra.mxu0 0.0
        %2655 = vmatprep.subr.mxu0 0.0
        %2656 = vmatpush1.msra.mxu0 0.0
        %2657 = vmatprep.subr.mxu0 0.0
        %2658 = vmatpush1.msra.mxu0 0.0
        %2659 = vmatprep.subr.mxu0 0.0
        %2660 = vmatpush1.msra.mxu0 0.0
        %2661 = vmatprep.subr.mxu0 0.0
        %2662 = vmatpush1.msra.mxu0 0.0
        %2663 = vmatprep.subr.mxu0 0.0
        %2664 = vmatpush1.msra.mxu0 0.0
        %2665 = vmatprep.subr.mxu0 0.0
        %2666 = vmatpush1.msra.mxu0 0.0
        %2667 = vmatprep.subr.mxu0 0.0
        %2668 = vmatpush1.msra.mxu0 0.0
        %2669 = vmatprep.subr.mxu0 0.0
        %2670 = vmatpush1.msra.mxu0 0.0
        %2671 = vmatprep.subr.mxu0 0.0
        %2672 = vmatpush1.msra.mxu0 0.0
        %2673 = vmatprep.subr.mxu0 0.0
        %2674 = vmatpush1.msra.mxu0 0.0
        %2675 = vmatprep.mubr.f32.mxu0 0.0
        %v2676 = vand.u32 %v2355, 4294901760
        %v2677 = vsub.f32 %v2355, %v2676
        %v2678 = vand.u32 %v2677, 4294901760
        %2679 = vmatmul.mubr.f32.gmra.mrb[0].mxu0 %v2678
        %v2680 = vpop.f32.mrb[0].mxu0
        %v2681 = vadd.f32 %v2604, %v2680
        %v2682 = vpop.f32.mrb[0].mxu0
        %2683 = vdwg.mxu0
        %2684 = vmatprep.subr.mxu0 0.0
        %v2685 = vand.u32 %v2344, 4294901760
        %v2686 = vsub.f32 %v2344, %v2685
        %v2687 = vand.u32 %v2686, 4294901760
        %2688 = vmatpush1.msra.mxu0 %v2687
        %2689 = vmatprep.subr.mxu0 0.0
        %v2690 = vand.u32 %v2345, 4294901760
        %v2691 = vsub.f32 %v2345, %v2690
        %v2692 = vand.u32 %v2691, 4294901760
        %2693 = vmatpush1.msra.mxu0 %v2692
        %2694 = vmatprep.subr.mxu0 0.0
        %v2695 = vand.u32 %v2346, 4294901760
        %v2696 = vsub.f32 %v2346, %v2695
        %v2697 = vand.u32 %v2696, 4294901760
        %2698 = vmatpush1.msra.mxu0 %v2697
        %2699 = vmatprep.subr.mxu0 0.0
        %v2700 = vand.u32 %v2347, 4294901760
        %v2701 = vsub.f32 %v2347, %v2700
        %v2702 = vand.u32 %v2701, 4294901760
        %2703 = vmatpush1.msra.mxu0 %v2702
        %2704 = vmatprep.subr.mxu0 0.0
        %2705 = vmatpush1.msra.mxu0 0.0
        %2706 = vmatprep.subr.mxu0 0.0
        %2707 = vmatpush1.msra.mxu0 0.0
        %2708 = vmatprep.subr.mxu0 0.0
        %2709 = vmatpush1.msra.mxu0 0.0
        %2710 = vmatprep.subr.mxu0 0.0
        %2711 = vmatpush1.msra.mxu0 0.0
        %2712 = vmatprep.subr.mxu0 0.0
        %2713 = vmatpush1.msra.mxu0 0.0
        %2714 = vmatprep.subr.mxu0 0.0
        %2715 = vmatpush1.msra.mxu0 0.0
        %2716 = vmatprep.subr.mxu0 0.0
        %2717 = vmatpush1.msra.mxu0 0.0
        %2718 = vmatprep.subr.mxu0 0.0
        %2719 = vmatpush1.msra.mxu0 0.0
        %2720 = vmatprep.subr.mxu0 0.0
        %2721 = vmatpush1.msra.mxu0 0.0
        %2722 = vmatprep.subr.mxu0 0.0
        %2723 = vmatpush1.msra.mxu0 0.0
        %2724 = vmatprep.subr.mxu0 0.0
        %2725 = vmatpush1.msra.mxu0 0.0
        %2726 = vmatprep.subr.mxu0 0.0
        %2727 = vmatpush1.msra.mxu0 0.0
        %2728 = vmatprep.subr.mxu0 0.0
        %2729 = vmatpush1.msra.mxu0 0.0
        %2730 = vmatprep.subr.mxu0 0.0
        %2731 = vmatpush1.msra.mxu0 0.0
        %2732 = vmatprep.subr.mxu0 0.0
        %2733 = vmatpush1.msra.mxu0 0.0
        %2734 = vmatprep.subr.mxu0 0.0
        %2735 = vmatpush1.msra.mxu0 0.0
        %2736 = vmatprep.subr.mxu0 0.0
        %2737 = vmatpush1.msra.mxu0 0.0
        %2738 = vmatprep.subr.mxu0 0.0
        %2739 = vmatpush1.msra.mxu0 0.0
        %2740 = vmatprep.subr.mxu0 0.0
        %2741 = vmatpush1.msra.mxu0 0.0
        %2742 = vmatprep.subr.mxu0 0.0
        %2743 = vmatpush1.msra.mxu0 0.0
        %2744 = vmatprep.subr.mxu0 0.0
        %2745 = vmatpush1.msra.mxu0 0.0
        %2746 = vmatprep.subr.mxu0 0.0
        %2747 = vmatpush1.msra.mxu0 0.0
        %2748 = vmatprep.subr.mxu0 0.0
        %2749 = vmatpush1.msra.mxu0 0.0
        %2750 = vmatprep.subr.mxu0 0.0
        %2751 = vmatpush1.msra.mxu0 0.0
        %2752 = vmatprep.subr.mxu0 0.0
        %2753 = vmatpush1.msra.mxu0 0.0
        %2754 = vmatprep.subr.mxu0 0.0
        %2755 = vmatpush1.msra.mxu0 0.0
        %2756 = vmatprep.subr.mxu0 0.0
        %2757 = vmatpush1.msra.mxu0 0.0
        %2758 = vmatprep.subr.mxu0 0.0
        %2759 = vmatpush1.msra.mxu0 0.0
        %2760 = vmatprep.mubr.f32.mxu0 0.0
        %v2761 = vand.u32 %v2355, 4294901760
        %2762 = vmatmul.mubr.f32.gmra.mrb[0].mxu0 %v2761
        %v2763 = vpop.f32.mrb[0].mxu0
        %v2764 = vadd.f32 %v2681, %v2763
        %v2765 = vpop.f32.mrb[0].mxu0
        %2766 = vdwg.mxu0
        %2767 = vmatprep.subr.mxu0 0.0
        %v2768 = vand.u32 %v2344, 4294901760
        %2769 = vmatpush1.msra.mxu0 %v2768
        %2770 = vmatprep.subr.mxu0 0.0
        %v2771 = vand.u32 %v2345, 4294901760
        %2772 = vmatpush1.msra.mxu0 %v2771
        %2773 = vmatprep.subr.mxu0 0.0
        %v2774 = vand.u32 %v2346, 4294901760
        %2775 = vmatpush1.msra.mxu0 %v2774
        %2776 = vmatprep.subr.mxu0 0.0
        %v2777 = vand.u32 %v2347, 4294901760
        %2778 = vmatpush1.msra.mxu0 %v2777
        %2779 = vmatprep.subr.mxu0 0.0
        %2780 = vmatpush1.msra.mxu0 0.0
        %2781 = vmatprep.subr.mxu0 0.0
        %2782 = vmatpush1.msra.mxu0 0.0
        %2783 = vmatprep.subr.mxu0 0.0
        %2784 = vmatpush1.msra.mxu0 0.0
        %2785 = vmatprep.subr.mxu0 0.0
        %2786 = vmatpush1.msra.mxu0 0.0
        %2787 = vmatprep.subr.mxu0 0.0
        %2788 = vmatpush1.msra.mxu0 0.0
        %2789 = vmatprep.subr.mxu0 0.0
        %2790 = vmatpush1.msra.mxu0 0.0
        %2791 = vmatprep.subr.mxu0 0.0
        %2792 = vmatpush1.msra.mxu0 0.0
        %2793 = vmatprep.subr.mxu0 0.0
        %2794 = vmatpush1.msra.mxu0 0.0
        %2795 = vmatprep.subr.mxu0 0.0
        %2796 = vmatpush1.msra.mxu0 0.0
        %2797 = vmatprep.subr.mxu0 0.0
        %2798 = vmatpush1.msra.mxu0 0.0
        %2799 = vmatprep.subr.mxu0 0.0
        %2800 = vmatpush1.msra.mxu0 0.0
        %2801 = vmatprep.subr.mxu0 0.0
        %2802 = vmatpush1.msra.mxu0 0.0
        %2803 = vmatprep.subr.mxu0 0.0
        %2804 = vmatpush1.msra.mxu0 0.0
        %2805 = vmatprep.subr.mxu0 0.0
        %2806 = vmatpush1.msra.mxu0 0.0
        %2807 = vmatprep.subr.mxu0 0.0
        %2808 = vmatpush1.msra.mxu0 0.0
        %2809 = vmatprep.subr.mxu0 0.0
        %2810 = vmatpush1.msra.mxu0 0.0
        %2811 = vmatprep.subr.mxu0 0.0
        %2812 = vmatpush1.msra.mxu0 0.0
        %2813 = vmatprep.subr.mxu0 0.0
        %2814 = vmatpush1.msra.mxu0 0.0
        %2815 = vmatprep.subr.mxu0 0.0
        %2816 = vmatpush1.msra.mxu0 0.0
        %2817 = vmatprep.subr.mxu0 0.0
        %2818 = vmatpush1.msra.mxu0 0.0
        %2819 = vmatprep.subr.mxu0 0.0
        %2820 = vmatpush1.msra.mxu0 0.0
        %2821 = vmatprep.subr.mxu0 0.0
        %2822 = vmatpush1.msra.mxu0 0.0
        %2823 = vmatprep.subr.mxu0 0.0
        %2824 = vmatpush1.msra.mxu0 0.0
        %2825 = vmatprep.subr.mxu0 0.0
        %2826 = vmatpush1.msra.mxu0 0.0
        %2827 = vmatprep.subr.mxu0 0.0
        %2828 = vmatpush1.msra.mxu0 0.0
        %2829 = vmatprep.subr.mxu0 0.0
        %2830 = vmatpush1.msra.mxu0 0.0
        %2831 = vmatprep.subr.mxu0 0.0
        %2832 = vmatpush1.msra.mxu0 0.0
        %2833 = vmatprep.subr.mxu0 0.0
        %2834 = vmatpush1.msra.mxu0 0.0
        %2835 = vmatprep.mubr.f32.mxu0 0.0
        %v2836 = vand.u32 %v2355, 4294901760
        %2837 = vmatmul.mubr.f32.gmra.mrb[0].mxu0 %v2836
        %v2838 = vpop.f32.mrb[0].mxu0
        %v2839 = vadd.f32 %v2764, %v2838
        %v2840 = vpop.f32.mrb[0].mxu0
        %2841 = vdwg.mxu0
        %2843 = vset.pattern.permute.xlu0 0
        %2844 = vperm.xlu0 %2843, %v460
        %v2845 = vpop.permute.xlu0 %2844
        %2848 = vset.pattern.permute.xlu0 0
        %2849 = vperm.xlu0 %2848, %v461
        %v2850 = vpop.permute.xlu0 %2849
        %2853 = vset.pattern.permute.xlu0 0
        %2854 = vperm.xlu0 %2853, %v462
        %v2855 = vpop.permute.xlu0 %2854
        %2858 = vset.pattern.permute.xlu0 0
        %2859 = vperm.xlu0 %2858, %v463
        %v2860 = vpop.permute.xlu0 %2859
        %v2862 = vadd.f32 %v1464, %v2845
        %v2863 = vadd.f32 %v1470, %v2850
        %v2864 = vadd.f32 %v1476, %v2855
        %v2865 = vadd.f32 %v1482, %v2860
        %v2866 = vmax.f32 %v2862, 0.0
        %v2867 = vmax.f32 %v2863, 0.0
        %v2868 = vmax.f32 %v2864, 0.0
        %v2869 = vmax.f32 %v2865, 0.0
        %2871 = vset.pattern.permute.xlu0 0
        %2872 = vperm.xlu0 %2871, %v464
        %v2873 = vpop.permute.xlu0 %2872
        %2876 = vset.pattern.permute.xlu0 0
        %2877 = vperm.xlu0 %2876, %v465
        %v2878 = vpop.permute.xlu0 %2877
        %2881 = vset.pattern.permute.xlu0 0
        %2882 = vperm.xlu0 %2881, %v466
        %v2883 = vpop.permute.xlu0 %2882
        %2886 = vset.pattern.permute.xlu0 0
        %2887 = vperm.xlu0 %2886, %v467
        %v2888 = vpop.permute.xlu0 %2887
        %v2891 = vsel %vm2353, %v451, 0
        %v2894 = vsel %vm2353, %v452, 0
        %v2897 = vsel %vm2353, %v453, 0
        %v2900 = vsel %vm2353, %v454, 0
        %2902 = vmatprep.subr.mxu0 0.0
        %v2903 = vand.u32 %v2866, 4294901760
        %2904 = vmatpush1.msra.mxu0 %v2903
        %2905 = vmatprep.subr.mxu0 0.0
        %v2906 = vand.u32 %v2867, 4294901760
        %2907 = vmatpush1.msra.mxu0 %v2906
        %2908 = vmatprep.subr.mxu0 0.0
        %v2909 = vand.u32 %v2868, 4294901760
        %2910 = vmatpush1.msra.mxu0 %v2909
        %2911 = vmatprep.subr.mxu0 0.0
        %v2912 = vand.u32 %v2869, 4294901760
        %2913 = vmatpush1.msra.mxu0 %v2912
        %2914 = vmatprep.subr.mxu0 0.0
        %2915 = vmatpush1.msra.mxu0 0.0
        %2916 = vmatprep.subr.mxu0 0.0
        %2917 = vmatpush1.msra.mxu0 0.0
        %2918 = vmatprep.subr.mxu0 0.0
        %2919 = vmatpush1.msra.mxu0 0.0
        %2920 = vmatprep.subr.mxu0 0.0
        %2921 = vmatpush1.msra.mxu0 0.0
        %2922 = vmatprep.subr.mxu0 0.0
        %2923 = vmatpush1.msra.mxu0 0.0
        %2924 = vmatprep.subr.mxu0 0.0
        %2925 = vmatpush1.msra.mxu0 0.0
        %2926 = vmatprep.subr.mxu0 0.0
        %2927 = vmatpush1.msra.mxu0 0.0
        %2928 = vmatprep.subr.mxu0 0.0
        %2929 = vmatpush1.msra.mxu0 0.0
        %2930 = vmatprep.subr.mxu0 0.0
        %2931 = vmatpush1.msra.mxu0 0.0
        %2932 = vmatprep.subr.mxu0 0.0
        %2933 = vmatpush1.msra.mxu0 0.0
        %2934 = vmatprep.subr.mxu0 0.0
        %2935 = vmatpush1.msra.mxu0 0.0
        %2936 = vmatprep.subr.mxu0 0.0
        %2937 = vmatpush1.msra.mxu0 0.0
        %2938 = vmatprep.subr.mxu0 0.0
        %2939 = vmatpush1.msra.mxu0 0.0
        %2940 = vmatprep.subr.mxu0 0.0
        %2941 = vmatpush1.msra.mxu0 0.0
        %2942 = vmatprep.subr.mxu0 0.0
        %2943 = vmatpush1.msra.mxu0 0.0
        %2944 = vmatprep.subr.mxu0 0.0
        %2945 = vmatpush1.msra.mxu0 0.0
        %2946 = vmatprep.subr.mxu0 0.0
        %2947 = vmatpush1.msra.mxu0 0.0
        %2948 = vmatprep.subr.mxu0 0.0
        %2949 = vmatpush1.msra.mxu0 0.0
        %2950 = vmatprep.subr.mxu0 0.0
        %2951 = vmatpush1.msra.mxu0 0.0
        %2952 = vmatprep.subr.mxu0 0.0
        %2953 = vmatpush1.msra.mxu0 0.0
        %2954 = vmatprep.subr.mxu0 0.0
        %2955 = vmatpush1.msra.mxu0 0.0
        %2956 = vmatprep.subr.mxu0 0.0
        %2957 = vmatpush1.msra.mxu0 0.0
        %2958 = vmatprep.subr.mxu0 0.0
        %2959 = vmatpush1.msra.mxu0 0.0
        %2960 = vmatprep.subr.mxu0 0.0
        %2961 = vmatpush1.msra.mxu0 0.0
        %2962 = vmatprep.subr.mxu0 0.0
        %2963 = vmatpush1.msra.mxu0 0.0
        %2964 = vmatprep.subr.mxu0 0.0
        %2965 = vmatpush1.msra.mxu0 0.0
        %2966 = vmatprep.subr.mxu0 0.0
        %2967 = vmatpush1.msra.mxu0 0.0
        %2968 = vmatprep.subr.mxu0 0.0
        %2969 = vmatpush1.msra.mxu0 0.0
        %2970 = vmatprep.mubr.f32.mxu0 0.0
        %v2971 = vand.u32 %v2891, 4294901760
        %v2972 = vsub.f32 %v2891, %v2971
        %v2973 = vand.u32 %v2972, 4294901760
        %v2974 = vsub.f32 %v2972, %v2973
        %v2975 = vand.u32 %v2974, 4294901760
        %2976 = vmatmul.mubr.f32.gmra.mrb[0].mxu0 %v2975
        %v2977 = vpop.f32.mrb[0].mxu0
        %v2978 = vadd.f32 %v2873, %v2977
        %v2979 = vpop.f32.mrb[0].mxu0
        %2980 = vmatprep.mubr.f32.mxu0 0.0
        %v2981 = vand.u32 %v2894, 4294901760
        %v2982 = vsub.f32 %v2894, %v2981
        %v2983 = vand.u32 %v2982, 4294901760
        %v2984 = vsub.f32 %v2982, %v2983
        %v2985 = vand.u32 %v2984, 4294901760
        %2986 = vmatmul.mubr.f32.gmra.mrb[0].mxu0 %v2985
        %v2987 = vpop.f32.mrb[0].mxu0
        %v2988 = vadd.f32 %v2878, %v2987
        %v2989 = vpop.f32.mrb[0].mxu0
        %2990 = vmatprep.mubr.f32.mxu0 0.0
        %v2991 = vand.u32 %v2897, 4294901760
        %v2992 = vsub.f32 %v2897, %v2991
        %v2993 = vand.u32 %v2992, 4294901760
        %v2994 = vsub.f32 %v2992, %v2993
        %v2995 = vand.u32 %v2994, 4294901760
        %2996 = vmatmul.mubr.f32.gmra.mrb[0].mxu0 %v2995
        %v2997 = vpop.f32.mrb[0].mxu0
        %v2998 = vadd.f32 %v2883, %v2997
        %v2999 = vpop.f32.mrb[0].mxu0
        %3000 = vmatprep.mubr.f32.mxu0 0.0
        %v3001 = vand.u32 %v2900, 4294901760
        %v3002 = vsub.f32 %v2900, %v3001
        %v3003 = vand.u32 %v3002, 4294901760
        %v3004 = vsub.f32 %v3002, %v3003
        %v3005 = vand.u32 %v3004, 4294901760
        %3006 = vmatmul.mubr.f32.gmra.mrb[0].mxu0 %v3005
        %v3007 = vpop.f32.mrb[0].mxu0
        %v3008 = vadd.f32 %v2888, %v3007
        %v3009 = vpop.f32.mrb[0].mxu0
        %3010 = vdwg.mxu0
        %3011 = vmatprep.subr.mxu0 0.0
        %v3012 = vand.u32 %v2866, 4294901760
        %v3013 = vsub.f32 %v2866, %v3012
        %v3014 = vand.u32 %v3013, 4294901760
        %v3015 = vsub.f32 %v3013, %v3014
        %v3016 = vand.u32 %v3015, 4294901760
        %3017 = vmatpush1.msra.mxu0 %v3016
        %3018 = vmatprep.subr.mxu0 0.0
        %v3019 = vand.u32 %v2867, 4294901760
        %v3020 = vsub.f32 %v2867, %v3019
        %v3021 = vand.u32 %v3020, 4294901760
        %v3022 = vsub.f32 %v3020, %v3021
        %v3023 = vand.u32 %v3022, 4294901760
        %3024 = vmatpush1.msra.mxu0 %v3023
        %3025 = vmatprep.subr.mxu0 0.0
        %v3026 = vand.u32 %v2868, 4294901760
        %v3027 = vsub.f32 %v2868, %v3026
        %v3028 = vand.u32 %v3027, 4294901760
        %v3029 = vsub.f32 %v3027, %v3028
        %v3030 = vand.u32 %v3029, 4294901760
        %3031 = vmatpush1.msra.mxu0 %v3030
        %3032 = vmatprep.subr.mxu0 0.0
        %v3033 = vand.u32 %v2869, 4294901760
        %v3034 = vsub.f32 %v2869, %v3033
        %v3035 = vand.u32 %v3034, 4294901760
        %v3036 = vsub.f32 %v3034, %v3035
        %v3037 = vand.u32 %v3036, 4294901760
        %3038 = vmatpush1.msra.mxu0 %v3037
        %3039 = vmatprep.subr.mxu0 0.0
        %3040 = vmatpush1.msra.mxu0 0.0
        %3041 = vmatprep.subr.mxu0 0.0
        %3042 = vmatpush1.msra.mxu0 0.0
        %3043 = vmatprep.subr.mxu0 0.0
        %3044 = vmatpush1.msra.mxu0 0.0
        %3045 = vmatprep.subr.mxu0 0.0
        %3046 = vmatpush1.msra.mxu0 0.0
        %3047 = vmatprep.subr.mxu0 0.0
        %3048 = vmatpush1.msra.mxu0 0.0
        %3049 = vmatprep.subr.mxu0 0.0
        %3050 = vmatpush1.msra.mxu0 0.0
        %3051 = vmatprep.subr.mxu0 0.0
        %3052 = vmatpush1.msra.mxu0 0.0
        %3053 = vmatprep.subr.mxu0 0.0
        %3054 = vmatpush1.msra.mxu0 0.0
        %3055 = vmatprep.subr.mxu0 0.0
        %3056 = vmatpush1.msra.mxu0 0.0
        %3057 = vmatprep.subr.mxu0 0.0
        %3058 = vmatpush1.msra.mxu0 0.0
        %3059 = vmatprep.subr.mxu0 0.0
        %3060 = vmatpush1.msra.mxu0 0.0
        %3061 = vmatprep.subr.mxu0 0.0
        %3062 = vmatpush1.msra.mxu0 0.0
        %3063 = vmatprep.subr.mxu0 0.0
        %3064 = vmatpush1.msra.mxu0 0.0
        %3065 = vmatprep.subr.mxu0 0.0
        %3066 = vmatpush1.msra.mxu0 0.0
        %3067 = vmatprep.subr.mxu0 0.0
        %3068 = vmatpush1.msra.mxu0 0.0
        %3069 = vmatprep.subr.mxu0 0.0
        %3070 = vmatpush1.msra.mxu0 0.0
        %3071 = vmatprep.subr.mxu0 0.0
        %3072 = vmatpush1.msra.mxu0 0.0
        %3073 = vmatprep.subr.mxu0 0.0
        %3074 = vmatpush1.msra.mxu0 0.0
        %3075 = vmatprep.subr.mxu0 0.0
        %3076 = vmatpush1.msra.mxu0 0.0
        %3077 = vmatprep.subr.mxu0 0.0
        %3078 = vmatpush1.msra.mxu0 0.0
        %3079 = vmatprep.subr.mxu0 0.0
        %3080 = vmatpush1.msra.mxu0 0.0
        %3081 = vmatprep.subr.mxu0 0.0
        %3082 = vmatpush1.msra.mxu0 0.0
        %3083 = vmatprep.subr.mxu0 0.0
        %3084 = vmatpush1.msra.mxu0 0.0
        %3085 = vmatprep.subr.mxu0 0.0
        %3086 = vmatpush1.msra.mxu0 0.0
        %3087 = vmatprep.subr.mxu0 0.0
        %3088 = vmatpush1.msra.mxu0 0.0
        %3089 = vmatprep.subr.mxu0 0.0
        %3090 = vmatpush1.msra.mxu0 0.0
        %3091 = vmatprep.subr.mxu0 0.0
        %3092 = vmatpush1.msra.mxu0 0.0
        %3093 = vmatprep.subr.mxu0 0.0
        %3094 = vmatpush1.msra.mxu0 0.0
        %3095 = vmatprep.mubr.f32.mxu0 0.0
        %v3096 = vand.u32 %v2891, 4294901760
        %3097 = vmatmul.mubr.f32.gmra.mrb[0].mxu0 %v3096
        %v3098 = vpop.f32.mrb[0].mxu0
        %v3099 = vadd.f32 %v2978, %v3098
        %v3100 = vpop.f32.mrb[0].mxu0
        %3101 = vmatprep.mubr.f32.mxu0 0.0
        %v3102 = vand.u32 %v2894, 4294901760
        %3103 = vmatmul.mubr.f32.gmra.mrb[0].mxu0 %v3102
        %v3104 = vpop.f32.mrb[0].mxu0
        %v3105 = vadd.f32 %v2988, %v3104
        %v3106 = vpop.f32.mrb[0].mxu0
        %3107 = vmatprep.mubr.f32.mxu0 0.0
        %v3108 = vand.u32 %v2897, 4294901760
        %3109 = vmatmul.mubr.f32.gmra.mrb[0].mxu0 %v3108
        %v3110 = vpop.f32.mrb[0].mxu0
        %v3111 = vadd.f32 %v2998, %v3110
        %v3112 = vpop.f32.mrb[0].mxu0
        %3113 = vmatprep.mubr.f32.mxu0 0.0
        %v3114 = vand.u32 %v2900, 4294901760
        %3115 = vmatmul.mubr.f32.gmra.mrb[0].mxu0 %v3114
        %v3116 = vpop.f32.mrb[0].mxu0
        %v3117 = vadd.f32 %v3008, %v3116
        %v3118 = vpop.f32.mrb[0].mxu0
        %3119 = vdwg.mxu0
        %3120 = vmatprep.subr.mxu0 0.0
        %v3121 = vand.u32 %v2866, 4294901760
        %v3122 = vsub.f32 %v2866, %v3121
        %3123 = vmatpush1.msra.mxu0 %v3122
        %3124 = vmatprep.subr.mxu0 0.0
        %v3125 = vand.u32 %v2867, 4294901760
        %v3126 = vsub.f32 %v2867, %v3125
        %3127 = vmatpush1.msra.mxu0 %v3126
        %3128 = vmatprep.subr.mxu0 0.0
        %v3129 = vand.u32 %v2868, 4294901760
        %v3130 = vsub.f32 %v2868, %v3129
        %3131 = vmatpush1.msra.mxu0 %v3130
        %3132 = vmatprep.subr.mxu0 0.0
        %v3133 = vand.u32 %v2869, 4294901760
        %v3134 = vsub.f32 %v2869, %v3133
        %3135 = vmatpush1.msra.mxu0 %v3134
        %3136 = vmatprep.subr.mxu0 0.0
        %3137 = vmatpush1.msra.mxu0 0.0
        %3138 = vmatprep.subr.mxu0 0.0
        %3139 = vmatpush1.msra.mxu0 0.0
        %3140 = vmatprep.subr.mxu0 0.0
        %3141 = vmatpush1.msra.mxu0 0.0
        %3142 = vmatprep.subr.mxu0 0.0
        %3143 = vmatpush1.msra.mxu0 0.0
        %3144 = vmatprep.subr.mxu0 0.0
        %3145 = vmatpush1.msra.mxu0 0.0
        %3146 = vmatprep.subr.mxu0 0.0
        %3147 = vmatpush1.msra.mxu0 0.0
        %3148 = vmatprep.subr.mxu0 0.0
        %3149 = vmatpush1.msra.mxu0 0.0
        %3150 = vmatprep.subr.mxu0 0.0
        %3151 = vmatpush1.msra.mxu0 0.0
        %3152 = vmatprep.subr.mxu0 0.0
        %3153 = vmatpush1.msra.mxu0 0.0
        %3154 = vmatprep.subr.mxu0 0.0
        %3155 = vmatpush1.msra.mxu0 0.0
        %3156 = vmatprep.subr.mxu0 0.0
        %3157 = vmatpush1.msra.mxu0 0.0
        %3158 = vmatprep.subr.mxu0 0.0
        %3159 = vmatpush1.msra.mxu0 0.0
        %3160 = vmatprep.subr.mxu0 0.0
        %3161 = vmatpush1.msra.mxu0 0.0
        %3162 = vmatprep.subr.mxu0 0.0
        %3163 = vmatpush1.msra.mxu0 0.0
        %3164 = vmatprep.subr.mxu0 0.0
        %3165 = vmatpush1.msra.mxu0 0.0
        %3166 = vmatprep.subr.mxu0 0.0
        %3167 = vmatpush1.msra.mxu0 0.0
        %3168 = vmatprep.subr.mxu0 0.0
        %3169 = vmatpush1.msra.mxu0 0.0
        %3170 = vmatprep.subr.mxu0 0.0
        %3171 = vmatpush1.msra.mxu0 0.0
        %3172 = vmatprep.subr.mxu0 0.0
        %3173 = vmatpush1.msra.mxu0 0.0
        %3174 = vmatprep.subr.mxu0 0.0
        %3175 = vmatpush1.msra.mxu0 0.0
        %3176 = vmatprep.subr.mxu0 0.0
        %3177 = vmatpush1.msra.mxu0 0.0
        %3178 = vmatprep.subr.mxu0 0.0
        %3179 = vmatpush1.msra.mxu0 0.0
        %3180 = vmatprep.subr.mxu0 0.0
        %3181 = vmatpush1.msra.mxu0 0.0
        %3182 = vmatprep.subr.mxu0 0.0
        %3183 = vmatpush1.msra.mxu0 0.0
        %3184 = vmatprep.subr.mxu0 0.0
        %3185 = vmatpush1.msra.mxu0 0.0
        %3186 = vmatprep.subr.mxu0 0.0
        %3187 = vmatpush1.msra.mxu0 0.0
        %3188 = vmatprep.subr.mxu0 0.0
        %3189 = vmatpush1.msra.mxu0 0.0
        %3190 = vmatprep.subr.mxu0 0.0
        %3191 = vmatpush1.msra.mxu0 0.0
        %3192 = vmatprep.mubr.f32.mxu0 0.0
        %v3193 = vand.u32 %v2891, 4294901760
        %v3194 = vsub.f32 %v2891, %v3193
        %3195 = vmatmul.mubr.f32.gmra.mrb[0].mxu0 %v3194
        %v3196 = vpop.f32.mrb[0].mxu0
        %v3197 = vadd.f32 %v3099, %v3196
        %v3198 = vpop.f32.mrb[0].mxu0
        %3199 = vmatprep.mubr.f32.mxu0 0.0
        %v3200 = vand.u32 %v2894, 4294901760
        %v3201 = vsub.f32 %v2894, %v3200
        %3202 = vmatmul.mubr.f32.gmra.mrb[0].mxu0 %v3201
        %v3203 = vpop.f32.mrb[0].mxu0
        %v3204 = vadd.f32 %v3105, %v3203
        %v3205 = vpop.f32.mrb[0].mxu0
        %3206 = vmatprep.mubr.f32.mxu0 0.0
        %v3207 = vand.u32 %v2897, 4294901760
        %v3208 = vsub.f32 %v2897, %v3207
        %3209 = vmatmul.mubr.f32.gmra.mrb[0].mxu0 %v3208
        %v3210 = vpop.f32.mrb[0].mxu0
        %v3211 = vadd.f32 %v3111, %v3210
        %v3212 = vpop.f32.mrb[0].mxu0
        %3213 = vmatprep.mubr.f32.mxu0 0.0
        %v3214 = vand.u32 %v2900, 4294901760
        %v3215 = vsub.f32 %v2900, %v3214
        %3216 = vmatmul.mubr.f32.gmra.mrb[0].mxu0 %v3215
        %v3217 = vpop.f32.mrb[0].mxu0
        %v3218 = vadd.f32 %v3117, %v3217
        %v3219 = vpop.f32.mrb[0].mxu0
        %3220 = vdwg.mxu0
        %3221 = vmatprep.subr.mxu0 0.0
        %v3222 = vand.u32 %v2866, 4294901760
        %3223 = vmatpush1.msra.mxu0 %v3222
        %3224 = vmatprep.subr.mxu0 0.0
        %v3225 = vand.u32 %v2867, 4294901760
        %3226 = vmatpush1.msra.mxu0 %v3225
        %3227 = vmatprep.subr.mxu0 0.0
        %v3228 = vand.u32 %v2868, 4294901760
        %3229 = vmatpush1.msra.mxu0 %v3228
        %3230 = vmatprep.subr.mxu0 0.0
        %v3231 = vand.u32 %v2869, 4294901760
        %3232 = vmatpush1.msra.mxu0 %v3231
        %3233 = vmatprep.subr.mxu0 0.0
        %3234 = vmatpush1.msra.mxu0 0.0
        %3235 = vmatprep.subr.mxu0 0.0
        %3236 = vmatpush1.msra.mxu0 0.0
        %3237 = vmatprep.subr.mxu0 0.0
        %3238 = vmatpush1.msra.mxu0 0.0
        %3239 = vmatprep.subr.mxu0 0.0
        %3240 = vmatpush1.msra.mxu0 0.0
        %3241 = vmatprep.subr.mxu0 0.0
        %3242 = vmatpush1.msra.mxu0 0.0
        %3243 = vmatprep.subr.mxu0 0.0
        %3244 = vmatpush1.msra.mxu0 0.0
        %3245 = vmatprep.subr.mxu0 0.0
        %3246 = vmatpush1.msra.mxu0 0.0
        %3247 = vmatprep.subr.mxu0 0.0
        %3248 = vmatpush1.msra.mxu0 0.0
        %3249 = vmatprep.subr.mxu0 0.0
        %3250 = vmatpush1.msra.mxu0 0.0
        %3251 = vmatprep.subr.mxu0 0.0
        %3252 = vmatpush1.msra.mxu0 0.0
        %3253 = vmatprep.subr.mxu0 0.0
        %3254 = vmatpush1.msra.mxu0 0.0
        %3255 = vmatprep.subr.mxu0 0.0
        %3256 = vmatpush1.msra.mxu0 0.0
        %3257 = vmatprep.subr.mxu0 0.0
        %3258 = vmatpush1.msra.mxu0 0.0
        %3259 = vmatprep.subr.mxu0 0.0
        %3260 = vmatpush1.msra.mxu0 0.0
        %3261 = vmatprep.subr.mxu0 0.0
        %3262 = vmatpush1.msra.mxu0 0.0
        %3263 = vmatprep.subr.mxu0 0.0
        %3264 = vmatpush1.msra.mxu0 0.0
        %3265 = vmatprep.subr.mxu0 0.0
        %3266 = vmatpush1.msra.mxu0 0.0
        %3267 = vmatprep.subr.mxu0 0.0
        %3268 = vmatpush1.msra.mxu0 0.0
        %3269 = vmatprep.subr.mxu0 0.0
        %3270 = vmatpush1.msra.mxu0 0.0
        %3271 = vmatprep.subr.mxu0 0.0
        %3272 = vmatpush1.msra.mxu0 0.0
        %3273 = vmatprep.subr.mxu0 0.0
        %3274 = vmatpush1.msra.mxu0 0.0
        %3275 = vmatprep.subr.mxu0 0.0
        %3276 = vmatpush1.msra.mxu0 0.0
        %3277 = vmatprep.subr.mxu0 0.0
        %3278 = vmatpush1.msra.mxu0 0.0
        %3279 = vmatprep.subr.mxu0 0.0
        %3280 = vmatpush1.msra.mxu0 0.0
        %3281 = vmatprep.subr.mxu0 0.0
        %3282 = vmatpush1.msra.mxu0 0.0
        %3283 = vmatprep.subr.mxu0 0.0
        %3284 = vmatpush1.msra.mxu0 0.0
        %3285 = vmatprep.subr.mxu0 0.0
        %3286 = vmatpush1.msra.mxu0 0.0
        %3287 = vmatprep.subr.mxu0 0.0
        %3288 = vmatpush1.msra.mxu0 0.0
        %3289 = vmatprep.mubr.f32.mxu0 0.0
        %v3290 = vand.u32 %v2891, 4294901760
        %v3291 = vsub.f32 %v2891, %v3290
        %v3292 = vand.u32 %v3291, 4294901760
        %3293 = vmatmul.mubr.f32.gmra.mrb[0].mxu0 %v3292
        %v3294 = vpop.f32.mrb[0].mxu0
        %v3295 = vadd.f32 %v3197, %v3294
        %v3296 = vpop.f32.mrb[0].mxu0
        %3297 = vmatprep.mubr.f32.mxu0 0.0
        %v3298 = vand.u32 %v2894, 4294901760
        %v3299 = vsub.f32 %v2894, %v3298
        %v3300 = vand.u32 %v3299, 4294901760
        %3301 = vmatmul.mubr.f32.gmra.mrb[0].mxu0 %v3300
        %v3302 = vpop.f32.mrb[0].mxu0
        %v3303 = vadd.f32 %v3204, %v3302
        %v3304 = vpop.f32.mrb[0].mxu0
        %3305 = vmatprep.mubr.f32.mxu0 0.0
        %v3306 = vand.u32 %v2897, 4294901760
        %v3307 = vsub.f32 %v2897, %v3306
        %v3308 = vand.u32 %v3307, 4294901760
        %3309 = vmatmul.mubr.f32.gmra.mrb[0].mxu0 %v3308
        %v3310 = vpop.f32.mrb[0].mxu0
        %v3311 = vadd.f32 %v3211, %v3310
        %v3312 = vpop.f32.mrb[0].mxu0
        %3313 = vmatprep.mubr.f32.mxu0 0.0
        %v3314 = vand.u32 %v2900, 4294901760
        %v3315 = vsub.f32 %v2900, %v3314
        %v3316 = vand.u32 %v3315, 4294901760
        %3317 = vmatmul.mubr.f32.gmra.mrb[0].mxu0 %v3316
        %v3318 = vpop.f32.mrb[0].mxu0
        %v3319 = vadd.f32 %v3218, %v3318
        %v3320 = vpop.f32.mrb[0].mxu0
        %3321 = vdwg.mxu0
        %3322 = vmatprep.subr.mxu0 0.0
        %v3323 = vand.u32 %v2866, 4294901760
        %v3324 = vsub.f32 %v2866, %v3323
        %v3325 = vand.u32 %v3324, 4294901760
        %3326 = vmatpush1.msra.mxu0 %v3325
        %3327 = vmatprep.subr.mxu0 0.0
        %v3328 = vand.u32 %v2867, 4294901760
        %v3329 = vsub.f32 %v2867, %v3328
        %v3330 = vand.u32 %v3329, 4294901760
        %3331 = vmatpush1.msra.mxu0 %v3330
        %3332 = vmatprep.subr.mxu0 0.0
        %v3333 = vand.u32 %v2868, 4294901760
        %v3334 = vsub.f32 %v2868, %v3333
        %v3335 = vand.u32 %v3334, 4294901760
        %3336 = vmatpush1.msra.mxu0 %v3335
        %3337 = vmatprep.subr.mxu0 0.0
        %v3338 = vand.u32 %v2869, 4294901760
        %v3339 = vsub.f32 %v2869, %v3338
        %v3340 = vand.u32 %v3339, 4294901760
        %3341 = vmatpush1.msra.mxu0 %v3340
        %3342 = vmatprep.subr.mxu0 0.0
        %3343 = vmatpush1.msra.mxu0 0.0
        %3344 = vmatprep.subr.mxu0 0.0
        %3345 = vmatpush1.msra.mxu0 0.0
        %3346 = vmatprep.subr.mxu0 0.0
        %3347 = vmatpush1.msra.mxu0 0.0
        %3348 = vmatprep.subr.mxu0 0.0
        %3349 = vmatpush1.msra.mxu0 0.0
        %3350 = vmatprep.subr.mxu0 0.0
        %3351 = vmatpush1.msra.mxu0 0.0
        %3352 = vmatprep.subr.mxu0 0.0
        %3353 = vmatpush1.msra.mxu0 0.0
        %3354 = vmatprep.subr.mxu0 0.0
        %3355 = vmatpush1.msra.mxu0 0.0
        %3356 = vmatprep.subr.mxu0 0.0
        %3357 = vmatpush1.msra.mxu0 0.0
        %3358 = vmatprep.subr.mxu0 0.0
        %3359 = vmatpush1.msra.mxu0 0.0
        %3360 = vmatprep.subr.mxu0 0.0
        %3361 = vmatpush1.msra.mxu0 0.0
        %3362 = vmatprep.subr.mxu0 0.0
        %3363 = vmatpush1.msra.mxu0 0.0
        %3364 = vmatprep.subr.mxu0 0.0
        %3365 = vmatpush1.msra.mxu0 0.0
        %3366 = vmatprep.subr.mxu0 0.0
        %3367 = vmatpush1.msra.mxu0 0.0
        %3368 = vmatprep.subr.mxu0 0.0
        %3369 = vmatpush1.msra.mxu0 0.0
        %3370 = vmatprep.subr.mxu0 0.0
        %3371 = vmatpush1.msra.mxu0 0.0
        %3372 = vmatprep.subr.mxu0 0.0
        %3373 = vmatpush1.msra.mxu0 0.0
        %3374 = vmatprep.subr.mxu0 0.0
        %3375 = vmatpush1.msra.mxu0 0.0
        %3376 = vmatprep.subr.mxu0 0.0
        %3377 = vmatpush1.msra.mxu0 0.0
        %3378 = vmatprep.subr.mxu0 0.0
        %3379 = vmatpush1.msra.mxu0 0.0
        %3380 = vmatprep.subr.mxu0 0.0
        %3381 = vmatpush1.msra.mxu0 0.0
        %3382 = vmatprep.subr.mxu0 0.0
        %3383 = vmatpush1.msra.mxu0 0.0
        %3384 = vmatprep.subr.mxu0 0.0
        %3385 = vmatpush1.msra.mxu0 0.0
        %3386 = vmatprep.subr.mxu0 0.0
        %3387 = vmatpush1.msra.mxu0 0.0
        %3388 = vmatprep.subr.mxu0 0.0
        %3389 = vmatpush1.msra.mxu0 0.0
        %3390 = vmatprep.subr.mxu0 0.0
        %3391 = vmatpush1.msra.mxu0 0.0
        %3392 = vmatprep.subr.mxu0 0.0
        %3393 = vmatpush1.msra.mxu0 0.0
        %3394 = vmatprep.subr.mxu0 0.0
        %3395 = vmatpush1.msra.mxu0 0.0
        %3396 = vmatprep.subr.mxu0 0.0
        %3397 = vmatpush1.msra.mxu0 0.0
        %3398 = vmatprep.mubr.f32.mxu0 0.0
        %v3399 = vand.u32 %v2891, 4294901760
        %3400 = vmatmul.mubr.f32.gmra.mrb[0].mxu0 %v3399
        %v3401 = vpop.f32.mrb[0].mxu0
        %v3402 = vadd.f32 %v3295, %v3401
        %v3403 = vpop.f32.mrb[0].mxu0
        %3404 = vmatprep.mubr.f32.mxu0 0.0
        %v3405 = vand.u32 %v2894, 4294901760
        %3406 = vmatmul.mubr.f32.gmra.mrb[0].mxu0 %v3405
        %v3407 = vpop.f32.mrb[0].mxu0
        %v3408 = vadd.f32 %v3303, %v3407
        %v3409 = vpop.f32.mrb[0].mxu0
        %3410 = vmatprep.mubr.f32.mxu0 0.0
        %v3411 = vand.u32 %v2897, 4294901760
        %3412 = vmatmul.mubr.f32.gmra.mrb[0].mxu0 %v3411
        %v3413 = vpop.f32.mrb[0].mxu0
        %v3414 = vadd.f32 %v3311, %v3413
        %v3415 = vpop.f32.mrb[0].mxu0
        %3416 = vmatprep.mubr.f32.mxu0 0.0
        %v3417 = vand.u32 %v2900, 4294901760
        %3418 = vmatmul.mubr.f32.gmra.mrb[0].mxu0 %v3417
        %v3419 = vpop.f32.mrb[0].mxu0
        %v3420 = vadd.f32 %v3319, %v3419
        %v3421 = vpop.f32.mrb[0].mxu0
        %3422 = vdwg.mxu0
        %3423 = vmatprep.subr.mxu0 0.0
        %v3424 = vand.u32 %v2866, 4294901760
        %3425 = vmatpush1.msra.mxu0 %v3424
        %3426 = vmatprep.subr.mxu0 0.0
        %v3427 = vand.u32 %v2867, 4294901760
        %3428 = vmatpush1.msra.mxu0 %v3427
        %3429 = vmatprep.subr.mxu0 0.0
        %v3430 = vand.u32 %v2868, 4294901760
        %3431 = vmatpush1.msra.mxu0 %v3430
        %3432 = vmatprep.subr.mxu0 0.0
        %v3433 = vand.u32 %v2869, 4294901760
        %3434 = vmatpush1.msra.mxu0 %v3433
        %3435 = vmatprep.subr.mxu0 0.0
        %3436 = vmatpush1.msra.mxu0 0.0
        %3437 = vmatprep.subr.mxu0 0.0
        %3438 = vmatpush1.msra.mxu0 0.0
        %3439 = vmatprep.subr.mxu0 0.0
        %3440 = vmatpush1.msra.mxu0 0.0
        %3441 = vmatprep.subr.mxu0 0.0
        %3442 = vmatpush1.msra.mxu0 0.0
        %3443 = vmatprep.subr.mxu0 0.0
        %3444 = vmatpush1.msra.mxu0 0.0
        %3445 = vmatprep.subr.mxu0 0.0
        %3446 = vmatpush1.msra.mxu0 0.0
        %3447 = vmatprep.subr.mxu0 0.0
        %3448 = vmatpush1.msra.mxu0 0.0
        %3449 = vmatprep.subr.mxu0 0.0
        %3450 = vmatpush1.msra.mxu0 0.0
        %3451 = vmatprep.subr.mxu0 0.0
        %3452 = vmatpush1.msra.mxu0 0.0
        %3453 = vmatprep.subr.mxu0 0.0
        %3454 = vmatpush1.msra.mxu0 0.0
        %3455 = vmatprep.subr.mxu0 0.0
        %3456 = vmatpush1.msra.mxu0 0.0
        %3457 = vmatprep.subr.mxu0 0.0
        %3458 = vmatpush1.msra.mxu0 0.0
        %3459 = vmatprep.subr.mxu0 0.0
        %3460 = vmatpush1.msra.mxu0 0.0
        %3461 = vmatprep.subr.mxu0 0.0
        %3462 = vmatpush1.msra.mxu0 0.0
        %3463 = vmatprep.subr.mxu0 0.0
        %3464 = vmatpush1.msra.mxu0 0.0
        %3465 = vmatprep.subr.mxu0 0.0
        %3466 = vmatpush1.msra.mxu0 0.0
        %3467 = vmatprep.subr.mxu0 0.0
        %3468 = vmatpush1.msra.mxu0 0.0
        %3469 = vmatprep.subr.mxu0 0.0
        %3470 = vmatpush1.msra.mxu0 0.0
        %3471 = vmatprep.subr.mxu0 0.0
        %3472 = vmatpush1.msra.mxu0 0.0
        %3473 = vmatprep.subr.mxu0 0.0
        %3474 = vmatpush1.msra.mxu0 0.0
        %3475 = vmatprep.subr.mxu0 0.0
        %3476 = vmatpush1.msra.mxu0 0.0
        %3477 = vmatprep.subr.mxu0 0.0
        %3478 = vmatpush1.msra.mxu0 0.0
        %3479 = vmatprep.subr.mxu0 0.0
        %3480 = vmatpush1.msra.mxu0 0.0
        %3481 = vmatprep.subr.mxu0 0.0
        %3482 = vmatpush1.msra.mxu0 0.0
        %3483 = vmatprep.subr.mxu0 0.0
        %3484 = vmatpush1.msra.mxu0 0.0
        %3485 = vmatprep.subr.mxu0 0.0
        %3486 = vmatpush1.msra.mxu0 0.0
        %3487 = vmatprep.subr.mxu0 0.0
        %3488 = vmatpush1.msra.mxu0 0.0
        %3489 = vmatprep.subr.mxu0 0.0
        %3490 = vmatpush1.msra.mxu0 0.0
        %3491 = vmatprep.mubr.f32.mxu0 0.0
        %v3492 = vand.u32 %v2891, 4294901760
        %3493 = vmatmul.mubr.f32.gmra.mrb[0].mxu0 %v3492
        %v3494 = vpop.f32.mrb[0].mxu0
        %v3495 = vadd.f32 %v3402, %v3494
        %v3496 = vpop.f32.mrb[0].mxu0
        %3497 = vmatprep.mubr.f32.mxu0 0.0
        %v3498 = vand.u32 %v2894, 4294901760
        %3499 = vmatmul.mubr.f32.gmra.mrb[0].mxu0 %v3498
        %v3500 = vpop.f32.mrb[0].mxu0
        %v3501 = vadd.f32 %v3408, %v3500
        %v3502 = vpop.f32.mrb[0].mxu0
        %3503 = vmatprep.mubr.f32.mxu0 0.0
        %v3504 = vand.u32 %v2897, 4294901760
        %3505 = vmatmul.mubr.f32.gmra.mrb[0].mxu0 %v3504
        %v3506 = vpop.f32.mrb[0].mxu0
        %v3507 = vadd.f32 %v3414, %v3506
        %v3508 = vpop.f32.mrb[0].mxu0
        %3509 = vmatprep.mubr.f32.mxu0 0.0
        %v3510 = vand.u32 %v2900, 4294901760
        %3511 = vmatmul.mubr.f32.gmra.mrb[0].mxu0 %v3510
        %v3512 = vpop.f32.mrb[0].mxu0
        %v3513 = vadd.f32 %v3420, %v3512
        %v3514 = vpop.f32.mrb[0].mxu0
        %3515 = vdwg.mxu0
        %v3516 = vmax.f32 %v3495, 0.0
        %v3517 = vmax.f32 %v3501, 0.0
        %v3518 = vmax.f32 %v3507, 0.0
        %v3519 = vmax.f32 %v3513, 0.0
        %3521 = vset.pattern.permute.xlu0 0
        %3522 = vperm.xlu0 %3521, %v469
        %v3523 = vpop.permute.xlu0 %3522
        %v3525 = vrot.slane %v455, 1
        %v3526 = vsel %vm2353, %v3525, 0
        %3528 = vmatprep.subr.mxu0 0.0
        %v3529 = vand.u32 %v3516, 4294901760
        %3530 = vmatpush1.msra.mxu0 %v3529
        %3531 = vmatprep.subr.mxu0 0.0
        %v3532 = vand.u32 %v3517, 4294901760
        %3533 = vmatpush1.msra.mxu0 %v3532
        %3534 = vmatprep.subr.mxu0 0.0
        %v3535 = vand.u32 %v3518, 4294901760
        %3536 = vmatpush1.msra.mxu0 %v3535
        %3537 = vmatprep.subr.mxu0 0.0
        %v3538 = vand.u32 %v3519, 4294901760
        %3539 = vmatpush1.msra.mxu0 %v3538
        %3540 = vmatprep.subr.mxu0 0.0
        %3541 = vmatpush1.msra.mxu0 0.0
        %3542 = vmatprep.subr.mxu0 0.0
        %3543 = vmatpush1.msra.mxu0 0.0
        %3544 = vmatprep.subr.mxu0 0.0
        %3545 = vmatpush1.msra.mxu0 0.0
        %3546 = vmatprep.subr.mxu0 0.0
        %3547 = vmatpush1.msra.mxu0 0.0
        %3548 = vmatprep.subr.mxu0 0.0
        %3549 = vmatpush1.msra.mxu0 0.0
        %3550 = vmatprep.subr.mxu0 0.0
        %3551 = vmatpush1.msra.mxu0 0.0
        %3552 = vmatprep.subr.mxu0 0.0
        %3553 = vmatpush1.msra.mxu0 0.0
        %3554 = vmatprep.subr.mxu0 0.0
        %3555 = vmatpush1.msra.mxu0 0.0
        %3556 = vmatprep.subr.mxu0 0.0
        %3557 = vmatpush1.msra.mxu0 0.0
        %3558 = vmatprep.subr.mxu0 0.0
        %3559 = vmatpush1.msra.mxu0 0.0
        %3560 = vmatprep.subr.mxu0 0.0
        %3561 = vmatpush1.msra.mxu0 0.0
        %3562 = vmatprep.subr.mxu0 0.0
        %3563 = vmatpush1.msra.mxu0 0.0
        %3564 = vmatprep.subr.mxu0 0.0
        %3565 = vmatpush1.msra.mxu0 0.0
        %3566 = vmatprep.subr.mxu0 0.0
        %3567 = vmatpush1.msra.mxu0 0.0
        %3568 = vmatprep.subr.mxu0 0.0
        %3569 = vmatpush1.msra.mxu0 0.0
        %3570 = vmatprep.subr.mxu0 0.0
        %3571 = vmatpush1.msra.mxu0 0.0
        %3572 = vmatprep.subr.mxu0 0.0
        %3573 = vmatpush1.msra.mxu0 0.0
        %3574 = vmatprep.subr.mxu0 0.0
        %3575 = vmatpush1.msra.mxu0 0.0
        %3576 = vmatprep.subr.mxu0 0.0
        %3577 = vmatpush1.msra.mxu0 0.0
        %3578 = vmatprep.subr.mxu0 0.0
        %3579 = vmatpush1.msra.mxu0 0.0
        %3580 = vmatprep.subr.mxu0 0.0
        %3581 = vmatpush1.msra.mxu0 0.0
        %3582 = vmatprep.subr.mxu0 0.0
        %3583 = vmatpush1.msra.mxu0 0.0
        %3584 = vmatprep.subr.mxu0 0.0
        %3585 = vmatpush1.msra.mxu0 0.0
        %3586 = vmatprep.subr.mxu0 0.0
        %3587 = vmatpush1.msra.mxu0 0.0
        %3588 = vmatprep.subr.mxu0 0.0
        %3589 = vmatpush1.msra.mxu0 0.0
        %3590 = vmatprep.subr.mxu0 0.0
        %3591 = vmatpush1.msra.mxu0 0.0
        %3592 = vmatprep.subr.mxu0 0.0
        %3593 = vmatpush1.msra.mxu0 0.0
        %3594 = vmatprep.subr.mxu0 0.0
        %3595 = vmatpush1.msra.mxu0 0.0
        %3596 = vmatprep.mubr.f32.mxu0 0.0
        %v3597 = vand.u32 %v3526, 4294901760
        %v3598 = vsub.f32 %v3526, %v3597
        %v3599 = vand.u32 %v3598, 4294901760
        %v3600 = vsub.f32 %v3598, %v3599
        %v3601 = vand.u32 %v3600, 4294901760
        %3602 = vmatmul.mubr.f32.gmra.mrb[0].mxu0 %v3601
        %v3603 = vpop.f32.mrb[0].mxu0
        %v3604 = vadd.f32 %v3523, %v3603
        %v3605 = vpop.f32.mrb[0].mxu0
        %3606 = vdwg.mxu0
        %3607 = vmatprep.subr.mxu0 0.0
        %v3608 = vand.u32 %v3516, 4294901760
        %v3609 = vsub.f32 %v3516, %v3608
        %v3610 = vand.u32 %v3609, 4294901760
        %v3611 = vsub.f32 %v3609, %v3610
        %v3612 = vand.u32 %v3611, 4294901760
        %3613 = vmatpush1.msra.mxu0 %v3612
        %3614 = vmatprep.subr.mxu0 0.0
        %v3615 = vand.u32 %v3517, 4294901760
        %v3616 = vsub.f32 %v3517, %v3615
        %v3617 = vand.u32 %v3616, 4294901760
        %v3618 = vsub.f32 %v3616, %v3617
        %v3619 = vand.u32 %v3618, 4294901760
        %3620 = vmatpush1.msra.mxu0 %v3619
        %3621 = vmatprep.subr.mxu0 0.0
        %v3622 = vand.u32 %v3518, 4294901760
        %v3623 = vsub.f32 %v3518, %v3622
        %v3624 = vand.u32 %v3623, 4294901760
        %v3625 = vsub.f32 %v3623, %v3624
        %v3626 = vand.u32 %v3625, 4294901760
        %3627 = vmatpush1.msra.mxu0 %v3626
        %3628 = vmatprep.subr.mxu0 0.0
        %v3629 = vand.u32 %v3519, 4294901760
        %v3630 = vsub.f32 %v3519, %v3629
        %v3631 = vand.u32 %v3630, 4294901760
        %v3632 = vsub.f32 %v3630, %v3631
        %v3633 = vand.u32 %v3632, 4294901760
        %3634 = vmatpush1.msra.mxu0 %v3633
        %3635 = vmatprep.subr.mxu0 0.0
        %3636 = vmatpush1.msra.mxu0 0.0
        %3637 = vmatprep.subr.mxu0 0.0
        %3638 = vmatpush1.msra.mxu0 0.0
        %3639 = vmatprep.subr.mxu0 0.0
        %3640 = vmatpush1.msra.mxu0 0.0
        %3641 = vmatprep.subr.mxu0 0.0
        %3642 = vmatpush1.msra.mxu0 0.0
        %3643 = vmatprep.subr.mxu0 0.0
        %3644 = vmatpush1.msra.mxu0 0.0
        %3645 = vmatprep.subr.mxu0 0.0
        %3646 = vmatpush1.msra.mxu0 0.0
        %3647 = vmatprep.subr.mxu0 0.0
        %3648 = vmatpush1.msra.mxu0 0.0
        %3649 = vmatprep.subr.mxu0 0.0
        %3650 = vmatpush1.msra.mxu0 0.0
        %3651 = vmatprep.subr.mxu0 0.0
        %3652 = vmatpush1.msra.mxu0 0.0
        %3653 = vmatprep.subr.mxu0 0.0
        %3654 = vmatpush1.msra.mxu0 0.0
        %3655 = vmatprep.subr.mxu0 0.0
        %3656 = vmatpush1.msra.mxu0 0.0
        %3657 = vmatprep.subr.mxu0 0.0
        %3658 = vmatpush1.msra.mxu0 0.0
        %3659 = vmatprep.subr.mxu0 0.0
        %3660 = vmatpush1.msra.mxu0 0.0
        %3661 = vmatprep.subr.mxu0 0.0
        %3662 = vmatpush1.msra.mxu0 0.0
        %3663 = vmatprep.subr.mxu0 0.0
        %3664 = vmatpush1.msra.mxu0 0.0
        %3665 = vmatprep.subr.mxu0 0.0
        %3666 = vmatpush1.msra.mxu0 0.0
        %3667 = vmatprep.subr.mxu0 0.0
        %3668 = vmatpush1.msra.mxu0 0.0
        %3669 = vmatprep.subr.mxu0 0.0
        %3670 = vmatpush1.msra.mxu0 0.0
        %3671 = vmatprep.subr.mxu0 0.0
        %3672 = vmatpush1.msra.mxu0 0.0
        %3673 = vmatprep.subr.mxu0 0.0
        %3674 = vmatpush1.msra.mxu0 0.0
        %3675 = vmatprep.subr.mxu0 0.0
        %3676 = vmatpush1.msra.mxu0 0.0
        %3677 = vmatprep.subr.mxu0 0.0
        %3678 = vmatpush1.msra.mxu0 0.0
        %3679 = vmatprep.subr.mxu0 0.0
        %3680 = vmatpush1.msra.mxu0 0.0
        %3681 = vmatprep.subr.mxu0 0.0
        %3682 = vmatpush1.msra.mxu0 0.0
        %3683 = vmatprep.subr.mxu0 0.0
        %3684 = vmatpush1.msra.mxu0 0.0
        %3685 = vmatprep.subr.mxu0 0.0
        %3686 = vmatpush1.msra.mxu0 0.0
        %3687 = vmatprep.subr.mxu0 0.0
        %3688 = vmatpush1.msra.mxu0 0.0
        %3689 = vmatprep.subr.mxu0 0.0
        %3690 = vmatpush1.msra.mxu0 0.0
        %3691 = vmatprep.mubr.f32.mxu0 0.0
        %v3692 = vand.u32 %v3526, 4294901760
        %3693 = vmatmul.mubr.f32.gmra.mrb[0].mxu0 %v3692
        %v3694 = vpop.f32.mrb[0].mxu0
        %v3695 = vadd.f32 %v3604, %v3694
        %v3696 = vpop.f32.mrb[0].mxu0
        %3697 = vdwg.mxu0
        %3698 = vmatprep.subr.mxu0 0.0
        %v3699 = vand.u32 %v3516, 4294901760
        %v3700 = vsub.f32 %v3516, %v3699
        %3701 = vmatpush1.msra.mxu0 %v3700
        %3702 = vmatprep.subr.mxu0 0.0
        %v3703 = vand.u32 %v3517, 4294901760
        %v3704 = vsub.f32 %v3517, %v3703
        %3705 = vmatpush1.msra.mxu0 %v3704
        %3706 = vmatprep.subr.mxu0 0.0
        %v3707 = vand.u32 %v3518, 4294901760
        %v3708 = vsub.f32 %v3518, %v3707
        %3709 = vmatpush1.msra.mxu0 %v3708
        %3710 = vmatprep.subr.mxu0 0.0
        %v3711 = vand.u32 %v3519, 4294901760
        %v3712 = vsub.f32 %v3519, %v3711
        %3713 = vmatpush1.msra.mxu0 %v3712
        %3714 = vmatprep.subr.mxu0 0.0
        %3715 = vmatpush1.msra.mxu0 0.0
        %3716 = vmatprep.subr.mxu0 0.0
        %3717 = vmatpush1.msra.mxu0 0.0
        %3718 = vmatprep.subr.mxu0 0.0
        %3719 = vmatpush1.msra.mxu0 0.0
        %3720 = vmatprep.subr.mxu0 0.0
        %3721 = vmatpush1.msra.mxu0 0.0
        %3722 = vmatprep.subr.mxu0 0.0
        %3723 = vmatpush1.msra.mxu0 0.0
        %3724 = vmatprep.subr.mxu0 0.0
        %3725 = vmatpush1.msra.mxu0 0.0
        %3726 = vmatprep.subr.mxu0 0.0
        %3727 = vmatpush1.msra.mxu0 0.0
        %3728 = vmatprep.subr.mxu0 0.0
        %3729 = vmatpush1.msra.mxu0 0.0
        %3730 = vmatprep.subr.mxu0 0.0
        %3731 = vmatpush1.msra.mxu0 0.0
        %3732 = vmatprep.subr.mxu0 0.0
        %3733 = vmatpush1.msra.mxu0 0.0
        %3734 = vmatprep.subr.mxu0 0.0
        %3735 = vmatpush1.msra.mxu0 0.0
        %3736 = vmatprep.subr.mxu0 0.0
        %3737 = vmatpush1.msra.mxu0 0.0
        %3738 = vmatprep.subr.mxu0 0.0
        %3739 = vmatpush1.msra.mxu0 0.0
        %3740 = vmatprep.subr.mxu0 0.0
        %3741 = vmatpush1.msra.mxu0 0.0
        %3742 = vmatprep.subr.mxu0 0.0
        %3743 = vmatpush1.msra.mxu0 0.0
        %3744 = vmatprep.subr.mxu0 0.0
        %3745 = vmatpush1.msra.mxu0 0.0
        %3746 = vmatprep.subr.mxu0 0.0
        %3747 = vmatpush1.msra.mxu0 0.0
        %3748 = vmatprep.subr.mxu0 0.0
        %3749 = vmatpush1.msra.mxu0 0.0
        %3750 = vmatprep.subr.mxu0 0.0
        %3751 = vmatpush1.msra.mxu0 0.0
        %3752 = vmatprep.subr.mxu0 0.0
        %3753 = vmatpush1.msra.mxu0 0.0
        %3754 = vmatprep.subr.mxu0 0.0
        %3755 = vmatpush1.msra.mxu0 0.0
        %3756 = vmatprep.subr.mxu0 0.0
        %3757 = vmatpush1.msra.mxu0 0.0
        %3758 = vmatprep.subr.mxu0 0.0
        %3759 = vmatpush1.msra.mxu0 0.0
        %3760 = vmatprep.subr.mxu0 0.0
        %3761 = vmatpush1.msra.mxu0 0.0
        %3762 = vmatprep.subr.mxu0 0.0
        %3763 = vmatpush1.msra.mxu0 0.0
        %3764 = vmatprep.subr.mxu0 0.0
        %3765 = vmatpush1.msra.mxu0 0.0
        %3766 = vmatprep.subr.mxu0 0.0
        %3767 = vmatpush1.msra.mxu0 0.0
        %3768 = vmatprep.subr.mxu0 0.0
        %3769 = vmatpush1.msra.mxu0 0.0
        %3770 = vmatprep.mubr.f32.mxu0 0.0
        %v3771 = vand.u32 %v3526, 4294901760
        %v3772 = vsub.f32 %v3526, %v3771
        %3773 = vmatmul.mubr.f32.gmra.mrb[0].mxu0 %v3772
        %v3774 = vpop.f32.mrb[0].mxu0
        %v3775 = vadd.f32 %v3695, %v3774
        %v3776 = vpop.f32.mrb[0].mxu0
        %3777 = vdwg.mxu0
        %3778 = vmatprep.subr.mxu0 0.0
        %v3779 = vand.u32 %v3516, 4294901760
        %3780 = vmatpush1.msra.mxu0 %v3779
        %3781 = vmatprep.subr.mxu0 0.0
        %v3782 = vand.u32 %v3517, 4294901760
        %3783 = vmatpush1.msra.mxu0 %v3782
        %3784 = vmatprep.subr.mxu0 0.0
        %v3785 = vand.u32 %v3518, 4294901760
        %3786 = vmatpush1.msra.mxu0 %v3785
        %3787 = vmatprep.subr.mxu0 0.0
        %v3788 = vand.u32 %v3519, 4294901760
        %3789 = vmatpush1.msra.mxu0 %v3788
        %3790 = vmatprep.subr.mxu0 0.0
        %3791 = vmatpush1.msra.mxu0 0.0
        %3792 = vmatprep.subr.mxu0 0.0
        %3793 = vmatpush1.msra.mxu0 0.0
        %3794 = vmatprep.subr.mxu0 0.0
        %3795 = vmatpush1.msra.mxu0 0.0
        %3796 = vmatprep.subr.mxu0 0.0
        %3797 = vmatpush1.msra.mxu0 0.0
        %3798 = vmatprep.subr.mxu0 0.0
        %3799 = vmatpush1.msra.mxu0 0.0
        %3800 = vmatprep.subr.mxu0 0.0
        %3801 = vmatpush1.msra.mxu0 0.0
        %3802 = vmatprep.subr.mxu0 0.0
        %3803 = vmatpush1.msra.mxu0 0.0
        %3804 = vmatprep.subr.mxu0 0.0
        %3805 = vmatpush1.msra.mxu0 0.0
        %3806 = vmatprep.subr.mxu0 0.0
        %3807 = vmatpush1.msra.mxu0 0.0
        %3808 = vmatprep.subr.mxu0 0.0
        %3809 = vmatpush1.msra.mxu0 0.0
        %3810 = vmatprep.subr.mxu0 0.0
        %3811 = vmatpush1.msra.mxu0 0.0
        %3812 = vmatprep.subr.mxu0 0.0
        %3813 = vmatpush1.msra.mxu0 0.0
        %3814 = vmatprep.subr.mxu0 0.0
        %3815 = vmatpush1.msra.mxu0 0.0
        %3816 = vmatprep.subr.mxu0 0.0
        %3817 = vmatpush1.msra.mxu0 0.0
        %3818 = vmatprep.subr.mxu0 0.0
        %3819 = vmatpush1.msra.mxu0 0.0
        %3820 = vmatprep.subr.mxu0 0.0
        %3821 = vmatpush1.msra.mxu0 0.0
        %3822 = vmatprep.subr.mxu0 0.0
        %3823 = vmatpush1.msra.mxu0 0.0
        %3824 = vmatprep.subr.mxu0 0.0
        %3825 = vmatpush1.msra.mxu0 0.0
        %3826 = vmatprep.subr.mxu0 0.0
        %3827 = vmatpush1.msra.mxu0 0.0
        %3828 = vmatprep.subr.mxu0 0.0
        %3829 = vmatpush1.msra.mxu0 0.0
        %3830 = vmatprep.subr.mxu0 0.0
        %3831 = vmatpush1.msra.mxu0 0.0
        %3832 = vmatprep.subr.mxu0 0.0
        %3833 = vmatpush1.msra.mxu0 0.0
        %3834 = vmatprep.subr.mxu0 0.0
        %3835 = vmatpush1.msra.mxu0 0.0
        %3836 = vmatprep.subr.mxu0 0.0
        %3837 = vmatpush1.msra.mxu0 0.0
        %3838 = vmatprep.subr.mxu0 0.0
        %3839 = vmatpush1.msra.mxu0 0.0
        %3840 = vmatprep.subr.mxu0 0.0
        %3841 = vmatpush1.msra.mxu0 0.0
        %3842 = vmatprep.subr.mxu0 0.0
        %3843 = vmatpush1.msra.mxu0 0.0
        %3844 = vmatprep.subr.mxu0 0.0
        %3845 = vmatpush1.msra.mxu0 0.0
        %3846 = vmatprep.mubr.f32.mxu0 0.0
        %v3847 = vand.u32 %v3526, 4294901760
        %v3848 = vsub.f32 %v3526, %v3847
        %v3849 = vand.u32 %v3848, 4294901760
        %3850 = vmatmul.mubr.f32.gmra.mrb[0].mxu0 %v3849
        %v3851 = vpop.f32.mrb[0].mxu0
        %v3852 = vadd.f32 %v3775, %v3851
        %v3853 = vpop.f32.mrb[0].mxu0
        %3854 = vdwg.mxu0
        %3855 = vmatprep.subr.mxu0 0.0
        %v3856 = vand.u32 %v3516, 4294901760
        %v3857 = vsub.f32 %v3516, %v3856
        %v3858 = vand.u32 %v3857, 4294901760
        %3859 = vmatpush1.msra.mxu0 %v3858
        %3860 = vmatprep.subr.mxu0 0.0
        %v3861 = vand.u32 %v3517, 4294901760
        %v3862 = vsub.f32 %v3517, %v3861
        %v3863 = vand.u32 %v3862, 4294901760
        %3864 = vmatpush1.msra.mxu0 %v3863
        %3865 = vmatprep.subr.mxu0 0.0
        %v3866 = vand.u32 %v3518, 4294901760
        %v3867 = vsub.f32 %v3518, %v3866
        %v3868 = vand.u32 %v3867, 4294901760
        %3869 = vmatpush1.msra.mxu0 %v3868
        %3870 = vmatprep.subr.mxu0 0.0
        %v3871 = vand.u32 %v3519, 4294901760
        %v3872 = vsub.f32 %v3519, %v3871
        %v3873 = vand.u32 %v3872, 4294901760
        %3874 = vmatpush1.msra.mxu0 %v3873
        %3875 = vmatprep.subr.mxu0 0.0
        %3876 = vmatpush1.msra.mxu0 0.0
        %3877 = vmatprep.subr.mxu0 0.0
        %3878 = vmatpush1.msra.mxu0 0.0
        %3879 = vmatprep.subr.mxu0 0.0
        %3880 = vmatpush1.msra.mxu0 0.0
        %3881 = vmatprep.subr.mxu0 0.0
        %3882 = vmatpush1.msra.mxu0 0.0
        %3883 = vmatprep.subr.mxu0 0.0
        %3884 = vmatpush1.msra.mxu0 0.0
        %3885 = vmatprep.subr.mxu0 0.0
        %3886 = vmatpush1.msra.mxu0 0.0
        %3887 = vmatprep.subr.mxu0 0.0
        %3888 = vmatpush1.msra.mxu0 0.0
        %3889 = vmatprep.subr.mxu0 0.0
        %3890 = vmatpush1.msra.mxu0 0.0
        %3891 = vmatprep.subr.mxu0 0.0
        %3892 = vmatpush1.msra.mxu0 0.0
        %3893 = vmatprep.subr.mxu0 0.0
        %3894 = vmatpush1.msra.mxu0 0.0
        %3895 = vmatprep.subr.mxu0 0.0
        %3896 = vmatpush1.msra.mxu0 0.0
        %3897 = vmatprep.subr.mxu0 0.0
        %3898 = vmatpush1.msra.mxu0 0.0
        %3899 = vmatprep.subr.mxu0 0.0
        %3900 = vmatpush1.msra.mxu0 0.0
        %3901 = vmatprep.subr.mxu0 0.0
        %3902 = vmatpush1.msra.mxu0 0.0
        %3903 = vmatprep.subr.mxu0 0.0
        %3904 = vmatpush1.msra.mxu0 0.0
        %3905 = vmatprep.subr.mxu0 0.0
        %3906 = vmatpush1.msra.mxu0 0.0
        %3907 = vmatprep.subr.mxu0 0.0
        %3908 = vmatpush1.msra.mxu0 0.0
        %3909 = vmatprep.subr.mxu0 0.0
        %3910 = vmatpush1.msra.mxu0 0.0
        %3911 = vmatprep.subr.mxu0 0.0
        %3912 = vmatpush1.msra.mxu0 0.0
        %3913 = vmatprep.subr.mxu0 0.0
        %3914 = vmatpush1.msra.mxu0 0.0
        %3915 = vmatprep.subr.mxu0 0.0
        %3916 = vmatpush1.msra.mxu0 0.0
        %3917 = vmatprep.subr.mxu0 0.0
        %3918 = vmatpush1.msra.mxu0 0.0
        %3919 = vmatprep.subr.mxu0 0.0
        %3920 = vmatpush1.msra.mxu0 0.0
        %3921 = vmatprep.subr.mxu0 0.0
        %3922 = vmatpush1.msra.mxu0 0.0
        %3923 = vmatprep.subr.mxu0 0.0
        %3924 = vmatpush1.msra.mxu0 0.0
        %3925 = vmatprep.subr.mxu0 0.0
        %3926 = vmatpush1.msra.mxu0 0.0
        %3927 = vmatprep.subr.mxu0 0.0
        %3928 = vmatpush1.msra.mxu0 0.0
        %3929 = vmatprep.subr.mxu0 0.0
        %3930 = vmatpush1.msra.mxu0 0.0
        %3931 = vmatprep.mubr.f32.mxu0 0.0
        %v3932 = vand.u32 %v3526, 4294901760
        %3933 = vmatmul.mubr.f32.gmra.mrb[0].mxu0 %v3932
        %v3934 = vpop.f32.mrb[0].mxu0
        %v3935 = vadd.f32 %v3852, %v3934
        %v3936 = vpop.f32.mrb[0].mxu0
        %3937 = vdwg.mxu0
        %3938 = vmatprep.subr.mxu0 0.0
        %v3939 = vand.u32 %v3516, 4294901760
        %3940 = vmatpush1.msra.mxu0 %v3939
        %3941 = vmatprep.subr.mxu0 0.0
        %v3942 = vand.u32 %v3517, 4294901760
        %3943 = vmatpush1.msra.mxu0 %v3942
        %3944 = vmatprep.subr.mxu0 0.0
        %v3945 = vand.u32 %v3518, 4294901760
        %3946 = vmatpush1.msra.mxu0 %v3945
        %3947 = vmatprep.subr.mxu0 0.0
        %v3948 = vand.u32 %v3519, 4294901760
        %3949 = vmatpush1.msra.mxu0 %v3948
        %3950 = vmatprep.subr.mxu0 0.0
        %3951 = vmatpush1.msra.mxu0 0.0
        %3952 = vmatprep.subr.mxu0 0.0
        %3953 = vmatpush1.msra.mxu0 0.0
        %3954 = vmatprep.subr.mxu0 0.0
        %3955 = vmatpush1.msra.mxu0 0.0
        %3956 = vmatprep.subr.mxu0 0.0
        %3957 = vmatpush1.msra.mxu0 0.0
        %3958 = vmatprep.subr.mxu0 0.0
        %3959 = vmatpush1.msra.mxu0 0.0
        %3960 = vmatprep.subr.mxu0 0.0
        %3961 = vmatpush1.msra.mxu0 0.0
        %3962 = vmatprep.subr.mxu0 0.0
        %3963 = vmatpush1.msra.mxu0 0.0
        %3964 = vmatprep.subr.mxu0 0.0
        %3965 = vmatpush1.msra.mxu0 0.0
        %3966 = vmatprep.subr.mxu0 0.0
        %3967 = vmatpush1.msra.mxu0 0.0
        %3968 = vmatprep.subr.mxu0 0.0
        %3969 = vmatpush1.msra.mxu0 0.0
        %3970 = vmatprep.subr.mxu0 0.0
        %3971 = vmatpush1.msra.mxu0 0.0
        %3972 = vmatprep.subr.mxu0 0.0
        %3973 = vmatpush1.msra.mxu0 0.0
        %3974 = vmatprep.subr.mxu0 0.0
        %3975 = vmatpush1.msra.mxu0 0.0
        %3976 = vmatprep.subr.mxu0 0.0
        %3977 = vmatpush1.msra.mxu0 0.0
        %3978 = vmatprep.subr.mxu0 0.0
        %3979 = vmatpush1.msra.mxu0 0.0
        %3980 = vmatprep.subr.mxu0 0.0
        %3981 = vmatpush1.msra.mxu0 0.0
        %3982 = vmatprep.subr.mxu0 0.0
        %3983 = vmatpush1.msra.mxu0 0.0
        %3984 = vmatprep.subr.mxu0 0.0
        %3985 = vmatpush1.msra.mxu0 0.0
        %3986 = vmatprep.subr.mxu0 0.0
        %3987 = vmatpush1.msra.mxu0 0.0
        %3988 = vmatprep.subr.mxu0 0.0
        %3989 = vmatpush1.msra.mxu0 0.0
        %3990 = vmatprep.subr.mxu0 0.0
        %3991 = vmatpush1.msra.mxu0 0.0
        %3992 = vmatprep.subr.mxu0 0.0
        %3993 = vmatpush1.msra.mxu0 0.0
        %3994 = vmatprep.subr.mxu0 0.0
        %3995 = vmatpush1.msra.mxu0 0.0
        %3996 = vmatprep.subr.mxu0 0.0
        %3997 = vmatpush1.msra.mxu0 0.0
        %3998 = vmatprep.subr.mxu0 0.0
        %3999 = vmatpush1.msra.mxu0 0.0
        %4000 = vmatprep.subr.mxu0 0.0
        %4001 = vmatpush1.msra.mxu0 0.0
        %4002 = vmatprep.subr.mxu0 0.0
        %4003 = vmatpush1.msra.mxu0 0.0
        %4004 = vmatprep.subr.mxu0 0.0
        %4005 = vmatpush1.msra.mxu0 0.0
        %4006 = vmatprep.mubr.f32.mxu0 0.0
        %v4007 = vand.u32 %v3526, 4294901760
        %4008 = vmatmul.mubr.f32.gmra.mrb[0].mxu0 %v4007
        %v4009 = vpop.f32.mrb[0].mxu0
        %v4010 = vadd.f32 %v3935, %v4009
        %v4011 = vpop.f32.mrb[0].mxu0
        %4012 = vdwg.mxu0
        %v4014 = vsel %vm470, %v422, 0
        %v4017 = vsel %vm470, %v423, 0
        %v4020 = vsel %vm470, %v424, 0
        %v4023 = vsel %vm470, %v425, 0
        %v4026 = vsel %vm470, %v426, 0
        %v4029 = vsel %vm470, %v427, 0
        %v4032 = vsel %vm470, %v428, 0
        %v4035 = vsel %vm470, %v429, 0
        %v4038 = vsel %vm470, %v430, 0
        %v4041 = vsel %vm470, %v431, 0
        %v4044 = vsel %vm470, %v432, 0
        %v4047 = vsel %vm470, %v433, 0
        %v4050 = vsel %vm470, %v434, 0
        %v4053 = vsel %vm470, %v435, 0
        %v4056 = vsel %vm470, %v436, 0
        %v4059 = vsel %vm470, %v437, 0
        %4061 = vmatprep.subr.mxu0 0.0
        %v4062 = vand.u32 %v4014, 4294901760
        %4063 = vmatpush1.xpose.msra.mxu0 %v4062
        %4064 = vmatprep.subr.mxu0 0.0
        %v4065 = vand.u32 %v4017, 4294901760
        %4066 = vmatpush1.xpose.msra.mxu0 %v4065
        %4067 = vmatprep.subr.mxu0 0.0
        %v4068 = vand.u32 %v4020, 4294901760
        %4069 = vmatpush1.xpose.msra.mxu0 %v4068
        %4070 = vmatprep.subr.mxu0 0.0
        %v4071 = vand.u32 %v4023, 4294901760
        %4072 = vmatpush1.xpose.msra.mxu0 %v4071
        %4073 = vmatprep.subr.mxu0 0.0
        %v4074 = vand.u32 %v4026, 4294901760
        %4075 = vmatpush1.xpose.msra.mxu0 %v4074
        %4076 = vmatprep.subr.mxu0 0.0
        %v4077 = vand.u32 %v4029, 4294901760
        %4078 = vmatpush1.xpose.msra.mxu0 %v4077
        %4079 = vmatprep.subr.mxu0 0.0
        %v4080 = vand.u32 %v4032, 4294901760
        %4081 = vmatpush1.xpose.msra.mxu0 %v4080
        %4082 = vmatprep.subr.mxu0 0.0
        %v4083 = vand.u32 %v4035, 4294901760
        %4084 = vmatpush1.xpose.msra.mxu0 %v4083
        %4085 = vmatprep.subr.mxu0 0.0
        %v4086 = vand.u32 %v4038, 4294901760
        %4087 = vmatpush1.xpose.msra.mxu0 %v4086
        %4088 = vmatprep.subr.mxu0 0.0
        %v4089 = vand.u32 %v4041, 4294901760
        %4090 = vmatpush1.xpose.msra.mxu0 %v4089
        %4091 = vmatprep.subr.mxu0 0.0
        %v4092 = vand.u32 %v4044, 4294901760
        %4093 = vmatpush1.xpose.msra.mxu0 %v4092
        %4094 = vmatprep.subr.mxu0 0.0
        %v4095 = vand.u32 %v4047, 4294901760
        %4096 = vmatpush1.xpose.msra.mxu0 %v4095
        %4097 = vmatprep.subr.mxu0 0.0
        %v4098 = vand.u32 %v4050, 4294901760
        %4099 = vmatpush1.xpose.msra.mxu0 %v4098
        %4100 = vmatprep.subr.mxu0 0.0
        %v4101 = vand.u32 %v4053, 4294901760
        %4102 = vmatpush1.xpose.msra.mxu0 %v4101
        %4103 = vmatprep.subr.mxu0 0.0
        %v4104 = vand.u32 %v4056, 4294901760
        %4105 = vmatpush1.xpose.msra.mxu0 %v4104
        %4106 = vmatprep.subr.mxu0 0.0
        %v4107 = vand.u32 %v4059, 4294901760
        %4108 = vmatpush1.xpose.msra.mxu0 %v4107
        %4109 = vmatprep.subr.mxu0 0.0
        %4110 = vmatpush1.xpose.msra.mxu0 0.0
        %4111 = vmatprep.subr.mxu0 0.0
        %4112 = vmatpush1.xpose.msra.mxu0 0.0
        %4113 = vmatprep.subr.mxu0 0.0
        %4114 = vmatpush1.xpose.msra.mxu0 0.0
        %4115 = vmatprep.subr.mxu0 0.0
        %4116 = vmatpush1.xpose.msra.mxu0 0.0
        %4117 = vmatprep.subr.mxu0 0.0
        %4118 = vmatpush1.xpose.msra.mxu0 0.0
        %4119 = vmatprep.subr.mxu0 0.0
        %4120 = vmatpush1.xpose.msra.mxu0 0.0
        %4121 = vmatprep.subr.mxu0 0.0
        %4122 = vmatpush1.xpose.msra.mxu0 0.0
        %4123 = vmatprep.subr.mxu0 0.0
        %4124 = vmatpush1.xpose.msra.mxu0 0.0
        %4125 = vmatprep.subr.mxu0 0.0
        %4126 = vmatpush1.xpose.msra.mxu0 0.0
        %4127 = vmatprep.subr.mxu0 0.0
        %4128 = vmatpush1.xpose.msra.mxu0 0.0
        %4129 = vmatprep.subr.mxu0 0.0
        %4130 = vmatpush1.xpose.msra.mxu0 0.0
        %4131 = vmatprep.subr.mxu0 0.0
        %4132 = vmatpush1.xpose.msra.mxu0 0.0
        %4133 = vmatprep.subr.mxu0 0.0
        %4134 = vmatpush1.xpose.msra.mxu0 0.0
        %4135 = vmatprep.subr.mxu0 0.0
        %4136 = vmatpush1.xpose.msra.mxu0 0.0
        %4137 = vmatprep.subr.mxu0 0.0
        %4138 = vmatpush1.xpose.msra.mxu0 0.0
        %4139 = vmatprep.subr.mxu0 0.0
        %4140 = vmatpush1.xpose.msra.mxu0 0.0
        %4141 = vmatprep.mubr.f32.mxu0 0.0
        %v4142 = vand.u32 %v484, 4294901760
        %v4143 = vsub.f32 %v484, %v4142
        %v4144 = vand.u32 %v4143, 4294901760
        %v4145 = vsub.f32 %v4143, %v4144
        %v4146 = vand.u32 %v4145, 4294901760
        %4147 = vmatmul.mubr.f32.gmra.mrb[0].mxu0 %v4146
        %v4148 = vpop.f32.mrb[0].mxu0
        %v4149 = vadd.f32 %v2845, %v4148
        %v4150 = vpop.f32.mrb[0].mxu0
        %4151 = vmatprep.mubr.f32.mxu0 0.0
        %v4152 = vand.u32 %v487, 4294901760
        %v4153 = vsub.f32 %v487, %v4152
        %v4154 = vand.u32 %v4153, 4294901760
        %v4155 = vsub.f32 %v4153, %v4154
        %v4156 = vand.u32 %v4155, 4294901760
        %4157 = vmatmul.mubr.f32.gmra.mrb[0].mxu0 %v4156
        %v4158 = vpop.f32.mrb[0].mxu0
        %v4159 = vadd.f32 %v2850, %v4158
        %v4160 = vpop.f32.mrb[0].mxu0
        %4161 = vmatprep.mubr.f32.mxu0 0.0
        %v4162 = vand.u32 %v490, 4294901760
        %v4163 = vsub.f32 %v490, %v4162
        %v4164 = vand.u32 %v4163, 4294901760
        %v4165 = vsub.f32 %v4163, %v4164
        %v4166 = vand.u32 %v4165, 4294901760
        %4167 = vmatmul.mubr.f32.gmra.mrb[0].mxu0 %v4166
        %v4168 = vpop.f32.mrb[0].mxu0
        %v4169 = vadd.f32 %v2855, %v4168
        %v4170 = vpop.f32.mrb[0].mxu0
        %4171 = vmatprep.mubr.f32.mxu0 0.0
        %v4172 = vand.u32 %v493, 4294901760
        %v4173 = vsub.f32 %v493, %v4172
        %v4174 = vand.u32 %v4173, 4294901760
        %v4175 = vsub.f32 %v4173, %v4174
        %v4176 = vand.u32 %v4175, 4294901760
        %4177 = vmatmul.mubr.f32.gmra.mrb[0].mxu0 %v4176
        %v4178 = vpop.f32.mrb[0].mxu0
        %v4179 = vadd.f32 %v2860, %v4178
        %v4180 = vpop.f32.mrb[0].mxu0
        %4181 = vdwg.mxu0
        %4182 = vmatprep.subr.mxu0 0.0
        %v4183 = vand.u32 %v4014, 4294901760
        %v4184 = vsub.f32 %v4014, %v4183
        %v4185 = vand.u32 %v4184, 4294901760
        %v4186 = vsub.f32 %v4184, %v4185
        %v4187 = vand.u32 %v4186, 4294901760
        %4188 = vmatpush1.xpose.msra.mxu0 %v4187
        %4189 = vmatprep.subr.mxu0 0.0
        %v4190 = vand.u32 %v4017, 4294901760
        %v4191 = vsub.f32 %v4017, %v4190
        %v4192 = vand.u32 %v4191, 4294901760
        %v4193 = vsub.f32 %v4191, %v4192
        %v4194 = vand.u32 %v4193, 4294901760
        %4195 = vmatpush1.xpose.msra.mxu0 %v4194
        %4196 = vmatprep.subr.mxu0 0.0
        %v4197 = vand.u32 %v4020, 4294901760
        %v4198 = vsub.f32 %v4020, %v4197
        %v4199 = vand.u32 %v4198, 4294901760
        %v4200 = vsub.f32 %v4198, %v4199
        %v4201 = vand.u32 %v4200, 4294901760
        %4202 = vmatpush1.xpose.msra.mxu0 %v4201
        %4203 = vmatprep.subr.mxu0 0.0
        %v4204 = vand.u32 %v4023, 4294901760
        %v4205 = vsub.f32 %v4023, %v4204
        %v4206 = vand.u32 %v4205, 4294901760
        %v4207 = vsub.f32 %v4205, %v4206
        %v4208 = vand.u32 %v4207, 4294901760
        %4209 = vmatpush1.xpose.msra.mxu0 %v4208
        %4210 = vmatprep.subr.mxu0 0.0
        %v4211 = vand.u32 %v4026, 4294901760
        %v4212 = vsub.f32 %v4026, %v4211
        %v4213 = vand.u32 %v4212, 4294901760
        %v4214 = vsub.f32 %v4212, %v4213
        %v4215 = vand.u32 %v4214, 4294901760
        %4216 = vmatpush1.xpose.msra.mxu0 %v4215
        %4217 = vmatprep.subr.mxu0 0.0
        %v4218 = vand.u32 %v4029, 4294901760
        %v4219 = vsub.f32 %v4029, %v4218
        %v4220 = vand.u32 %v4219, 4294901760
        %v4221 = vsub.f32 %v4219, %v4220
        %v4222 = vand.u32 %v4221, 4294901760
        %4223 = vmatpush1.xpose.msra.mxu0 %v4222
        %4224 = vmatprep.subr.mxu0 0.0
        %v4225 = vand.u32 %v4032, 4294901760
        %v4226 = vsub.f32 %v4032, %v4225
        %v4227 = vand.u32 %v4226, 4294901760
        %v4228 = vsub.f32 %v4226, %v4227
        %v4229 = vand.u32 %v4228, 4294901760
        %4230 = vmatpush1.xpose.msra.mxu0 %v4229
        %4231 = vmatprep.subr.mxu0 0.0
        %v4232 = vand.u32 %v4035, 4294901760
        %v4233 = vsub.f32 %v4035, %v4232
        %v4234 = vand.u32 %v4233, 4294901760
        %v4235 = vsub.f32 %v4233, %v4234
        %v4236 = vand.u32 %v4235, 4294901760
        %4237 = vmatpush1.xpose.msra.mxu0 %v4236
        %4238 = vmatprep.subr.mxu0 0.0
        %v4239 = vand.u32 %v4038, 4294901760
        %v4240 = vsub.f32 %v4038, %v4239
        %v4241 = vand.u32 %v4240, 4294901760
        %v4242 = vsub.f32 %v4240, %v4241
        %v4243 = vand.u32 %v4242, 4294901760
        %4244 = vmatpush1.xpose.msra.mxu0 %v4243
        %4245 = vmatprep.subr.mxu0 0.0
        %v4246 = vand.u32 %v4041, 4294901760
        %v4247 = vsub.f32 %v4041, %v4246
        %v4248 = vand.u32 %v4247, 4294901760
        %v4249 = vsub.f32 %v4247, %v4248
        %v4250 = vand.u32 %v4249, 4294901760
        %4251 = vmatpush1.xpose.msra.mxu0 %v4250
        %4252 = vmatprep.subr.mxu0 0.0
        %v4253 = vand.u32 %v4044, 4294901760
        %v4254 = vsub.f32 %v4044, %v4253
        %v4255 = vand.u32 %v4254, 4294901760
        %v4256 = vsub.f32 %v4254, %v4255
        %v4257 = vand.u32 %v4256, 4294901760
        %4258 = vmatpush1.xpose.msra.mxu0 %v4257
        %4259 = vmatprep.subr.mxu0 0.0
        %v4260 = vand.u32 %v4047, 4294901760
        %v4261 = vsub.f32 %v4047, %v4260
        %v4262 = vand.u32 %v4261, 4294901760
        %v4263 = vsub.f32 %v4261, %v4262
        %v4264 = vand.u32 %v4263, 4294901760
        %4265 = vmatpush1.xpose.msra.mxu0 %v4264
        %4266 = vmatprep.subr.mxu0 0.0
        %v4267 = vand.u32 %v4050, 4294901760
        %v4268 = vsub.f32 %v4050, %v4267
        %v4269 = vand.u32 %v4268, 4294901760
        %v4270 = vsub.f32 %v4268, %v4269
        %v4271 = vand.u32 %v4270, 4294901760
        %4272 = vmatpush1.xpose.msra.mxu0 %v4271
        %4273 = vmatprep.subr.mxu0 0.0
        %v4274 = vand.u32 %v4053, 4294901760
        %v4275 = vsub.f32 %v4053, %v4274
        %v4276 = vand.u32 %v4275, 4294901760
        %v4277 = vsub.f32 %v4275, %v4276
        %v4278 = vand.u32 %v4277, 4294901760
        %4279 = vmatpush1.xpose.msra.mxu0 %v4278
        %4280 = vmatprep.subr.mxu0 0.0
        %v4281 = vand.u32 %v4056, 4294901760
        %v4282 = vsub.f32 %v4056, %v4281
        %v4283 = vand.u32 %v4282, 4294901760
        %v4284 = vsub.f32 %v4282, %v4283
        %v4285 = vand.u32 %v4284, 4294901760
        %4286 = vmatpush1.xpose.msra.mxu0 %v4285
        %4287 = vmatprep.subr.mxu0 0.0
        %v4288 = vand.u32 %v4059, 4294901760
        %v4289 = vsub.f32 %v4059, %v4288
        %v4290 = vand.u32 %v4289, 4294901760
        %v4291 = vsub.f32 %v4289, %v4290
        %v4292 = vand.u32 %v4291, 4294901760
        %4293 = vmatpush1.xpose.msra.mxu0 %v4292
        %4294 = vmatprep.subr.mxu0 0.0
        %4295 = vmatpush1.xpose.msra.mxu0 0.0
        %4296 = vmatprep.subr.mxu0 0.0
        %4297 = vmatpush1.xpose.msra.mxu0 0.0
        %4298 = vmatprep.subr.mxu0 0.0
        %4299 = vmatpush1.xpose.msra.mxu0 0.0
        %4300 = vmatprep.subr.mxu0 0.0
        %4301 = vmatpush1.xpose.msra.mxu0 0.0
        %4302 = vmatprep.subr.mxu0 0.0
        %4303 = vmatpush1.xpose.msra.mxu0 0.0
        %4304 = vmatprep.subr.mxu0 0.0
        %4305 = vmatpush1.xpose.msra.mxu0 0.0
        %4306 = vmatprep.subr.mxu0 0.0
        %4307 = vmatpush1.xpose.msra.mxu0 0.0
        %4308 = vmatprep.subr.mxu0 0.0
        %4309 = vmatpush1.xpose.msra.mxu0 0.0
        %4310 = vmatprep.subr.mxu0 0.0
        %4311 = vmatpush1.xpose.msra.mxu0 0.0
        %4312 = vmatprep.subr.mxu0 0.0
        %4313 = vmatpush1.xpose.msra.mxu0 0.0
        %4314 = vmatprep.subr.mxu0 0.0
        %4315 = vmatpush1.xpose.msra.mxu0 0.0
        %4316 = vmatprep.subr.mxu0 0.0
        %4317 = vmatpush1.xpose.msra.mxu0 0.0
        %4318 = vmatprep.subr.mxu0 0.0
        %4319 = vmatpush1.xpose.msra.mxu0 0.0
        %4320 = vmatprep.subr.mxu0 0.0
        %4321 = vmatpush1.xpose.msra.mxu0 0.0
        %4322 = vmatprep.subr.mxu0 0.0
        %4323 = vmatpush1.xpose.msra.mxu0 0.0
        %4324 = vmatprep.subr.mxu0 0.0
        %4325 = vmatpush1.xpose.msra.mxu0 0.0
        %4326 = vmatprep.mubr.f32.mxu0 0.0
        %v4327 = vand.u32 %v484, 4294901760
        %4328 = vmatmul.mubr.f32.gmra.mrb[0].mxu0 %v4327
        %v4329 = vpop.f32.mrb[0].mxu0
        %v4330 = vadd.f32 %v4149, %v4329
        %v4331 = vpop.f32.mrb[0].mxu0
        %4332 = vmatprep.mubr.f32.mxu0 0.0
        %v4333 = vand.u32 %v487, 4294901760
        %4334 = vmatmul.mubr.f32.gmra.mrb[0].mxu0 %v4333
        %v4335 = vpop.f32.mrb[0].mxu0
        %v4336 = vadd.f32 %v4159, %v4335
        %v4337 = vpop.f32.mrb[0].mxu0
        %4338 = vmatprep.mubr.f32.mxu0 0.0
        %v4339 = vand.u32 %v490, 4294901760
        %4340 = vmatmul.mubr.f32.gmra.mrb[0].mxu0 %v4339
        %v4341 = vpop.f32.mrb[0].mxu0
        %v4342 = vadd.f32 %v4169, %v4341
        %v4343 = vpop.f32.mrb[0].mxu0
        %4344 = vmatprep.mubr.f32.mxu0 0.0
        %v4345 = vand.u32 %v493, 4294901760
        %4346 = vmatmul.mubr.f32.gmra.mrb[0].mxu0 %v4345
        %v4347 = vpop.f32.mrb[0].mxu0
        %v4348 = vadd.f32 %v4179, %v4347
        %v4349 = vpop.f32.mrb[0].mxu0
        %4350 = vdwg.mxu0
        %4351 = vmatprep.subr.mxu0 0.0
        %v4352 = vand.u32 %v4014, 4294901760
        %v4353 = vsub.f32 %v4014, %v4352
        %4354 = vmatpush1.xpose.msra.mxu0 %v4353
        %4355 = vmatprep.subr.mxu0 0.0
        %v4356 = vand.u32 %v4017, 4294901760
        %v4357 = vsub.f32 %v4017, %v4356
        %4358 = vmatpush1.xpose.msra.mxu0 %v4357
        %4359 = vmatprep.subr.mxu0 0.0
        %v4360 = vand.u32 %v4020, 4294901760
        %v4361 = vsub.f32 %v4020, %v4360
        %4362 = vmatpush1.xpose.msra.mxu0 %v4361
        %4363 = vmatprep.subr.mxu0 0.0
        %v4364 = vand.u32 %v4023, 4294901760
        %v4365 = vsub.f32 %v4023, %v4364
        %4366 = vmatpush1.xpose.msra.mxu0 %v4365
        %4367 = vmatprep.subr.mxu0 0.0
        %v4368 = vand.u32 %v4026, 4294901760
        %v4369 = vsub.f32 %v4026, %v4368
        %4370 = vmatpush1.xpose.msra.mxu0 %v4369
        %4371 = vmatprep.subr.mxu0 0.0
        %v4372 = vand.u32 %v4029, 4294901760
        %v4373 = vsub.f32 %v4029, %v4372
        %4374 = vmatpush1.xpose.msra.mxu0 %v4373
        %4375 = vmatprep.subr.mxu0 0.0
        %v4376 = vand.u32 %v4032, 4294901760
        %v4377 = vsub.f32 %v4032, %v4376
        %4378 = vmatpush1.xpose.msra.mxu0 %v4377
        %4379 = vmatprep.subr.mxu0 0.0
        %v4380 = vand.u32 %v4035, 4294901760
        %v4381 = vsub.f32 %v4035, %v4380
        %4382 = vmatpush1.xpose.msra.mxu0 %v4381
        %4383 = vmatprep.subr.mxu0 0.0
        %v4384 = vand.u32 %v4038, 4294901760
        %v4385 = vsub.f32 %v4038, %v4384
        %4386 = vmatpush1.xpose.msra.mxu0 %v4385
        %4387 = vmatprep.subr.mxu0 0.0
        %v4388 = vand.u32 %v4041, 4294901760
        %v4389 = vsub.f32 %v4041, %v4388
        %4390 = vmatpush1.xpose.msra.mxu0 %v4389
        %4391 = vmatprep.subr.mxu0 0.0
        %v4392 = vand.u32 %v4044, 4294901760
        %v4393 = vsub.f32 %v4044, %v4392
        %4394 = vmatpush1.xpose.msra.mxu0 %v4393
        %4395 = vmatprep.subr.mxu0 0.0
        %v4396 = vand.u32 %v4047, 4294901760
        %v4397 = vsub.f32 %v4047, %v4396
        %4398 = vmatpush1.xpose.msra.mxu0 %v4397
        %4399 = vmatprep.subr.mxu0 0.0
        %v4400 = vand.u32 %v4050, 4294901760
        %v4401 = vsub.f32 %v4050, %v4400
        %4402 = vmatpush1.xpose.msra.mxu0 %v4401
        %4403 = vmatprep.subr.mxu0 0.0
        %v4404 = vand.u32 %v4053, 4294901760
        %v4405 = vsub.f32 %v4053, %v4404
        %4406 = vmatpush1.xpose.msra.mxu0 %v4405
        %4407 = vmatprep.subr.mxu0 0.0
        %v4408 = vand.u32 %v4056, 4294901760
        %v4409 = vsub.f32 %v4056, %v4408
        %4410 = vmatpush1.xpose.msra.mxu0 %v4409
        %4411 = vmatprep.subr.mxu0 0.0
        %v4412 = vand.u32 %v4059, 4294901760
        %v4413 = vsub.f32 %v4059, %v4412
        %4414 = vmatpush1.xpose.msra.mxu0 %v4413
        %4415 = vmatprep.subr.mxu0 0.0
        %4416 = vmatpush1.xpose.msra.mxu0 0.0
        %4417 = vmatprep.subr.mxu0 0.0
        %4418 = vmatpush1.xpose.msra.mxu0 0.0
        %4419 = vmatprep.subr.mxu0 0.0
        %4420 = vmatpush1.xpose.msra.mxu0 0.0
        %4421 = vmatprep.subr.mxu0 0.0
        %4422 = vmatpush1.xpose.msra.mxu0 0.0
        %4423 = vmatprep.subr.mxu0 0.0
        %4424 = vmatpush1.xpose.msra.mxu0 0.0
        %4425 = vmatprep.subr.mxu0 0.0
        %4426 = vmatpush1.xpose.msra.mxu0 0.0
        %4427 = vmatprep.subr.mxu0 0.0
        %4428 = vmatpush1.xpose.msra.mxu0 0.0
        %4429 = vmatprep.subr.mxu0 0.0
        %4430 = vmatpush1.xpose.msra.mxu0 0.0
        %4431 = vmatprep.subr.mxu0 0.0
        %4432 = vmatpush1.xpose.msra.mxu0 0.0
        %4433 = vmatprep.subr.mxu0 0.0
        %4434 = vmatpush1.xpose.msra.mxu0 0.0
        %4435 = vmatprep.subr.mxu0 0.0
        %4436 = vmatpush1.xpose.msra.mxu0 0.0
        %4437 = vmatprep.subr.mxu0 0.0
        %4438 = vmatpush1.xpose.msra.mxu0 0.0
        %4439 = vmatprep.subr.mxu0 0.0
        %4440 = vmatpush1.xpose.msra.mxu0 0.0
        %4441 = vmatprep.subr.mxu0 0.0
        %4442 = vmatpush1.xpose.msra.mxu0 0.0
        %4443 = vmatprep.subr.mxu0 0.0
        %4444 = vmatpush1.xpose.msra.mxu0 0.0
        %4445 = vmatprep.subr.mxu0 0.0
        %4446 = vmatpush1.xpose.msra.mxu0 0.0
        %4447 = vmatprep.mubr.f32.mxu0 0.0
        %v4448 = vand.u32 %v484, 4294901760
        %v4449 = vsub.f32 %v484, %v4448
        %4450 = vmatmul.mubr.f32.gmra.mrb[0].mxu0 %v4449
        %v4451 = vpop.f32.mrb[0].mxu0
        %v4452 = vadd.f32 %v4330, %v4451
        %v4453 = vpop.f32.mrb[0].mxu0
        %4454 = vmatprep.mubr.f32.mxu0 0.0
        %v4455 = vand.u32 %v487, 4294901760
        %v4456 = vsub.f32 %v487, %v4455
        %4457 = vmatmul.mubr.f32.gmra.mrb[0].mxu0 %v4456
        %v4458 = vpop.f32.mrb[0].mxu0
        %v4459 = vadd.f32 %v4336, %v4458
        %v4460 = vpop.f32.mrb[0].mxu0
        %4461 = vmatprep.mubr.f32.mxu0 0.0
        %v4462 = vand.u32 %v490, 4294901760
        %v4463 = vsub.f32 %v490, %v4462
        %4464 = vmatmul.mubr.f32.gmra.mrb[0].mxu0 %v4463
        %v4465 = vpop.f32.mrb[0].mxu0
        %v4466 = vadd.f32 %v4342, %v4465
        %v4467 = vpop.f32.mrb[0].mxu0
        %4468 = vmatprep.mubr.f32.mxu0 0.0
        %v4469 = vand.u32 %v493, 4294901760
        %v4470 = vsub.f32 %v493, %v4469
        %4471 = vmatmul.mubr.f32.gmra.mrb[0].mxu0 %v4470
        %v4472 = vpop.f32.mrb[0].mxu0
        %v4473 = vadd.f32 %v4348, %v4472
        %v4474 = vpop.f32.mrb[0].mxu0
        %4475 = vdwg.mxu0
        %4476 = vmatprep.subr.mxu0 0.0
        %v4477 = vand.u32 %v4014, 4294901760
        %4478 = vmatpush1.xpose.msra.mxu0 %v4477
        %4479 = vmatprep.subr.mxu0 0.0
        %v4480 = vand.u32 %v4017, 4294901760
        %4481 = vmatpush1.xpose.msra.mxu0 %v4480
        %4482 = vmatprep.subr.mxu0 0.0
        %v4483 = vand.u32 %v4020, 4294901760
        %4484 = vmatpush1.xpose.msra.mxu0 %v4483
        %4485 = vmatprep.subr.mxu0 0.0
        %v4486 = vand.u32 %v4023, 4294901760
        %4487 = vmatpush1.xpose.msra.mxu0 %v4486
        %4488 = vmatprep.subr.mxu0 0.0
        %v4489 = vand.u32 %v4026, 4294901760
        %4490 = vmatpush1.xpose.msra.mxu0 %v4489
        %4491 = vmatprep.subr.mxu0 0.0
        %v4492 = vand.u32 %v4029, 4294901760
        %4493 = vmatpush1.xpose.msra.mxu0 %v4492
        %4494 = vmatprep.subr.mxu0 0.0
        %v4495 = vand.u32 %v4032, 4294901760
        %4496 = vmatpush1.xpose.msra.mxu0 %v4495
        %4497 = vmatprep.subr.mxu0 0.0
        %v4498 = vand.u32 %v4035, 4294901760
        %4499 = vmatpush1.xpose.msra.mxu0 %v4498
        %4500 = vmatprep.subr.mxu0 0.0
        %v4501 = vand.u32 %v4038, 4294901760
        %4502 = vmatpush1.xpose.msra.mxu0 %v4501
        %4503 = vmatprep.subr.mxu0 0.0
        %v4504 = vand.u32 %v4041, 4294901760
        %4505 = vmatpush1.xpose.msra.mxu0 %v4504
        %4506 = vmatprep.subr.mxu0 0.0
        %v4507 = vand.u32 %v4044, 4294901760
        %4508 = vmatpush1.xpose.msra.mxu0 %v4507
        %4509 = vmatprep.subr.mxu0 0.0
        %v4510 = vand.u32 %v4047, 4294901760
        %4511 = vmatpush1.xpose.msra.mxu0 %v4510
        %4512 = vmatprep.subr.mxu0 0.0
        %v4513 = vand.u32 %v4050, 4294901760
        %4514 = vmatpush1.xpose.msra.mxu0 %v4513
        %4515 = vmatprep.subr.mxu0 0.0
        %v4516 = vand.u32 %v4053, 4294901760
        %4517 = vmatpush1.xpose.msra.mxu0 %v4516
        %4518 = vmatprep.subr.mxu0 0.0
        %v4519 = vand.u32 %v4056, 4294901760
        %4520 = vmatpush1.xpose.msra.mxu0 %v4519
        %4521 = vmatprep.subr.mxu0 0.0
        %v4522 = vand.u32 %v4059, 4294901760
        %4523 = vmatpush1.xpose.msra.mxu0 %v4522
        %4524 = vmatprep.subr.mxu0 0.0
        %4525 = vmatpush1.xpose.msra.mxu0 0.0
        %4526 = vmatprep.subr.mxu0 0.0
        %4527 = vmatpush1.xpose.msra.mxu0 0.0
        %4528 = vmatprep.subr.mxu0 0.0
        %4529 = vmatpush1.xpose.msra.mxu0 0.0
        %4530 = vmatprep.subr.mxu0 0.0
        %4531 = vmatpush1.xpose.msra.mxu0 0.0
        %4532 = vmatprep.subr.mxu0 0.0
        %4533 = vmatpush1.xpose.msra.mxu0 0.0
        %4534 = vmatprep.subr.mxu0 0.0
        %4535 = vmatpush1.xpose.msra.mxu0 0.0
        %4536 = vmatprep.subr.mxu0 0.0
        %4537 = vmatpush1.xpose.msra.mxu0 0.0
        %4538 = vmatprep.subr.mxu0 0.0
        %4539 = vmatpush1.xpose.msra.mxu0 0.0
        %4540 = vmatprep.subr.mxu0 0.0
        %4541 = vmatpush1.xpose.msra.mxu0 0.0
        %4542 = vmatprep.subr.mxu0 0.0
        %4543 = vmatpush1.xpose.msra.mxu0 0.0
        %4544 = vmatprep.subr.mxu0 0.0
        %4545 = vmatpush1.xpose.msra.mxu0 0.0
        %4546 = vmatprep.subr.mxu0 0.0
        %4547 = vmatpush1.xpose.msra.mxu0 0.0
        %4548 = vmatprep.subr.mxu0 0.0
        %4549 = vmatpush1.xpose.msra.mxu0 0.0
        %4550 = vmatprep.subr.mxu0 0.0
        %4551 = vmatpush1.xpose.msra.mxu0 0.0
        %4552 = vmatprep.subr.mxu0 0.0
        %4553 = vmatpush1.xpose.msra.mxu0 0.0
        %4554 = vmatprep.subr.mxu0 0.0
        %4555 = vmatpush1.xpose.msra.mxu0 0.0
        %4556 = vmatprep.mubr.f32.mxu0 0.0
        %v4557 = vand.u32 %v484, 4294901760
        %v4558 = vsub.f32 %v484, %v4557
        %v4559 = vand.u32 %v4558, 4294901760
        %4560 = vmatmul.mubr.f32.gmra.mrb[0].mxu0 %v4559
        %v4561 = vpop.f32.mrb[0].mxu0
        %v4562 = vadd.f32 %v4452, %v4561
        %v4563 = vpop.f32.mrb[0].mxu0
        %4564 = vmatprep.mubr.f32.mxu0 0.0
        %v4565 = vand.u32 %v487, 4294901760
        %v4566 = vsub.f32 %v487, %v4565
        %v4567 = vand.u32 %v4566, 4294901760
        %4568 = vmatmul.mubr.f32.gmra.mrb[0].mxu0 %v4567
        %v4569 = vpop.f32.mrb[0].mxu0
        %v4570 = vadd.f32 %v4459, %v4569
        %v4571 = vpop.f32.mrb[0].mxu0
        %4572 = vmatprep.mubr.f32.mxu0 0.0
        %v4573 = vand.u32 %v490, 4294901760
        %v4574 = vsub.f32 %v490, %v4573
        %v4575 = vand.u32 %v4574, 4294901760
        %4576 = vmatmul.mubr.f32.gmra.mrb[0].mxu0 %v4575
        %v4577 = vpop.f32.mrb[0].mxu0
        %v4578 = vadd.f32 %v4466, %v4577
        %v4579 = vpop.f32.mrb[0].mxu0
        %4580 = vmatprep.mubr.f32.mxu0 0.0
        %v4581 = vand.u32 %v493, 4294901760
        %v4582 = vsub.f32 %v493, %v4581
        %v4583 = vand.u32 %v4582, 4294901760
        %4584 = vmatmul.mubr.f32.gmra.mrb[0].mxu0 %v4583
        %v4585 = vpop.f32.mrb[0].mxu0
        %v4586 = vadd.f32 %v4473, %v4585
        %v4587 = vpop.f32.mrb[0].mxu0
        %4588 = vdwg.mxu0
        %4589 = vmatprep.subr.mxu0 0.0
        %v4590 = vand.u32 %v4014, 4294901760
        %v4591 = vsub.f32 %v4014, %v4590
        %v4592 = vand.u32 %v4591, 4294901760
        %4593 = vmatpush1.xpose.msra.mxu0 %v4592
        %4594 = vmatprep.subr.mxu0 0.0
        %v4595 = vand.u32 %v4017, 4294901760
        %v4596 = vsub.f32 %v4017, %v4595
        %v4597 = vand.u32 %v4596, 4294901760
        %4598 = vmatpush1.xpose.msra.mxu0 %v4597
        %4599 = vmatprep.subr.mxu0 0.0
        %v4600 = vand.u32 %v4020, 4294901760
        %v4601 = vsub.f32 %v4020, %v4600
        %v4602 = vand.u32 %v4601, 4294901760
        %4603 = vmatpush1.xpose.msra.mxu0 %v4602
        %4604 = vmatprep.subr.mxu0 0.0
        %v4605 = vand.u32 %v4023, 4294901760
        %v4606 = vsub.f32 %v4023, %v4605
        %v4607 = vand.u32 %v4606, 4294901760
        %4608 = vmatpush1.xpose.msra.mxu0 %v4607
        %4609 = vmatprep.subr.mxu0 0.0
        %v4610 = vand.u32 %v4026, 4294901760
        %v4611 = vsub.f32 %v4026, %v4610
        %v4612 = vand.u32 %v4611, 4294901760
        %4613 = vmatpush1.xpose.msra.mxu0 %v4612
        %4614 = vmatprep.subr.mxu0 0.0
        %v4615 = vand.u32 %v4029, 4294901760
        %v4616 = vsub.f32 %v4029, %v4615
        %v4617 = vand.u32 %v4616, 4294901760
        %4618 = vmatpush1.xpose.msra.mxu0 %v4617
        %4619 = vmatprep.subr.mxu0 0.0
        %v4620 = vand.u32 %v4032, 4294901760
        %v4621 = vsub.f32 %v4032, %v4620
        %v4622 = vand.u32 %v4621, 4294901760
        %4623 = vmatpush1.xpose.msra.mxu0 %v4622
        %4624 = vmatprep.subr.mxu0 0.0
        %v4625 = vand.u32 %v4035, 4294901760
        %v4626 = vsub.f32 %v4035, %v4625
        %v4627 = vand.u32 %v4626, 4294901760
        %4628 = vmatpush1.xpose.msra.mxu0 %v4627
        %4629 = vmatprep.subr.mxu0 0.0
        %v4630 = vand.u32 %v4038, 4294901760
        %v4631 = vsub.f32 %v4038, %v4630
        %v4632 = vand.u32 %v4631, 4294901760
        %4633 = vmatpush1.xpose.msra.mxu0 %v4632
        %4634 = vmatprep.subr.mxu0 0.0
        %v4635 = vand.u32 %v4041, 4294901760
        %v4636 = vsub.f32 %v4041, %v4635
        %v4637 = vand.u32 %v4636, 4294901760
        %4638 = vmatpush1.xpose.msra.mxu0 %v4637
        %4639 = vmatprep.subr.mxu0 0.0
        %v4640 = vand.u32 %v4044, 4294901760
        %v4641 = vsub.f32 %v4044, %v4640
        %v4642 = vand.u32 %v4641, 4294901760
        %4643 = vmatpush1.xpose.msra.mxu0 %v4642
        %4644 = vmatprep.subr.mxu0 0.0
        %v4645 = vand.u32 %v4047, 4294901760
        %v4646 = vsub.f32 %v4047, %v4645
        %v4647 = vand.u32 %v4646, 4294901760
        %4648 = vmatpush1.xpose.msra.mxu0 %v4647
        %4649 = vmatprep.subr.mxu0 0.0
        %v4650 = vand.u32 %v4050, 4294901760
        %v4651 = vsub.f32 %v4050, %v4650
        %v4652 = vand.u32 %v4651, 4294901760
        %4653 = vmatpush1.xpose.msra.mxu0 %v4652
        %4654 = vmatprep.subr.mxu0 0.0
        %v4655 = vand.u32 %v4053, 4294901760
        %v4656 = vsub.f32 %v4053, %v4655
        %v4657 = vand.u32 %v4656, 4294901760
        %4658 = vmatpush1.xpose.msra.mxu0 %v4657
        %4659 = vmatprep.subr.mxu0 0.0
        %v4660 = vand.u32 %v4056, 4294901760
        %v4661 = vsub.f32 %v4056, %v4660
        %v4662 = vand.u32 %v4661, 4294901760
        %4663 = vmatpush1.xpose.msra.mxu0 %v4662
        %4664 = vmatprep.subr.mxu0 0.0
        %v4665 = vand.u32 %v4059, 4294901760
        %v4666 = vsub.f32 %v4059, %v4665
        %v4667 = vand.u32 %v4666, 4294901760
        %4668 = vmatpush1.xpose.msra.mxu0 %v4667
        %4669 = vmatprep.subr.mxu0 0.0
        %4670 = vmatpush1.xpose.msra.mxu0 0.0
        %4671 = vmatprep.subr.mxu0 0.0
        %4672 = vmatpush1.xpose.msra.mxu0 0.0
        %4673 = vmatprep.subr.mxu0 0.0
        %4674 = vmatpush1.xpose.msra.mxu0 0.0
        %4675 = vmatprep.subr.mxu0 0.0
        %4676 = vmatpush1.xpose.msra.mxu0 0.0
        %4677 = vmatprep.subr.mxu0 0.0
        %4678 = vmatpush1.xpose.msra.mxu0 0.0
        %4679 = vmatprep.subr.mxu0 0.0
        %4680 = vmatpush1.xpose.msra.mxu0 0.0
        %4681 = vmatprep.subr.mxu0 0.0
        %4682 = vmatpush1.xpose.msra.mxu0 0.0
        %4683 = vmatprep.subr.mxu0 0.0
        %4684 = vmatpush1.xpose.msra.mxu0 0.0
        %4685 = vmatprep.subr.mxu0 0.0
        %4686 = vmatpush1.xpose.msra.mxu0 0.0
        %4687 = vmatprep.subr.mxu0 0.0
        %4688 = vmatpush1.xpose.msra.mxu0 0.0
        %4689 = vmatprep.subr.mxu0 0.0
        %4690 = vmatpush1.xpose.msra.mxu0 0.0
        %4691 = vmatprep.subr.mxu0 0.0
        %4692 = vmatpush1.xpose.msra.mxu0 0.0
        %4693 = vmatprep.subr.mxu0 0.0
        %4694 = vmatpush1.xpose.msra.mxu0 0.0
        %4695 = vmatprep.subr.mxu0 0.0
        %4696 = vmatpush1.xpose.msra.mxu0 0.0
        %4697 = vmatprep.subr.mxu0 0.0
        %4698 = vmatpush1.xpose.msra.mxu0 0.0
        %4699 = vmatprep.subr.mxu0 0.0
        %4700 = vmatpush1.xpose.msra.mxu0 0.0
        %4701 = vmatprep.mubr.f32.mxu0 0.0
        %v4702 = vand.u32 %v484, 4294901760
        %4703 = vmatmul.mubr.f32.gmra.mrb[0].mxu0 %v4702
        %v4704 = vpop.f32.mrb[0].mxu0
        %v4705 = vadd.f32 %v4562, %v4704
        %v4706 = vpop.f32.mrb[0].mxu0
        %4707 = vmatprep.mubr.f32.mxu0 0.0
        %v4708 = vand.u32 %v487, 4294901760
        %4709 = vmatmul.mubr.f32.gmra.mrb[0].mxu0 %v4708
        %v4710 = vpop.f32.mrb[0].mxu0
        %v4711 = vadd.f32 %v4570, %v4710
        %v4712 = vpop.f32.mrb[0].mxu0
        %4713 = vmatprep.mubr.f32.mxu0 0.0
        %v4714 = vand.u32 %v490, 4294901760
        %4715 = vmatmul.mubr.f32.gmra.mrb[0].mxu0 %v4714
        %v4716 = vpop.f32.mrb[0].mxu0
        %v4717 = vadd.f32 %v4578, %v4716
        %v4718 = vpop.f32.mrb[0].mxu0
        %4719 = vmatprep.mubr.f32.mxu0 0.0
        %v4720 = vand.u32 %v493, 4294901760
        %4721 = vmatmul.mubr.f32.gmra.mrb[0].mxu0 %v4720
        %v4722 = vpop.f32.mrb[0].mxu0
        %v4723 = vadd.f32 %v4586, %v4722
        %v4724 = vpop.f32.mrb[0].mxu0
        %4725 = vdwg.mxu0
        %4726 = vmatprep.subr.mxu0 0.0
        %v4727 = vand.u32 %v4014, 4294901760
        %4728 = vmatpush1.xpose.msra.mxu0 %v4727
        %4729 = vmatprep.subr.mxu0 0.0
        %v4730 = vand.u32 %v4017, 4294901760
        %4731 = vmatpush1.xpose.msra.mxu0 %v4730
        %4732 = vmatprep.subr.mxu0 0.0
        %v4733 = vand.u32 %v4020, 4294901760
        %4734 = vmatpush1.xpose.msra.mxu0 %v4733
        %4735 = vmatprep.subr.mxu0 0.0
        %v4736 = vand.u32 %v4023, 4294901760
        %4737 = vmatpush1.xpose.msra.mxu0 %v4736
        %4738 = vmatprep.subr.mxu0 0.0
        %v4739 = vand.u32 %v4026, 4294901760
        %4740 = vmatpush1.xpose.msra.mxu0 %v4739
        %4741 = vmatprep.subr.mxu0 0.0
        %v4742 = vand.u32 %v4029, 4294901760
        %4743 = vmatpush1.xpose.msra.mxu0 %v4742
        %4744 = vmatprep.subr.mxu0 0.0
        %v4745 = vand.u32 %v4032, 4294901760
        %4746 = vmatpush1.xpose.msra.mxu0 %v4745
        %4747 = vmatprep.subr.mxu0 0.0
        %v4748 = vand.u32 %v4035, 4294901760
        %4749 = vmatpush1.xpose.msra.mxu0 %v4748
        %4750 = vmatprep.subr.mxu0 0.0
        %v4751 = vand.u32 %v4038, 4294901760
        %4752 = vmatpush1.xpose.msra.mxu0 %v4751
        %4753 = vmatprep.subr.mxu0 0.0
        %v4754 = vand.u32 %v4041, 4294901760
        %4755 = vmatpush1.xpose.msra.mxu0 %v4754
        %4756 = vmatprep.subr.mxu0 0.0
        %v4757 = vand.u32 %v4044, 4294901760
        %4758 = vmatpush1.xpose.msra.mxu0 %v4757
        %4759 = vmatprep.subr.mxu0 0.0
        %v4760 = vand.u32 %v4047, 4294901760
        %4761 = vmatpush1.xpose.msra.mxu0 %v4760
        %4762 = vmatprep.subr.mxu0 0.0
        %v4763 = vand.u32 %v4050, 4294901760
        %4764 = vmatpush1.xpose.msra.mxu0 %v4763
        %4765 = vmatprep.subr.mxu0 0.0
        %v4766 = vand.u32 %v4053, 4294901760
        %4767 = vmatpush1.xpose.msra.mxu0 %v4766
        %4768 = vmatprep.subr.mxu0 0.0
        %v4769 = vand.u32 %v4056, 4294901760
        %4770 = vmatpush1.xpose.msra.mxu0 %v4769
        %4771 = vmatprep.subr.mxu0 0.0
        %v4772 = vand.u32 %v4059, 4294901760
        %4773 = vmatpush1.xpose.msra.mxu0 %v4772
        %4774 = vmatprep.subr.mxu0 0.0
        %4775 = vmatpush1.xpose.msra.mxu0 0.0
        %4776 = vmatprep.subr.mxu0 0.0
        %4777 = vmatpush1.xpose.msra.mxu0 0.0
        %4778 = vmatprep.subr.mxu0 0.0
        %4779 = vmatpush1.xpose.msra.mxu0 0.0
        %4780 = vmatprep.subr.mxu0 0.0
        %4781 = vmatpush1.xpose.msra.mxu0 0.0
        %4782 = vmatprep.subr.mxu0 0.0
        %4783 = vmatpush1.xpose.msra.mxu0 0.0
        %4784 = vmatprep.subr.mxu0 0.0
        %4785 = vmatpush1.xpose.msra.mxu0 0.0
        %4786 = vmatprep.subr.mxu0 0.0
        %4787 = vmatpush1.xpose.msra.mxu0 0.0
        %4788 = vmatprep.subr.mxu0 0.0
        %4789 = vmatpush1.xpose.msra.mxu0 0.0
        %4790 = vmatprep.subr.mxu0 0.0
        %4791 = vmatpush1.xpose.msra.mxu0 0.0
        %4792 = vmatprep.subr.mxu0 0.0
        %4793 = vmatpush1.xpose.msra.mxu0 0.0
        %4794 = vmatprep.subr.mxu0 0.0
        %4795 = vmatpush1.xpose.msra.mxu0 0.0
        %4796 = vmatprep.subr.mxu0 0.0
        %4797 = vmatpush1.xpose.msra.mxu0 0.0
        %4798 = vmatprep.subr.mxu0 0.0
        %4799 = vmatpush1.xpose.msra.mxu0 0.0
        %4800 = vmatprep.subr.mxu0 0.0
        %4801 = vmatpush1.xpose.msra.mxu0 0.0
        %4802 = vmatprep.subr.mxu0 0.0
        %4803 = vmatpush1.xpose.msra.mxu0 0.0
        %4804 = vmatprep.subr.mxu0 0.0
        %4805 = vmatpush1.xpose.msra.mxu0 0.0
        %4806 = vmatprep.mubr.f32.mxu0 0.0
        %v4807 = vand.u32 %v484, 4294901760
        %4808 = vmatmul.mubr.f32.gmra.mrb[0].mxu0 %v4807
        %v4809 = vpop.f32.mrb[0].mxu0
        %v4810 = vadd.f32 %v4705, %v4809
        %v4811 = vpop.f32.mrb[0].mxu0
        %4812 = vmatprep.mubr.f32.mxu0 0.0
        %v4813 = vand.u32 %v487, 4294901760
        %4814 = vmatmul.mubr.f32.gmra.mrb[0].mxu0 %v4813
        %v4815 = vpop.f32.mrb[0].mxu0
        %v4816 = vadd.f32 %v4711, %v4815
        %v4817 = vpop.f32.mrb[0].mxu0
        %4818 = vmatprep.mubr.f32.mxu0 0.0
        %v4819 = vand.u32 %v490, 4294901760
        %4820 = vmatmul.mubr.f32.gmra.mrb[0].mxu0 %v4819
        %v4821 = vpop.f32.mrb[0].mxu0
        %v4822 = vadd.f32 %v4717, %v4821
        %v4823 = vpop.f32.mrb[0].mxu0
        %4824 = vmatprep.mubr.f32.mxu0 0.0
        %v4825 = vand.u32 %v493, 4294901760
        %4826 = vmatmul.mubr.f32.gmra.mrb[0].mxu0 %v4825
        %v4827 = vpop.f32.mrb[0].mxu0
        %v4828 = vadd.f32 %v4723, %v4827
        %v4829 = vpop.f32.mrb[0].mxu0
        %4830 = vdwg.mxu0
        %v4831 = vmax.f32 %v4810, 0.0
        %v4832 = vmax.f32 %v4816, 0.0
        %v4833 = vmax.f32 %v4822, 0.0
        %v4834 = vmax.f32 %v4828, 0.0
        %4835 = vmatprep.subr.mxu0 0.0
        %v4836 = vand.u32 %v4831, 4294901760
        %4837 = vmatpush1.msra.mxu0 %v4836
        %4838 = vmatprep.subr.mxu0 0.0
        %v4839 = vand.u32 %v4832, 4294901760
        %4840 = vmatpush1.msra.mxu0 %v4839
        %4841 = vmatprep.subr.mxu0 0.0
        %v4842 = vand.u32 %v4833, 4294901760
        %4843 = vmatpush1.msra.mxu0 %v4842
        %4844 = vmatprep.subr.mxu0 0.0
        %v4845 = vand.u32 %v4834, 4294901760
        %4846 = vmatpush1.msra.mxu0 %v4845
        %4847 = vmatprep.subr.mxu0 0.0
        %4848 = vmatpush1.msra.mxu0 0.0
        %4849 = vmatprep.subr.mxu0 0.0
        %4850 = vmatpush1.msra.mxu0 0.0
        %4851 = vmatprep.subr.mxu0 0.0
        %4852 = vmatpush1.msra.mxu0 0.0
        %4853 = vmatprep.subr.mxu0 0.0
        %4854 = vmatpush1.msra.mxu0 0.0
        %4855 = vmatprep.subr.mxu0 0.0
        %4856 = vmatpush1.msra.mxu0 0.0
        %4857 = vmatprep.subr.mxu0 0.0
        %4858 = vmatpush1.msra.mxu0 0.0
        %4859 = vmatprep.subr.mxu0 0.0
        %4860 = vmatpush1.msra.mxu0 0.0
        %4861 = vmatprep.subr.mxu0 0.0
        %4862 = vmatpush1.msra.mxu0 0.0
        %4863 = vmatprep.subr.mxu0 0.0
        %4864 = vmatpush1.msra.mxu0 0.0
        %4865 = vmatprep.subr.mxu0 0.0
        %4866 = vmatpush1.msra.mxu0 0.0
        %4867 = vmatprep.subr.mxu0 0.0
        %4868 = vmatpush1.msra.mxu0 0.0
        %4869 = vmatprep.subr.mxu0 0.0
        %4870 = vmatpush1.msra.mxu0 0.0
        %4871 = vmatprep.subr.mxu0 0.0
        %4872 = vmatpush1.msra.mxu0 0.0
        %4873 = vmatprep.subr.mxu0 0.0
        %4874 = vmatpush1.msra.mxu0 0.0
        %4875 = vmatprep.subr.mxu0 0.0
        %4876 = vmatpush1.msra.mxu0 0.0
        %4877 = vmatprep.subr.mxu0 0.0
        %4878 = vmatpush1.msra.mxu0 0.0
        %4879 = vmatprep.subr.mxu0 0.0
        %4880 = vmatpush1.msra.mxu0 0.0
        %4881 = vmatprep.subr.mxu0 0.0
        %4882 = vmatpush1.msra.mxu0 0.0
        %4883 = vmatprep.subr.mxu0 0.0
        %4884 = vmatpush1.msra.mxu0 0.0
        %4885 = vmatprep.subr.mxu0 0.0
        %4886 = vmatpush1.msra.mxu0 0.0
        %4887 = vmatprep.subr.mxu0 0.0
        %4888 = vmatpush1.msra.mxu0 0.0
        %4889 = vmatprep.subr.mxu0 0.0
        %4890 = vmatpush1.msra.mxu0 0.0
        %4891 = vmatprep.subr.mxu0 0.0
        %4892 = vmatpush1.msra.mxu0 0.0
        %4893 = vmatprep.subr.mxu0 0.0
        %4894 = vmatpush1.msra.mxu0 0.0
        %4895 = vmatprep.subr.mxu0 0.0
        %4896 = vmatpush1.msra.mxu0 0.0
        %4897 = vmatprep.subr.mxu0 0.0
        %4898 = vmatpush1.msra.mxu0 0.0
        %4899 = vmatprep.subr.mxu0 0.0
        %4900 = vmatpush1.msra.mxu0 0.0
        %4901 = vmatprep.subr.mxu0 0.0
        %4902 = vmatpush1.msra.mxu0 0.0
        %4903 = vmatprep.mubr.f32.mxu0 0.0
        %v4904 = vand.u32 %v2891, 4294901760
        %v4905 = vsub.f32 %v2891, %v4904
        %v4906 = vand.u32 %v4905, 4294901760
        %v4907 = vsub.f32 %v4905, %v4906
        %v4908 = vand.u32 %v4907, 4294901760
        %4909 = vmatmul.mubr.f32.gmra.mrb[0].mxu0 %v4908
        %v4910 = vpop.f32.mrb[0].mxu0
        %v4911 = vadd.f32 %v2873, %v4910
        %v4912 = vpop.f32.mrb[0].mxu0
        %4913 = vmatprep.mubr.f32.mxu0 0.0
        %v4914 = vand.u32 %v2894, 4294901760
        %v4915 = vsub.f32 %v2894, %v4914
        %v4916 = vand.u32 %v4915, 4294901760
        %v4917 = vsub.f32 %v4915, %v4916
        %v4918 = vand.u32 %v4917, 4294901760
        %4919 = vmatmul.mubr.f32.gmra.mrb[0].mxu0 %v4918
        %v4920 = vpop.f32.mrb[0].mxu0
        %v4921 = vadd.f32 %v2878, %v4920
        %v4922 = vpop.f32.mrb[0].mxu0
        %4923 = vmatprep.mubr.f32.mxu0 0.0
        %v4924 = vand.u32 %v2897, 4294901760
        %v4925 = vsub.f32 %v2897, %v4924
        %v4926 = vand.u32 %v4925, 4294901760
        %v4927 = vsub.f32 %v4925, %v4926
        %v4928 = vand.u32 %v4927, 4294901760
        %4929 = vmatmul.mubr.f32.gmra.mrb[0].mxu0 %v4928
        %v4930 = vpop.f32.mrb[0].mxu0
        %v4931 = vadd.f32 %v2883, %v4930
        %v4932 = vpop.f32.mrb[0].mxu0
        %4933 = vmatprep.mubr.f32.mxu0 0.0
        %v4934 = vand.u32 %v2900, 4294901760
        %v4935 = vsub.f32 %v2900, %v4934
        %v4936 = vand.u32 %v4935, 4294901760
        %v4937 = vsub.f32 %v4935, %v4936
        %v4938 = vand.u32 %v4937, 4294901760
        %4939 = vmatmul.mubr.f32.gmra.mrb[0].mxu0 %v4938
        %v4940 = vpop.f32.mrb[0].mxu0
        %v4941 = vadd.f32 %v2888, %v4940
        %v4942 = vpop.f32.mrb[0].mxu0
        %4943 = vdwg.mxu0
        %4944 = vmatprep.subr.mxu0 0.0
        %v4945 = vand.u32 %v4831, 4294901760
        %v4946 = vsub.f32 %v4831, %v4945
        %v4947 = vand.u32 %v4946, 4294901760
        %v4948 = vsub.f32 %v4946, %v4947
        %v4949 = vand.u32 %v4948, 4294901760
        %4950 = vmatpush1.msra.mxu0 %v4949
        %4951 = vmatprep.subr.mxu0 0.0
        %v4952 = vand.u32 %v4832, 4294901760
        %v4953 = vsub.f32 %v4832, %v4952
        %v4954 = vand.u32 %v4953, 4294901760
        %v4955 = vsub.f32 %v4953, %v4954
        %v4956 = vand.u32 %v4955, 4294901760
        %4957 = vmatpush1.msra.mxu0 %v4956
        %4958 = vmatprep.subr.mxu0 0.0
        %v4959 = vand.u32 %v4833, 4294901760
        %v4960 = vsub.f32 %v4833, %v4959
        %v4961 = vand.u32 %v4960, 4294901760
        %v4962 = vsub.f32 %v4960, %v4961
        %v4963 = vand.u32 %v4962, 4294901760
        %4964 = vmatpush1.msra.mxu0 %v4963
        %4965 = vmatprep.subr.mxu0 0.0
        %v4966 = vand.u32 %v4834, 4294901760
        %v4967 = vsub.f32 %v4834, %v4966
        %v4968 = vand.u32 %v4967, 4294901760
        %v4969 = vsub.f32 %v4967, %v4968
        %v4970 = vand.u32 %v4969, 4294901760
        %4971 = vmatpush1.msra.mxu0 %v4970
        %4972 = vmatprep.subr.mxu0 0.0
        %4973 = vmatpush1.msra.mxu0 0.0
        %4974 = vmatprep.subr.mxu0 0.0
        %4975 = vmatpush1.msra.mxu0 0.0
        %4976 = vmatprep.subr.mxu0 0.0
        %4977 = vmatpush1.msra.mxu0 0.0
        %4978 = vmatprep.subr.mxu0 0.0
        %4979 = vmatpush1.msra.mxu0 0.0
        %4980 = vmatprep.subr.mxu0 0.0
        %4981 = vmatpush1.msra.mxu0 0.0
        %4982 = vmatprep.subr.mxu0 0.0
        %4983 = vmatpush1.msra.mxu0 0.0
        %4984 = vmatprep.subr.mxu0 0.0
        %4985 = vmatpush1.msra.mxu0 0.0
        %4986 = vmatprep.subr.mxu0 0.0
        %4987 = vmatpush1.msra.mxu0 0.0
        %4988 = vmatprep.subr.mxu0 0.0
        %4989 = vmatpush1.msra.mxu0 0.0
        %4990 = vmatprep.subr.mxu0 0.0
        %4991 = vmatpush1.msra.mxu0 0.0
        %4992 = vmatprep.subr.mxu0 0.0
        %4993 = vmatpush1.msra.mxu0 0.0
        %4994 = vmatprep.subr.mxu0 0.0
        %4995 = vmatpush1.msra.mxu0 0.0
        %4996 = vmatprep.subr.mxu0 0.0
        %4997 = vmatpush1.msra.mxu0 0.0
        %4998 = vmatprep.subr.mxu0 0.0
        %4999 = vmatpush1.msra.mxu0 0.0
        %5000 = vmatprep.subr.mxu0 0.0
        %5001 = vmatpush1.msra.mxu0 0.0
        %5002 = vmatprep.subr.mxu0 0.0
        %5003 = vmatpush1.msra.mxu0 0.0
        %5004 = vmatprep.subr.mxu0 0.0
        %5005 = vmatpush1.msra.mxu0 0.0
        %5006 = vmatprep.subr.mxu0 0.0
        %5007 = vmatpush1.msra.mxu0 0.0
        %5008 = vmatprep.subr.mxu0 0.0
        %5009 = vmatpush1.msra.mxu0 0.0
        %5010 = vmatprep.subr.mxu0 0.0
        %5011 = vmatpush1.msra.mxu0 0.0
        %5012 = vmatprep.subr.mxu0 0.0
        %5013 = vmatpush1.msra.mxu0 0.0
        %5014 = vmatprep.subr.mxu0 0.0
        %5015 = vmatpush1.msra.mxu0 0.0
        %5016 = vmatprep.subr.mxu0 0.0
        %5017 = vmatpush1.msra.mxu0 0.0
        %5018 = vmatprep.subr.mxu0 0.0
        %5019 = vmatpush1.msra.mxu0 0.0
        %5020 = vmatprep.subr.mxu0 0.0
        %5021 = vmatpush1.msra.mxu0 0.0
        %5022 = vmatprep.subr.mxu0 0.0
        %5023 = vmatpush1.msra.mxu0 0.0
        %5024 = vmatprep.subr.mxu0 0.0
        %5025 = vmatpush1.msra.mxu0 0.0
        %5026 = vmatprep.subr.mxu0 0.0
        %5027 = vmatpush1.msra.mxu0 0.0
        %5028 = vmatprep.mubr.f32.mxu0 0.0
        %v5029 = vand.u32 %v2891, 4294901760
        %5030 = vmatmul.mubr.f32.gmra.mrb[0].mxu0 %v5029
        %v5031 = vpop.f32.mrb[0].mxu0
        %v5032 = vadd.f32 %v4911, %v5031
        %v5033 = vpop.f32.mrb[0].mxu0
        %5034 = vmatprep.mubr.f32.mxu0 0.0
        %v5035 = vand.u32 %v2894, 4294901760
        %5036 = vmatmul.mubr.f32.gmra.mrb[0].mxu0 %v5035
        %v5037 = vpop.f32.mrb[0].mxu0
        %v5038 = vadd.f32 %v4921, %v5037
        %v5039 = vpop.f32.mrb[0].mxu0
        %5040 = vmatprep.mubr.f32.mxu0 0.0
        %v5041 = vand.u32 %v2897, 4294901760
        %5042 = vmatmul.mubr.f32.gmra.mrb[0].mxu0 %v5041
        %v5043 = vpop.f32.mrb[0].mxu0
        %v5044 = vadd.f32 %v4931, %v5043
        %v5045 = vpop.f32.mrb[0].mxu0
        %5046 = vmatprep.mubr.f32.mxu0 0.0
        %v5047 = vand.u32 %v2900, 4294901760
        %5048 = vmatmul.mubr.f32.gmra.mrb[0].mxu0 %v5047
        %v5049 = vpop.f32.mrb[0].mxu0
        %v5050 = vadd.f32 %v4941, %v5049
        %v5051 = vpop.f32.mrb[0].mxu0
        %5052 = vdwg.mxu0
        %5053 = vmatprep.subr.mxu0 0.0
        %v5054 = vand.u32 %v4831, 4294901760
        %v5055 = vsub.f32 %v4831, %v5054
        %5056 = vmatpush1.msra.mxu0 %v5055
        %5057 = vmatprep.subr.mxu0 0.0
        %v5058 = vand.u32 %v4832, 4294901760
        %v5059 = vsub.f32 %v4832, %v5058
        %5060 = vmatpush1.msra.mxu0 %v5059
        %5061 = vmatprep.subr.mxu0 0.0
        %v5062 = vand.u32 %v4833, 4294901760
        %v5063 = vsub.f32 %v4833, %v5062
        %5064 = vmatpush1.msra.mxu0 %v5063
        %5065 = vmatprep.subr.mxu0 0.0
        %v5066 = vand.u32 %v4834, 4294901760
        %v5067 = vsub.f32 %v4834, %v5066
        %5068 = vmatpush1.msra.mxu0 %v5067
        %5069 = vmatprep.subr.mxu0 0.0
        %5070 = vmatpush1.msra.mxu0 0.0
        %5071 = vmatprep.subr.mxu0 0.0
        %5072 = vmatpush1.msra.mxu0 0.0
        %5073 = vmatprep.subr.mxu0 0.0
        %5074 = vmatpush1.msra.mxu0 0.0
        %5075 = vmatprep.subr.mxu0 0.0
        %5076 = vmatpush1.msra.mxu0 0.0
        %5077 = vmatprep.subr.mxu0 0.0
        %5078 = vmatpush1.msra.mxu0 0.0
        %5079 = vmatprep.subr.mxu0 0.0
        %5080 = vmatpush1.msra.mxu0 0.0
        %5081 = vmatprep.subr.mxu0 0.0
        %5082 = vmatpush1.msra.mxu0 0.0
        %5083 = vmatprep.subr.mxu0 0.0
        %5084 = vmatpush1.msra.mxu0 0.0
        %5085 = vmatprep.subr.mxu0 0.0
        %5086 = vmatpush1.msra.mxu0 0.0
        %5087 = vmatprep.subr.mxu0 0.0
        %5088 = vmatpush1.msra.mxu0 0.0
        %5089 = vmatprep.subr.mxu0 0.0
        %5090 = vmatpush1.msra.mxu0 0.0
        %5091 = vmatprep.subr.mxu0 0.0
        %5092 = vmatpush1.msra.mxu0 0.0
        %5093 = vmatprep.subr.mxu0 0.0
        %5094 = vmatpush1.msra.mxu0 0.0
        %5095 = vmatprep.subr.mxu0 0.0
        %5096 = vmatpush1.msra.mxu0 0.0
        %5097 = vmatprep.subr.mxu0 0.0
        %5098 = vmatpush1.msra.mxu0 0.0
        %5099 = vmatprep.subr.mxu0 0.0
        %5100 = vmatpush1.msra.mxu0 0.0
        %5101 = vmatprep.subr.mxu0 0.0
        %5102 = vmatpush1.msra.mxu0 0.0
        %5103 = vmatprep.subr.mxu0 0.0
        %5104 = vmatpush1.msra.mxu0 0.0
        %5105 = vmatprep.subr.mxu0 0.0
        %5106 = vmatpush1.msra.mxu0 0.0
        %5107 = vmatprep.subr.mxu0 0.0
        %5108 = vmatpush1.msra.mxu0 0.0
        %5109 = vmatprep.subr.mxu0 0.0
        %5110 = vmatpush1.msra.mxu0 0.0
        %5111 = vmatprep.subr.mxu0 0.0
        %5112 = vmatpush1.msra.mxu0 0.0
        %5113 = vmatprep.subr.mxu0 0.0
        %5114 = vmatpush1.msra.mxu0 0.0
        %5115 = vmatprep.subr.mxu0 0.0
        %5116 = vmatpush1.msra.mxu0 0.0
        %5117 = vmatprep.subr.mxu0 0.0
        %5118 = vmatpush1.msra.mxu0 0.0
        %5119 = vmatprep.subr.mxu0 0.0
        %5120 = vmatpush1.msra.mxu0 0.0
        %5121 = vmatprep.subr.mxu0 0.0
        %5122 = vmatpush1.msra.mxu0 0.0
        %5123 = vmatprep.subr.mxu0 0.0
        %5124 = vmatpush1.msra.mxu0 0.0
        %5125 = vmatprep.mubr.f32.mxu0 0.0
        %v5126 = vand.u32 %v2891, 4294901760
        %v5127 = vsub.f32 %v2891, %v5126
        %5128 = vmatmul.mubr.f32.gmra.mrb[0].mxu0 %v5127
        %v5129 = vpop.f32.mrb[0].mxu0
        %v5130 = vadd.f32 %v5032, %v5129
        %v5131 = vpop.f32.mrb[0].mxu0
        %5132 = vmatprep.mubr.f32.mxu0 0.0
        %v5133 = vand.u32 %v2894, 4294901760
        %v5134 = vsub.f32 %v2894, %v5133
        %5135 = vmatmul.mubr.f32.gmra.mrb[0].mxu0 %v5134
        %v5136 = vpop.f32.mrb[0].mxu0
        %v5137 = vadd.f32 %v5038, %v5136
        %v5138 = vpop.f32.mrb[0].mxu0
        %5139 = vmatprep.mubr.f32.mxu0 0.0
        %v5140 = vand.u32 %v2897, 4294901760
        %v5141 = vsub.f32 %v2897, %v5140
        %5142 = vmatmul.mubr.f32.gmra.mrb[0].mxu0 %v5141
        %v5143 = vpop.f32.mrb[0].mxu0
        %v5144 = vadd.f32 %v5044, %v5143
        %v5145 = vpop.f32.mrb[0].mxu0
        %5146 = vmatprep.mubr.f32.mxu0 0.0
        %v5147 = vand.u32 %v2900, 4294901760
        %v5148 = vsub.f32 %v2900, %v5147
        %5149 = vmatmul.mubr.f32.gmra.mrb[0].mxu0 %v5148
        %v5150 = vpop.f32.mrb[0].mxu0
        %v5151 = vadd.f32 %v5050, %v5150
        %v5152 = vpop.f32.mrb[0].mxu0
        %5153 = vdwg.mxu0
        %5154 = vmatprep.subr.mxu0 0.0
        %v5155 = vand.u32 %v4831, 4294901760
        %5156 = vmatpush1.msra.mxu0 %v5155
        %5157 = vmatprep.subr.mxu0 0.0
        %v5158 = vand.u32 %v4832, 4294901760
        %5159 = vmatpush1.msra.mxu0 %v5158
        %5160 = vmatprep.subr.mxu0 0.0
        %v5161 = vand.u32 %v4833, 4294901760
        %5162 = vmatpush1.msra.mxu0 %v5161
        %5163 = vmatprep.subr.mxu0 0.0
        %v5164 = vand.u32 %v4834, 4294901760
        %5165 = vmatpush1.msra.mxu0 %v5164
        %5166 = vmatprep.subr.mxu0 0.0
        %5167 = vmatpush1.msra.mxu0 0.0
        %5168 = vmatprep.subr.mxu0 0.0
        %5169 = vmatpush1.msra.mxu0 0.0
        %5170 = vmatprep.subr.mxu0 0.0
        %5171 = vmatpush1.msra.mxu0 0.0
        %5172 = vmatprep.subr.mxu0 0.0
        %5173 = vmatpush1.msra.mxu0 0.0
        %5174 = vmatprep.subr.mxu0 0.0
        %5175 = vmatpush1.msra.mxu0 0.0
        %5176 = vmatprep.subr.mxu0 0.0
        %5177 = vmatpush1.msra.mxu0 0.0
        %5178 = vmatprep.subr.mxu0 0.0
        %5179 = vmatpush1.msra.mxu0 0.0
        %5180 = vmatprep.subr.mxu0 0.0
        %5181 = vmatpush1.msra.mxu0 0.0
        %5182 = vmatprep.subr.mxu0 0.0
        %5183 = vmatpush1.msra.mxu0 0.0
        %5184 = vmatprep.subr.mxu0 0.0
        %5185 = vmatpush1.msra.mxu0 0.0
        %5186 = vmatprep.subr.mxu0 0.0
        %5187 = vmatpush1.msra.mxu0 0.0
        %5188 = vmatprep.subr.mxu0 0.0
        %5189 = vmatpush1.msra.mxu0 0.0
        %5190 = vmatprep.subr.mxu0 0.0
        %5191 = vmatpush1.msra.mxu0 0.0
        %5192 = vmatprep.subr.mxu0 0.0
        %5193 = vmatpush1.msra.mxu0 0.0
        %5194 = vmatprep.subr.mxu0 0.0
        %5195 = vmatpush1.msra.mxu0 0.0
        %5196 = vmatprep.subr.mxu0 0.0
        %5197 = vmatpush1.msra.mxu0 0.0
        %5198 = vmatprep.subr.mxu0 0.0
        %5199 = vmatpush1.msra.mxu0 0.0
        %5200 = vmatprep.subr.mxu0 0.0
        %5201 = vmatpush1.msra.mxu0 0.0
        %5202 = vmatprep.subr.mxu0 0.0
        %5203 = vmatpush1.msra.mxu0 0.0
        %5204 = vmatprep.subr.mxu0 0.0
        %5205 = vmatpush1.msra.mxu0 0.0
        %5206 = vmatprep.subr.mxu0 0.0
        %5207 = vmatpush1.msra.mxu0 0.0
        %5208 = vmatprep.subr.mxu0 0.0
        %5209 = vmatpush1.msra.mxu0 0.0
        %5210 = vmatprep.subr.mxu0 0.0
        %5211 = vmatpush1.msra.mxu0 0.0
        %5212 = vmatprep.subr.mxu0 0.0
        %5213 = vmatpush1.msra.mxu0 0.0
        %5214 = vmatprep.subr.mxu0 0.0
        %5215 = vmatpush1.msra.mxu0 0.0
        %5216 = vmatprep.subr.mxu0 0.0
        %5217 = vmatpush1.msra.mxu0 0.0
        %5218 = vmatprep.subr.mxu0 0.0
        %5219 = vmatpush1.msra.mxu0 0.0
        %5220 = vmatprep.subr.mxu0 0.0
        %5221 = vmatpush1.msra.mxu0 0.0
        %5222 = vmatprep.mubr.f32.mxu0 0.0
        %v5223 = vand.u32 %v2891, 4294901760
        %v5224 = vsub.f32 %v2891, %v5223
        %v5225 = vand.u32 %v5224, 4294901760
        %5226 = vmatmul.mubr.f32.gmra.mrb[0].mxu0 %v5225
        %v5227 = vpop.f32.mrb[0].mxu0
        %v5228 = vadd.f32 %v5130, %v5227
        %v5229 = vpop.f32.mrb[0].mxu0
        %5230 = vmatprep.mubr.f32.mxu0 0.0
        %v5231 = vand.u32 %v2894, 4294901760
        %v5232 = vsub.f32 %v2894, %v5231
        %v5233 = vand.u32 %v5232, 4294901760
        %5234 = vmatmul.mubr.f32.gmra.mrb[0].mxu0 %v5233
        %v5235 = vpop.f32.mrb[0].mxu0
        %v5236 = vadd.f32 %v5137, %v5235
        %v5237 = vpop.f32.mrb[0].mxu0
        %5238 = vmatprep.mubr.f32.mxu0 0.0
        %v5239 = vand.u32 %v2897, 4294901760
        %v5240 = vsub.f32 %v2897, %v5239
        %v5241 = vand.u32 %v5240, 4294901760
        %5242 = vmatmul.mubr.f32.gmra.mrb[0].mxu0 %v5241
        %v5243 = vpop.f32.mrb[0].mxu0
        %v5244 = vadd.f32 %v5144, %v5243
        %v5245 = vpop.f32.mrb[0].mxu0
        %5246 = vmatprep.mubr.f32.mxu0 0.0
        %v5247 = vand.u32 %v2900, 4294901760
        %v5248 = vsub.f32 %v2900, %v5247
        %v5249 = vand.u32 %v5248, 4294901760
        %5250 = vmatmul.mubr.f32.gmra.mrb[0].mxu0 %v5249
        %v5251 = vpop.f32.mrb[0].mxu0
        %v5252 = vadd.f32 %v5151, %v5251
        %v5253 = vpop.f32.mrb[0].mxu0
        %5254 = vdwg.mxu0
        %5255 = vmatprep.subr.mxu0 0.0
        %v5256 = vand.u32 %v4831, 4294901760
        %v5257 = vsub.f32 %v4831, %v5256
        %v5258 = vand.u32 %v5257, 4294901760
        %5259 = vmatpush1.msra.mxu0 %v5258
        %5260 = vmatprep.subr.mxu0 0.0
        %v5261 = vand.u32 %v4832, 4294901760
        %v5262 = vsub.f32 %v4832, %v5261
        %v5263 = vand.u32 %v5262, 4294901760
        %5264 = vmatpush1.msra.mxu0 %v5263
        %5265 = vmatprep.subr.mxu0 0.0
        %v5266 = vand.u32 %v4833, 4294901760
        %v5267 = vsub.f32 %v4833, %v5266
        %v5268 = vand.u32 %v5267, 4294901760
        %5269 = vmatpush1.msra.mxu0 %v5268
        %5270 = vmatprep.subr.mxu0 0.0
        %v5271 = vand.u32 %v4834, 4294901760
        %v5272 = vsub.f32 %v4834, %v5271
        %v5273 = vand.u32 %v5272, 4294901760
        %5274 = vmatpush1.msra.mxu0 %v5273
        %5275 = vmatprep.subr.mxu0 0.0
        %5276 = vmatpush1.msra.mxu0 0.0
        %5277 = vmatprep.subr.mxu0 0.0
        %5278 = vmatpush1.msra.mxu0 0.0
        %5279 = vmatprep.subr.mxu0 0.0
        %5280 = vmatpush1.msra.mxu0 0.0
        %5281 = vmatprep.subr.mxu0 0.0
        %5282 = vmatpush1.msra.mxu0 0.0
        %5283 = vmatprep.subr.mxu0 0.0
        %5284 = vmatpush1.msra.mxu0 0.0
        %5285 = vmatprep.subr.mxu0 0.0
        %5286 = vmatpush1.msra.mxu0 0.0
        %5287 = vmatprep.subr.mxu0 0.0
        %5288 = vmatpush1.msra.mxu0 0.0
        %5289 = vmatprep.subr.mxu0 0.0
        %5290 = vmatpush1.msra.mxu0 0.0
        %5291 = vmatprep.subr.mxu0 0.0
        %5292 = vmatpush1.msra.mxu0 0.0
        %5293 = vmatprep.subr.mxu0 0.0
        %5294 = vmatpush1.msra.mxu0 0.0
        %5295 = vmatprep.subr.mxu0 0.0
        %5296 = vmatpush1.msra.mxu0 0.0
        %5297 = vmatprep.subr.mxu0 0.0
        %5298 = vmatpush1.msra.mxu0 0.0
        %5299 = vmatprep.subr.mxu0 0.0
        %5300 = vmatpush1.msra.mxu0 0.0
        %5301 = vmatprep.subr.mxu0 0.0
        %5302 = vmatpush1.msra.mxu0 0.0
        %5303 = vmatprep.subr.mxu0 0.0
        %5304 = vmatpush1.msra.mxu0 0.0
        %5305 = vmatprep.subr.mxu0 0.0
        %5306 = vmatpush1.msra.mxu0 0.0
        %5307 = vmatprep.subr.mxu0 0.0
        %5308 = vmatpush1.msra.mxu0 0.0
        %5309 = vmatprep.subr.mxu0 0.0
        %5310 = vmatpush1.msra.mxu0 0.0
        %5311 = vmatprep.subr.mxu0 0.0
        %5312 = vmatpush1.msra.mxu0 0.0
        %5313 = vmatprep.subr.mxu0 0.0
        %5314 = vmatpush1.msra.mxu0 0.0
        %5315 = vmatprep.subr.mxu0 0.0
        %5316 = vmatpush1.msra.mxu0 0.0
        %5317 = vmatprep.subr.mxu0 0.0
        %5318 = vmatpush1.msra.mxu0 0.0
        %5319 = vmatprep.subr.mxu0 0.0
        %5320 = vmatpush1.msra.mxu0 0.0
        %5321 = vmatprep.subr.mxu0 0.0
        %5322 = vmatpush1.msra.mxu0 0.0
        %5323 = vmatprep.subr.mxu0 0.0
        %5324 = vmatpush1.msra.mxu0 0.0
        %5325 = vmatprep.subr.mxu0 0.0
        %5326 = vmatpush1.msra.mxu0 0.0
        %5327 = vmatprep.subr.mxu0 0.0
        %5328 = vmatpush1.msra.mxu0 0.0
        %5329 = vmatprep.subr.mxu0 0.0
        %5330 = vmatpush1.msra.mxu0 0.0
        %5331 = vmatprep.mubr.f32.mxu0 0.0
        %v5332 = vand.u32 %v2891, 4294901760
        %5333 = vmatmul.mubr.f32.gmra.mrb[0].mxu0 %v5332
        %v5334 = vpop.f32.mrb[0].mxu0
        %v5335 = vadd.f32 %v5228, %v5334
        %v5336 = vpop.f32.mrb[0].mxu0
        %5337 = vmatprep.mubr.f32.mxu0 0.0
        %v5338 = vand.u32 %v2894, 4294901760
        %5339 = vmatmul.mubr.f32.gmra.mrb[0].mxu0 %v5338
        %v5340 = vpop.f32.mrb[0].mxu0
        %v5341 = vadd.f32 %v5236, %v5340
        %v5342 = vpop.f32.mrb[0].mxu0
        %5343 = vmatprep.mubr.f32.mxu0 0.0
        %v5344 = vand.u32 %v2897, 4294901760
        %5345 = vmatmul.mubr.f32.gmra.mrb[0].mxu0 %v5344
        %v5346 = vpop.f32.mrb[0].mxu0
        %v5347 = vadd.f32 %v5244, %v5346
        %v5348 = vpop.f32.mrb[0].mxu0
        %5349 = vmatprep.mubr.f32.mxu0 0.0
        %v5350 = vand.u32 %v2900, 4294901760
        %5351 = vmatmul.mubr.f32.gmra.mrb[0].mxu0 %v5350
        %v5352 = vpop.f32.mrb[0].mxu0
        %v5353 = vadd.f32 %v5252, %v5352
        %v5354 = vpop.f32.mrb[0].mxu0
        %5355 = vdwg.mxu0
        %5356 = vmatprep.subr.mxu0 0.0
        %v5357 = vand.u32 %v4831, 4294901760
        %5358 = vmatpush1.msra.mxu0 %v5357
        %5359 = vmatprep.subr.mxu0 0.0
        %v5360 = vand.u32 %v4832, 4294901760
        %5361 = vmatpush1.msra.mxu0 %v5360
        %5362 = vmatprep.subr.mxu0 0.0
        %v5363 = vand.u32 %v4833, 4294901760
        %5364 = vmatpush1.msra.mxu0 %v5363
        %5365 = vmatprep.subr.mxu0 0.0
        %v5366 = vand.u32 %v4834, 4294901760
        %5367 = vmatpush1.msra.mxu0 %v5366
        %5368 = vmatprep.subr.mxu0 0.0
        %5369 = vmatpush1.msra.mxu0 0.0
        %5370 = vmatprep.subr.mxu0 0.0
        %5371 = vmatpush1.msra.mxu0 0.0
        %5372 = vmatprep.subr.mxu0 0.0
        %5373 = vmatpush1.msra.mxu0 0.0
        %5374 = vmatprep.subr.mxu0 0.0
        %5375 = vmatpush1.msra.mxu0 0.0
        %5376 = vmatprep.subr.mxu0 0.0
        %5377 = vmatpush1.msra.mxu0 0.0
        %5378 = vmatprep.subr.mxu0 0.0
        %5379 = vmatpush1.msra.mxu0 0.0
        %5380 = vmatprep.subr.mxu0 0.0
        %5381 = vmatpush1.msra.mxu0 0.0
        %5382 = vmatprep.subr.mxu0 0.0
        %5383 = vmatpush1.msra.mxu0 0.0
        %5384 = vmatprep.subr.mxu0 0.0
        %5385 = vmatpush1.msra.mxu0 0.0
        %5386 = vmatprep.subr.mxu0 0.0
        %5387 = vmatpush1.msra.mxu0 0.0
        %5388 = vmatprep.subr.mxu0 0.0
        %5389 = vmatpush1.msra.mxu0 0.0
        %5390 = vmatprep.subr.mxu0 0.0
        %5391 = vmatpush1.msra.mxu0 0.0
        %5392 = vmatprep.subr.mxu0 0.0
        %5393 = vmatpush1.msra.mxu0 0.0
        %5394 = vmatprep.subr.mxu0 0.0
        %5395 = vmatpush1.msra.mxu0 0.0
        %5396 = vmatprep.subr.mxu0 0.0
        %5397 = vmatpush1.msra.mxu0 0.0
        %5398 = vmatprep.subr.mxu0 0.0
        %5399 = vmatpush1.msra.mxu0 0.0
        %5400 = vmatprep.subr.mxu0 0.0
        %5401 = vmatpush1.msra.mxu0 0.0
        %5402 = vmatprep.subr.mxu0 0.0
        %5403 = vmatpush1.msra.mxu0 0.0
        %5404 = vmatprep.subr.mxu0 0.0
        %5405 = vmatpush1.msra.mxu0 0.0
        %5406 = vmatprep.subr.mxu0 0.0
        %5407 = vmatpush1.msra.mxu0 0.0
        %5408 = vmatprep.subr.mxu0 0.0
        %5409 = vmatpush1.msra.mxu0 0.0
        %5410 = vmatprep.subr.mxu0 0.0
        %5411 = vmatpush1.msra.mxu0 0.0
        %5412 = vmatprep.subr.mxu0 0.0
        %5413 = vmatpush1.msra.mxu0 0.0
        %5414 = vmatprep.subr.mxu0 0.0
        %5415 = vmatpush1.msra.mxu0 0.0
        %5416 = vmatprep.subr.mxu0 0.0
        %5417 = vmatpush1.msra.mxu0 0.0
        %5418 = vmatprep.subr.mxu0 0.0
        %5419 = vmatpush1.msra.mxu0 0.0
        %5420 = vmatprep.subr.mxu0 0.0
        %5421 = vmatpush1.msra.mxu0 0.0
        %5422 = vmatprep.subr.mxu0 0.0
        %5423 = vmatpush1.msra.mxu0 0.0
        %5424 = vmatprep.mubr.f32.mxu0 0.0
        %v5425 = vand.u32 %v2891, 4294901760
        %5426 = vmatmul.mubr.f32.gmra.mrb[0].mxu0 %v5425
        %v5427 = vpop.f32.mrb[0].mxu0
        %v5428 = vadd.f32 %v5335, %v5427
        %v5429 = vpop.f32.mrb[0].mxu0
        %5430 = vmatprep.mubr.f32.mxu0 0.0
        %v5431 = vand.u32 %v2894, 4294901760
        %5432 = vmatmul.mubr.f32.gmra.mrb[0].mxu0 %v5431
        %v5433 = vpop.f32.mrb[0].mxu0
        %v5434 = vadd.f32 %v5341, %v5433
        %v5435 = vpop.f32.mrb[0].mxu0
        %5436 = vmatprep.mubr.f32.mxu0 0.0
        %v5437 = vand.u32 %v2897, 4294901760
        %5438 = vmatmul.mubr.f32.gmra.mrb[0].mxu0 %v5437
        %v5439 = vpop.f32.mrb[0].mxu0
        %v5440 = vadd.f32 %v5347, %v5439
        %v5441 = vpop.f32.mrb[0].mxu0
        %5442 = vmatprep.mubr.f32.mxu0 0.0
        %v5443 = vand.u32 %v2900, 4294901760
        %5444 = vmatmul.mubr.f32.gmra.mrb[0].mxu0 %v5443
        %v5445 = vpop.f32.mrb[0].mxu0
        %v5446 = vadd.f32 %v5353, %v5445
        %v5447 = vpop.f32.mrb[0].mxu0
        %5448 = vdwg.mxu0
        %v5449 = vmax.f32 %v5428, 0.0
        %v5450 = vmax.f32 %v5434, 0.0
        %v5451 = vmax.f32 %v5440, 0.0
        %v5452 = vmax.f32 %v5446, 0.0
        %5453 = vmatprep.subr.mxu0 0.0
        %v5454 = vand.u32 %v5449, 4294901760
        %5455 = vmatpush1.msra.mxu0 %v5454
        %5456 = vmatprep.subr.mxu0 0.0
        %v5457 = vand.u32 %v5450, 4294901760
        %5458 = vmatpush1.msra.mxu0 %v5457
        %5459 = vmatprep.subr.mxu0 0.0
        %v5460 = vand.u32 %v5451, 4294901760
        %5461 = vmatpush1.msra.mxu0 %v5460
        %5462 = vmatprep.subr.mxu0 0.0
        %v5463 = vand.u32 %v5452, 4294901760
        %5464 = vmatpush1.msra.mxu0 %v5463
        %5465 = vmatprep.subr.mxu0 0.0
        %5466 = vmatpush1.msra.mxu0 0.0
        %5467 = vmatprep.subr.mxu0 0.0
        %5468 = vmatpush1.msra.mxu0 0.0
        %5469 = vmatprep.subr.mxu0 0.0
        %5470 = vmatpush1.msra.mxu0 0.0
        %5471 = vmatprep.subr.mxu0 0.0
        %5472 = vmatpush1.msra.mxu0 0.0
        %5473 = vmatprep.subr.mxu0 0.0
        %5474 = vmatpush1.msra.mxu0 0.0
        %5475 = vmatprep.subr.mxu0 0.0
        %5476 = vmatpush1.msra.mxu0 0.0
        %5477 = vmatprep.subr.mxu0 0.0
        %5478 = vmatpush1.msra.mxu0 0.0
        %5479 = vmatprep.subr.mxu0 0.0
        %5480 = vmatpush1.msra.mxu0 0.0
        %5481 = vmatprep.subr.mxu0 0.0
        %5482 = vmatpush1.msra.mxu0 0.0
        %5483 = vmatprep.subr.mxu0 0.0
        %5484 = vmatpush1.msra.mxu0 0.0
        %5485 = vmatprep.subr.mxu0 0.0
        %5486 = vmatpush1.msra.mxu0 0.0
        %5487 = vmatprep.subr.mxu0 0.0
        %5488 = vmatpush1.msra.mxu0 0.0
        %5489 = vmatprep.subr.mxu0 0.0
        %5490 = vmatpush1.msra.mxu0 0.0
        %5491 = vmatprep.subr.mxu0 0.0
        %5492 = vmatpush1.msra.mxu0 0.0
        %5493 = vmatprep.subr.mxu0 0.0
        %5494 = vmatpush1.msra.mxu0 0.0
        %5495 = vmatprep.subr.mxu0 0.0
        %5496 = vmatpush1.msra.mxu0 0.0
        %5497 = vmatprep.subr.mxu0 0.0
        %5498 = vmatpush1.msra.mxu0 0.0
        %5499 = vmatprep.subr.mxu0 0.0
        %5500 = vmatpush1.msra.mxu0 0.0
        %5501 = vmatprep.subr.mxu0 0.0
        %5502 = vmatpush1.msra.mxu0 0.0
        %5503 = vmatprep.subr.mxu0 0.0
        %5504 = vmatpush1.msra.mxu0 0.0
        %5505 = vmatprep.subr.mxu0 0.0
        %5506 = vmatpush1.msra.mxu0 0.0
        %5507 = vmatprep.subr.mxu0 0.0
        %5508 = vmatpush1.msra.mxu0 0.0
        %5509 = vmatprep.subr.mxu0 0.0
        %5510 = vmatpush1.msra.mxu0 0.0
        %5511 = vmatprep.subr.mxu0 0.0
        %5512 = vmatpush1.msra.mxu0 0.0
        %5513 = vmatprep.subr.mxu0 0.0
        %5514 = vmatpush1.msra.mxu0 0.0
        %5515 = vmatprep.subr.mxu0 0.0
        %5516 = vmatpush1.msra.mxu0 0.0
        %5517 = vmatprep.subr.mxu0 0.0
        %5518 = vmatpush1.msra.mxu0 0.0
        %5519 = vmatprep.subr.mxu0 0.0
        %5520 = vmatpush1.msra.mxu0 0.0
        %5521 = vmatprep.mubr.f32.mxu0 0.0
        %v5522 = vand.u32 %v3526, 4294901760
        %v5523 = vsub.f32 %v3526, %v5522
        %v5524 = vand.u32 %v5523, 4294901760
        %v5525 = vsub.f32 %v5523, %v5524
        %v5526 = vand.u32 %v5525, 4294901760
        %5527 = vmatmul.mubr.f32.gmra.mrb[0].mxu0 %v5526
        %v5528 = vpop.f32.mrb[0].mxu0
        %v5529 = vadd.f32 %v3523, %v5528
        %v5530 = vpop.f32.mrb[0].mxu0
        %5531 = vdwg.mxu0
        %5532 = vmatprep.subr.mxu0 0.0
        %v5533 = vand.u32 %v5449, 4294901760
        %v5534 = vsub.f32 %v5449, %v5533
        %v5535 = vand.u32 %v5534, 4294901760
        %v5536 = vsub.f32 %v5534, %v5535
        %v5537 = vand.u32 %v5536, 4294901760
        %5538 = vmatpush1.msra.mxu0 %v5537
        %5539 = vmatprep.subr.mxu0 0.0
        %v5540 = vand.u32 %v5450, 4294901760
        %v5541 = vsub.f32 %v5450, %v5540
        %v5542 = vand.u32 %v5541, 4294901760
        %v5543 = vsub.f32 %v5541, %v5542
        %v5544 = vand.u32 %v5543, 4294901760
        %5545 = vmatpush1.msra.mxu0 %v5544
        %5546 = vmatprep.subr.mxu0 0.0
        %v5547 = vand.u32 %v5451, 4294901760
        %v5548 = vsub.f32 %v5451, %v5547
        %v5549 = vand.u32 %v5548, 4294901760
        %v5550 = vsub.f32 %v5548, %v5549
        %v5551 = vand.u32 %v5550, 4294901760
        %5552 = vmatpush1.msra.mxu0 %v5551
        %5553 = vmatprep.subr.mxu0 0.0
        %v5554 = vand.u32 %v5452, 4294901760
        %v5555 = vsub.f32 %v5452, %v5554
        %v5556 = vand.u32 %v5555, 4294901760
        %v5557 = vsub.f32 %v5555, %v5556
        %v5558 = vand.u32 %v5557, 4294901760
        %5559 = vmatpush1.msra.mxu0 %v5558
        %5560 = vmatprep.subr.mxu0 0.0
        %5561 = vmatpush1.msra.mxu0 0.0
        %5562 = vmatprep.subr.mxu0 0.0
        %5563 = vmatpush1.msra.mxu0 0.0
        %5564 = vmatprep.subr.mxu0 0.0
        %5565 = vmatpush1.msra.mxu0 0.0
        %5566 = vmatprep.subr.mxu0 0.0
        %5567 = vmatpush1.msra.mxu0 0.0
        %5568 = vmatprep.subr.mxu0 0.0
        %5569 = vmatpush1.msra.mxu0 0.0
        %5570 = vmatprep.subr.mxu0 0.0
        %5571 = vmatpush1.msra.mxu0 0.0
        %5572 = vmatprep.subr.mxu0 0.0
        %5573 = vmatpush1.msra.mxu0 0.0
        %5574 = vmatprep.subr.mxu0 0.0
        %5575 = vmatpush1.msra.mxu0 0.0
        %5576 = vmatprep.subr.mxu0 0.0
        %5577 = vmatpush1.msra.mxu0 0.0
        %5578 = vmatprep.subr.mxu0 0.0
        %5579 = vmatpush1.msra.mxu0 0.0
        %5580 = vmatprep.subr.mxu0 0.0
        %5581 = vmatpush1.msra.mxu0 0.0
        %5582 = vmatprep.subr.mxu0 0.0
        %5583 = vmatpush1.msra.mxu0 0.0
        %5584 = vmatprep.subr.mxu0 0.0
        %5585 = vmatpush1.msra.mxu0 0.0
        %5586 = vmatprep.subr.mxu0 0.0
        %5587 = vmatpush1.msra.mxu0 0.0
        %5588 = vmatprep.subr.mxu0 0.0
        %5589 = vmatpush1.msra.mxu0 0.0
        %5590 = vmatprep.subr.mxu0 0.0
        %5591 = vmatpush1.msra.mxu0 0.0
        %5592 = vmatprep.subr.mxu0 0.0
        %5593 = vmatpush1.msra.mxu0 0.0
        %5594 = vmatprep.subr.mxu0 0.0
        %5595 = vmatpush1.msra.mxu0 0.0
        %5596 = vmatprep.subr.mxu0 0.0
        %5597 = vmatpush1.msra.mxu0 0.0
        %5598 = vmatprep.subr.mxu0 0.0
        %5599 = vmatpush1.msra.mxu0 0.0
        %5600 = vmatprep.subr.mxu0 0.0
        %5601 = vmatpush1.msra.mxu0 0.0
        %5602 = vmatprep.subr.mxu0 0.0
        %5603 = vmatpush1.msra.mxu0 0.0
        %5604 = vmatprep.subr.mxu0 0.0
        %5605 = vmatpush1.msra.mxu0 0.0
        %5606 = vmatprep.subr.mxu0 0.0
        %5607 = vmatpush1.msra.mxu0 0.0
        %5608 = vmatprep.subr.mxu0 0.0
        %5609 = vmatpush1.msra.mxu0 0.0
        %5610 = vmatprep.subr.mxu0 0.0
        %5611 = vmatpush1.msra.mxu0 0.0
        %5612 = vmatprep.subr.mxu0 0.0
        %5613 = vmatpush1.msra.mxu0 0.0
        %5614 = vmatprep.subr.mxu0 0.0
        %5615 = vmatpush1.msra.mxu0 0.0
        %5616 = vmatprep.mubr.f32.mxu0 0.0
        %v5617 = vand.u32 %v3526, 4294901760
        %5618 = vmatmul.mubr.f32.gmra.mrb[0].mxu0 %v5617
        %v5619 = vpop.f32.mrb[0].mxu0
        %v5620 = vadd.f32 %v5529, %v5619
        %v5621 = vpop.f32.mrb[0].mxu0
        %5622 = vdwg.mxu0
        %5623 = vmatprep.subr.mxu0 0.0
        %v5624 = vand.u32 %v5449, 4294901760
        %v5625 = vsub.f32 %v5449, %v5624
        %5626 = vmatpush1.msra.mxu0 %v5625
        %5627 = vmatprep.subr.mxu0 0.0
        %v5628 = vand.u32 %v5450, 4294901760
        %v5629 = vsub.f32 %v5450, %v5628
        %5630 = vmatpush1.msra.mxu0 %v5629
        %5631 = vmatprep.subr.mxu0 0.0
        %v5632 = vand.u32 %v5451, 4294901760
        %v5633 = vsub.f32 %v5451, %v5632
        %5634 = vmatpush1.msra.mxu0 %v5633
        %5635 = vmatprep.subr.mxu0 0.0
        %v5636 = vand.u32 %v5452, 4294901760
        %v5637 = vsub.f32 %v5452, %v5636
        %5638 = vmatpush1.msra.mxu0 %v5637
        %5639 = vmatprep.subr.mxu0 0.0
        %5640 = vmatpush1.msra.mxu0 0.0
        %5641 = vmatprep.subr.mxu0 0.0
        %5642 = vmatpush1.msra.mxu0 0.0
        %5643 = vmatprep.subr.mxu0 0.0
        %5644 = vmatpush1.msra.mxu0 0.0
        %5645 = vmatprep.subr.mxu0 0.0
        %5646 = vmatpush1.msra.mxu0 0.0
        %5647 = vmatprep.subr.mxu0 0.0
        %5648 = vmatpush1.msra.mxu0 0.0
        %5649 = vmatprep.subr.mxu0 0.0
        %5650 = vmatpush1.msra.mxu0 0.0
        %5651 = vmatprep.subr.mxu0 0.0
        %5652 = vmatpush1.msra.mxu0 0.0
        %5653 = vmatprep.subr.mxu0 0.0
        %5654 = vmatpush1.msra.mxu0 0.0
        %5655 = vmatprep.subr.mxu0 0.0
        %5656 = vmatpush1.msra.mxu0 0.0
        %5657 = vmatprep.subr.mxu0 0.0
        %5658 = vmatpush1.msra.mxu0 0.0
        %5659 = vmatprep.subr.mxu0 0.0
        %5660 = vmatpush1.msra.mxu0 0.0
        %5661 = vmatprep.subr.mxu0 0.0
        %5662 = vmatpush1.msra.mxu0 0.0
        %5663 = vmatprep.subr.mxu0 0.0
        %5664 = vmatpush1.msra.mxu0 0.0
        %5665 = vmatprep.subr.mxu0 0.0
        %5666 = vmatpush1.msra.mxu0 0.0
        %5667 = vmatprep.subr.mxu0 0.0
        %5668 = vmatpush1.msra.mxu0 0.0
        %5669 = vmatprep.subr.mxu0 0.0
        %5670 = vmatpush1.msra.mxu0 0.0
        %5671 = vmatprep.subr.mxu0 0.0
        %5672 = vmatpush1.msra.mxu0 0.0
        %5673 = vmatprep.subr.mxu0 0.0
        %5674 = vmatpush1.msra.mxu0 0.0
        %5675 = vmatprep.subr.mxu0 0.0
        %5676 = vmatpush1.msra.mxu0 0.0
        %5677 = vmatprep.subr.mxu0 0.0
        %5678 = vmatpush1.msra.mxu0 0.0
        %5679 = vmatprep.subr.mxu0 0.0
        %5680 = vmatpush1.msra.mxu0 0.0
        %5681 = vmatprep.subr.mxu0 0.0
        %5682 = vmatpush1.msra.mxu0 0.0
        %5683 = vmatprep.subr.mxu0 0.0
        %5684 = vmatpush1.msra.mxu0 0.0
        %5685 = vmatprep.subr.mxu0 0.0
        %5686 = vmatpush1.msra.mxu0 0.0
        %5687 = vmatprep.subr.mxu0 0.0
        %5688 = vmatpush1.msra.mxu0 0.0
        %5689 = vmatprep.subr.mxu0 0.0
        %5690 = vmatpush1.msra.mxu0 0.0
        %5691 = vmatprep.subr.mxu0 0.0
        %5692 = vmatpush1.msra.mxu0 0.0
        %5693 = vmatprep.subr.mxu0 0.0
        %5694 = vmatpush1.msra.mxu0 0.0
        %5695 = vmatprep.mubr.f32.mxu0 0.0
        %v5696 = vand.u32 %v3526, 4294901760
        %v5697 = vsub.f32 %v3526, %v5696
        %5698 = vmatmul.mubr.f32.gmra.mrb[0].mxu0 %v5697
        %v5699 = vpop.f32.mrb[0].mxu0
        %v5700 = vadd.f32 %v5620, %v5699
        %v5701 = vpop.f32.mrb[0].mxu0
        %5702 = vdwg.mxu0
        %5703 = vmatprep.subr.mxu0 0.0
        %v5704 = vand.u32 %v5449, 4294901760
        %5705 = vmatpush1.msra.mxu0 %v5704
        %5706 = vmatprep.subr.mxu0 0.0
        %v5707 = vand.u32 %v5450, 4294901760
        %5708 = vmatpush1.msra.mxu0 %v5707
        %5709 = vmatprep.subr.mxu0 0.0
        %v5710 = vand.u32 %v5451, 4294901760
        %5711 = vmatpush1.msra.mxu0 %v5710
        %5712 = vmatprep.subr.mxu0 0.0
        %v5713 = vand.u32 %v5452, 4294901760
        %5714 = vmatpush1.msra.mxu0 %v5713
        %5715 = vmatprep.subr.mxu0 0.0
        %5716 = vmatpush1.msra.mxu0 0.0
        %5717 = vmatprep.subr.mxu0 0.0
        %5718 = vmatpush1.msra.mxu0 0.0
        %5719 = vmatprep.subr.mxu0 0.0
        %5720 = vmatpush1.msra.mxu0 0.0
        %5721 = vmatprep.subr.mxu0 0.0
        %5722 = vmatpush1.msra.mxu0 0.0
        %5723 = vmatprep.subr.mxu0 0.0
        %5724 = vmatpush1.msra.mxu0 0.0
        %5725 = vmatprep.subr.mxu0 0.0
        %5726 = vmatpush1.msra.mxu0 0.0
        %5727 = vmatprep.subr.mxu0 0.0
        %5728 = vmatpush1.msra.mxu0 0.0
        %5729 = vmatprep.subr.mxu0 0.0
        %5730 = vmatpush1.msra.mxu0 0.0
        %5731 = vmatprep.subr.mxu0 0.0
        %5732 = vmatpush1.msra.mxu0 0.0
        %5733 = vmatprep.subr.mxu0 0.0
        %5734 = vmatpush1.msra.mxu0 0.0
        %5735 = vmatprep.subr.mxu0 0.0
        %5736 = vmatpush1.msra.mxu0 0.0
        %5737 = vmatprep.subr.mxu0 0.0
        %5738 = vmatpush1.msra.mxu0 0.0
        %5739 = vmatprep.subr.mxu0 0.0
        %5740 = vmatpush1.msra.mxu0 0.0
        %5741 = vmatprep.subr.mxu0 0.0
        %5742 = vmatpush1.msra.mxu0 0.0
        %5743 = vmatprep.subr.mxu0 0.0
        %5744 = vmatpush1.msra.mxu0 0.0
        %5745 = vmatprep.subr.mxu0 0.0
        %5746 = vmatpush1.msra.mxu0 0.0
        %5747 = vmatprep.subr.mxu0 0.0
        %5748 = vmatpush1.msra.mxu0 0.0
        %5749 = vmatprep.subr.mxu0 0.0
        %5750 = vmatpush1.msra.mxu0 0.0
        %5751 = vmatprep.subr.mxu0 0.0
        %5752 = vmatpush1.msra.mxu0 0.0
        %5753 = vmatprep.subr.mxu0 0.0
        %5754 = vmatpush1.msra.mxu0 0.0
        %5755 = vmatprep.subr.mxu0 0.0
        %5756 = vmatpush1.msra.mxu0 0.0
        %5757 = vmatprep.subr.mxu0 0.0
        %5758 = vmatpush1.msra.mxu0 0.0
        %5759 = vmatprep.subr.mxu0 0.0
        %5760 = vmatpush1.msra.mxu0 0.0
        %5761 = vmatprep.subr.mxu0 0.0
        %5762 = vmatpush1.msra.mxu0 0.0
        %5763 = vmatprep.subr.mxu0 0.0
        %5764 = vmatpush1.msra.mxu0 0.0
        %5765 = vmatprep.subr.mxu0 0.0
        %5766 = vmatpush1.msra.mxu0 0.0
        %5767 = vmatprep.subr.mxu0 0.0
        %5768 = vmatpush1.msra.mxu0 0.0
        %5769 = vmatprep.subr.mxu0 0.0
        %5770 = vmatpush1.msra.mxu0 0.0
        %5771 = vmatprep.mubr.f32.mxu0 0.0
        %v5772 = vand.u32 %v3526, 4294901760
        %v5773 = vsub.f32 %v3526, %v5772
        %v5774 = vand.u32 %v5773, 4294901760
        %5775 = vmatmul.mubr.f32.gmra.mrb[0].mxu0 %v5774
        %v5776 = vpop.f32.mrb[0].mxu0
        %v5777 = vadd.f32 %v5700, %v5776
        %v5778 = vpop.f32.mrb[0].mxu0
        %5779 = vdwg.mxu0
        %5780 = vmatprep.subr.mxu0 0.0
        %v5781 = vand.u32 %v5449, 4294901760
        %v5782 = vsub.f32 %v5449, %v5781
        %v5783 = vand.u32 %v5782, 4294901760
        %5784 = vmatpush1.msra.mxu0 %v5783
        %5785 = vmatprep.subr.mxu0 0.0
        %v5786 = vand.u32 %v5450, 4294901760
        %v5787 = vsub.f32 %v5450, %v5786
        %v5788 = vand.u32 %v5787, 4294901760
        %5789 = vmatpush1.msra.mxu0 %v5788
        %5790 = vmatprep.subr.mxu0 0.0
        %v5791 = vand.u32 %v5451, 4294901760
        %v5792 = vsub.f32 %v5451, %v5791
        %v5793 = vand.u32 %v5792, 4294901760
        %5794 = vmatpush1.msra.mxu0 %v5793
        %5795 = vmatprep.subr.mxu0 0.0
        %v5796 = vand.u32 %v5452, 4294901760
        %v5797 = vsub.f32 %v5452, %v5796
        %v5798 = vand.u32 %v5797, 4294901760
        %5799 = vmatpush1.msra.mxu0 %v5798
        %5800 = vmatprep.subr.mxu0 0.0
        %5801 = vmatpush1.msra.mxu0 0.0
        %5802 = vmatprep.subr.mxu0 0.0
        %5803 = vmatpush1.msra.mxu0 0.0
        %5804 = vmatprep.subr.mxu0 0.0
        %5805 = vmatpush1.msra.mxu0 0.0
        %5806 = vmatprep.subr.mxu0 0.0
        %5807 = vmatpush1.msra.mxu0 0.0
        %5808 = vmatprep.subr.mxu0 0.0
        %5809 = vmatpush1.msra.mxu0 0.0
        %5810 = vmatprep.subr.mxu0 0.0
        %5811 = vmatpush1.msra.mxu0 0.0
        %5812 = vmatprep.subr.mxu0 0.0
        %5813 = vmatpush1.msra.mxu0 0.0
        %5814 = vmatprep.subr.mxu0 0.0
        %5815 = vmatpush1.msra.mxu0 0.0
        %5816 = vmatprep.subr.mxu0 0.0
        %5817 = vmatpush1.msra.mxu0 0.0
        %5818 = vmatprep.subr.mxu0 0.0
        %5819 = vmatpush1.msra.mxu0 0.0
        %5820 = vmatprep.subr.mxu0 0.0
        %5821 = vmatpush1.msra.mxu0 0.0
        %5822 = vmatprep.subr.mxu0 0.0
        %5823 = vmatpush1.msra.mxu0 0.0
        %5824 = vmatprep.subr.mxu0 0.0
        %5825 = vmatpush1.msra.mxu0 0.0
        %5826 = vmatprep.subr.mxu0 0.0
        %5827 = vmatpush1.msra.mxu0 0.0
        %5828 = vmatprep.subr.mxu0 0.0
        %5829 = vmatpush1.msra.mxu0 0.0
        %5830 = vmatprep.subr.mxu0 0.0
        %5831 = vmatpush1.msra.mxu0 0.0
        %5832 = vmatprep.subr.mxu0 0.0
        %5833 = vmatpush1.msra.mxu0 0.0
        %5834 = vmatprep.subr.mxu0 0.0
        %5835 = vmatpush1.msra.mxu0 0.0
        %5836 = vmatprep.subr.mxu0 0.0
        %5837 = vmatpush1.msra.mxu0 0.0
        %5838 = vmatprep.subr.mxu0 0.0
        %5839 = vmatpush1.msra.mxu0 0.0
        %5840 = vmatprep.subr.mxu0 0.0
        %5841 = vmatpush1.msra.mxu0 0.0
        %5842 = vmatprep.subr.mxu0 0.0
        %5843 = vmatpush1.msra.mxu0 0.0
        %5844 = vmatprep.subr.mxu0 0.0
        %5845 = vmatpush1.msra.mxu0 0.0
        %5846 = vmatprep.subr.mxu0 0.0
        %5847 = vmatpush1.msra.mxu0 0.0
        %5848 = vmatprep.subr.mxu0 0.0
        %5849 = vmatpush1.msra.mxu0 0.0
        %5850 = vmatprep.subr.mxu0 0.0
        %5851 = vmatpush1.msra.mxu0 0.0
        %5852 = vmatprep.subr.mxu0 0.0
        %5853 = vmatpush1.msra.mxu0 0.0
        %5854 = vmatprep.subr.mxu0 0.0
        %5855 = vmatpush1.msra.mxu0 0.0
        %5856 = vmatprep.mubr.f32.mxu0 0.0
        %v5857 = vand.u32 %v3526, 4294901760
        %5858 = vmatmul.mubr.f32.gmra.mrb[0].mxu0 %v5857
        %v5859 = vpop.f32.mrb[0].mxu0
        %v5860 = vadd.f32 %v5777, %v5859
        %v5861 = vpop.f32.mrb[0].mxu0
        %5862 = vdwg.mxu0
        %5863 = vmatprep.subr.mxu0 0.0
        %v5864 = vand.u32 %v5449, 4294901760
        %5865 = vmatpush1.msra.mxu0 %v5864
        %5866 = vmatprep.subr.mxu0 0.0
        %v5867 = vand.u32 %v5450, 4294901760
        %5868 = vmatpush1.msra.mxu0 %v5867
        %5869 = vmatprep.subr.mxu0 0.0
        %v5870 = vand.u32 %v5451, 4294901760
        %5871 = vmatpush1.msra.mxu0 %v5870
        %5872 = vmatprep.subr.mxu0 0.0
        %v5873 = vand.u32 %v5452, 4294901760
        %5874 = vmatpush1.msra.mxu0 %v5873
        %5875 = vmatprep.subr.mxu0 0.0
        %5876 = vmatpush1.msra.mxu0 0.0
        %5877 = vmatprep.subr.mxu0 0.0
        %5878 = vmatpush1.msra.mxu0 0.0
        %5879 = vmatprep.subr.mxu0 0.0
        %5880 = vmatpush1.msra.mxu0 0.0
        %5881 = vmatprep.subr.mxu0 0.0
        %5882 = vmatpush1.msra.mxu0 0.0
        %5883 = vmatprep.subr.mxu0 0.0
        %5884 = vmatpush1.msra.mxu0 0.0
        %5885 = vmatprep.subr.mxu0 0.0
        %5886 = vmatpush1.msra.mxu0 0.0
        %5887 = vmatprep.subr.mxu0 0.0
        %5888 = vmatpush1.msra.mxu0 0.0
        %5889 = vmatprep.subr.mxu0 0.0
        %5890 = vmatpush1.msra.mxu0 0.0
        %5891 = vmatprep.subr.mxu0 0.0
        %5892 = vmatpush1.msra.mxu0 0.0
        %5893 = vmatprep.subr.mxu0 0.0
        %5894 = vmatpush1.msra.mxu0 0.0
        %5895 = vmatprep.subr.mxu0 0.0
        %5896 = vmatpush1.msra.mxu0 0.0
        %5897 = vmatprep.subr.mxu0 0.0
        %5898 = vmatpush1.msra.mxu0 0.0
        %5899 = vmatprep.subr.mxu0 0.0
        %5900 = vmatpush1.msra.mxu0 0.0
        %5901 = vmatprep.subr.mxu0 0.0
        %5902 = vmatpush1.msra.mxu0 0.0
        %5903 = vmatprep.subr.mxu0 0.0
        %5904 = vmatpush1.msra.mxu0 0.0
        %5905 = vmatprep.subr.mxu0 0.0
        %5906 = vmatpush1.msra.mxu0 0.0
        %5907 = vmatprep.subr.mxu0 0.0
        %5908 = vmatpush1.msra.mxu0 0.0
        %5909 = vmatprep.subr.mxu0 0.0
        %5910 = vmatpush1.msra.mxu0 0.0
        %5911 = vmatprep.subr.mxu0 0.0
        %5912 = vmatpush1.msra.mxu0 0.0
        %5913 = vmatprep.subr.mxu0 0.0
        %5914 = vmatpush1.msra.mxu0 0.0
        %5915 = vmatprep.subr.mxu0 0.0
        %5916 = vmatpush1.msra.mxu0 0.0
        %5917 = vmatprep.subr.mxu0 0.0
        %5918 = vmatpush1.msra.mxu0 0.0
        %5919 = vmatprep.subr.mxu0 0.0
        %5920 = vmatpush1.msra.mxu0 0.0
        %5921 = vmatprep.subr.mxu0 0.0
        %5922 = vmatpush1.msra.mxu0 0.0
        %5923 = vmatprep.subr.mxu0 0.0
        %5924 = vmatpush1.msra.mxu0 0.0
        %5925 = vmatprep.subr.mxu0 0.0
        %5926 = vmatpush1.msra.mxu0 0.0
        %5927 = vmatprep.subr.mxu0 0.0
        %5928 = vmatpush1.msra.mxu0 0.0
        %5929 = vmatprep.subr.mxu0 0.0
        %5930 = vmatpush1.msra.mxu0 0.0
        %5931 = vmatprep.mubr.f32.mxu0 0.0
        %v5932 = vand.u32 %v3526, 4294901760
        %5933 = vmatmul.mubr.f32.gmra.mrb[0].mxu0 %v5932
        %v5934 = vpop.f32.mrb[0].mxu0
        %v5935 = vadd.f32 %v5860, %v5934
        %v5936 = vpop.f32.mrb[0].mxu0
        %5937 = vdwg.mxu0
        %v5938 = vsub.f32 1.0, %v438
        %v5939 = vmul.f32 %v5938, 0.99
        %v5940 = vmul.f32 %v5939, %v5935
        %v5941 = vadd.f32 %v2839, %v5940
        %v5942 = vsub.f32 %v5941, %v4010
        %5943 = vst [vmem:[%s368] sm:$0x1] %v5942
        %s5944 = sand.u32 %s240, 1
        %s5945 = scalar_lea.sflag [#allocation3], %s5944
        %s5946 = sand.u32 %s240, 1
        %s5947 = scalar_lea.vmem [#allocation2], %s5946
        // Predicated region
        $region57: #{tpu_custom_call.1} parent=55 // pred_check
          %p5948 = pneg %p250
        $region58: #{tpu_custom_call.1} parent=55 // pred_check_branch
          %5950 = sbr.rel (%p5948) target = $region60
        $region59: #{tpu_custom_call.1} parent=55 // pred_region
          %s5952 = ssub.s32 16, 16
          %5953 = vsyncadd %s5945, %s5952
          %s5954 = smul.addr %s23, 16
          %s5955 = scalar_lea.hbm %s9, %s5954
          %s5957 = sshll.u32 %s5947, 4
          %s5958 = int_to_ptr.vmem [resolvable:$true] %s5957
          %5960 = dma.vmem_to_hbm [thread:$0]  %s5958, 16, %s5955, %s5945
        $region60: #{tpu_custom_call.1} parent=55 // pred_fallthru
          _
      $region56: #{tpu_custom_call.1} parent=5 // pred_fallthru
        _
      %p5961 = scmp.le.s32.totalorder 2, %s18
      // Predicated region
      $region61: #{tpu_custom_call.1} parent=5 // pred_check
        %p5962 = pneg %p5961
      $region62: #{tpu_custom_call.1} parent=5 // pred_check_branch
        %5964 = sbr.rel (%p5962) target = $region64
      $region63: #{tpu_custom_call.1} parent=5 // pred_region
        %s5965 = ssub.s32 %s18, 2
        // Predicated region
        $region65: #{tpu_custom_call.1} parent=63 // pred_check
          %p5966 = pneg %p256
        $region66: #{tpu_custom_call.1} parent=63 // pred_check_branch
          %5968 = sbr.rel (%p5966) target = $region68
        $region67: #{tpu_custom_call.1} parent=63 // pred_region
          %s5969 = sand.u32 %s241, 1
          %s5970 = scalar_lea.sflag [#allocation3], %s5969
          %s5971 = sand.u32 %s241, 1
          %s5972 = scalar_lea.vmem [#allocation2], %s5971
          %5973 = dma.done %s5970, 16
        $region68: #{tpu_custom_call.1} parent=63 // pred_fallthru
          _
      $region64: #{tpu_custom_call.1} parent=5 // pred_fallthru
        _
    $region6: #{tpu_custom_call.1} parent=1 // loop_footer
      %s22 = sadd.s32 1, %s18
    $region7: #{tpu_custom_call.1} parent=1 // loop_footer_branch
      %17 = sbr.rel target = $region3
    $region8: #{tpu_custom_call.1} parent=1 // loop_exit
      _
    %5974 = vsyncpa [#allocation3], 1
    %s5975 = scalar_lea.sflag [#allocation3], 1
    %5976 = vsyncpa %s5975, 1

</llo_original>
